<compile_context>
chip_gen: v6e
topology: v6e:2x2x1
jax: 0.10.0
libtpu: 0.0.40
codegen_flags: <defaults>
</compile_context>

<pallas_src>
import functools

import jax
import jax.numpy as jnp
from jax import lax
from jax.experimental import pallas as pl
from jax.experimental.pallas import tpu as pltpu

LANE = 128


def _round_up(x, m):
    return (x + m - 1) // m * m


def _conv_bn_relu_kernel(x_ref, w_ref, bias_ref, o_ref, xpad_ref, col_ref, *,
                         kh_size, kw_size, dilation, padding, out_h, out_w):
    """Fused conv(no bias) + folded BN + ReLU for one batch element.

    x_ref:    (1, H, W, C_in)               bf16  un-padded input
    w_ref:    (K_pad, N_pad)                bf16  im2col weight (BN scale folded,
                                                  zero-padded K rows / N cols)
    bias_ref: (1, C_out)                    f32   folded BN bias
    o_ref:    (1, out_h, out_w, C_out)      f32   only the real channels
    xpad_ref: VMEM (H+2p, W+2p, C_in)       bf16  zero-halo input scratch
    col_ref:  VMEM (out_h, out_w, K_pad)    bf16  im2col patches, 128-lane K
    """
    h = x_ref.shape[1]
    w = x_ref.shape[2]
    c_in = x_ref.shape[3]
    c_out = o_ref.shape[3]
    k_real = kh_size * kw_size * c_in
    k_pad = col_ref.shape[2]

    # ---- zero only the halo border strips (interior is overwritten below) ----
    if padding > 0:
        h_pad = h + 2 * padding
        w_pad = w + 2 * padding
        zrow = jnp.zeros((padding, w_pad, c_in), xpad_ref.dtype)
        xpad_ref[:padding, :, :] = zrow
        xpad_ref[h + padding:, :, :] = zrow
        zcol = jnp.zeros((h_pad, padding, c_in), xpad_ref.dtype)
        xpad_ref[:, :padding, :] = zcol
        xpad_ref[:, w + padding:, :] = zcol

    # ---- copy interior (bf16 -> bf16, no casts) ----
    xpad_ref[padding:padding + h, padding:padding + w, :] = x_ref[0]

    # ---- zero the padded K-tail lanes (weight rows there are zero, but stale
    #      VMEM could be NaN and 0 * NaN = NaN) ----
    if k_pad > k_real:
        col_ref[:, :, k_real:] = jnp.zeros((out_h, out_w, k_pad - k_real),
                                           col_ref.dtype)

    # ---- im2col: pack the contraction dim as KH*KW*C_in on the lane axis ----
    # TODO(synk): generate the kw shifted copies with pltpu.roll (XLU slot) instead
    #             of kw separate slab copies once this phase shows up as vst-bound.
    for kh in range(kh_size):
        for kw in range(kw_size):
            h0 = kh * dilation
            w0 = kw * dilation
            tap = kh * kw_size + kw
            col_ref[:, :, tap * c_in:(tap + 1) * c_in] = (
                xpad_ref[h0:h0 + out_h, w0:w0 + out_w, :])

    # ---- one MXU matmul over the whole image block (lane-dense K=128 operands) ----
    lhs = col_ref[...].reshape(out_h * out_w, k_pad)        # layout no-op reshape
    acc = jnp.dot(lhs, w_ref[...], preferred_element_type=jnp.float32)

    # ---- epilogue: folded-BN bias + ReLU in f32, store only the real channels ----
    y = jnp.maximum(acc[:, :c_out] + bias_ref[...], 0.0)
    o_ref[0] = y.reshape(out_h, out_w, c_out).astype(o_ref.dtype)


def basic_conv2d(x_nchw, weight_oihw, gamma, beta, running_mean, running_var,
                 *, stride=1, padding=0, dilation=1, eps=1e-5):
    """BasicConv2d forward: conv(bias=False) -> BN(eval) -> ReLU.  Input/output NCHW."""
    if stride != 1:
        # TODO(synk): stride > 1 would need strided im2col slicing inside the kernel.
        raise NotImplementedError("stride > 1 not implemented in this Pallas kernel")

    n, c_in, h, w = x_nchw.shape
    c_out, c_in_w, kh, kw = weight_oihw.shape
    assert c_in == c_in_w

    h_pad = h + 2 * padding
    w_pad = w + 2 * padding
    out_h = h_pad - dilation * (kh - 1)
    out_w = w_pad - dilation * (kw - 1)

    k_real = kh * kw * c_in
    k_pad = _round_up(k_real, LANE)          # lane-dense contraction dim
    n_pad = _round_up(c_out, LANE)           # lane-dense MXU RHS (output sliced in-kernel)

    # --- boundary glue: NCHW -> NHWC, bf16 activations (halves HBM traffic) ---
    x_nhwc = jnp.transpose(x_nchw, (0, 2, 3, 1)).astype(jnp.bfloat16)

    # --- fold BN (eval) into conv weight / bias at trace time ---
    scale = gamma / jnp.sqrt(running_var + eps)                    # (C_out,)
    bias = (beta - running_mean * scale).reshape(1, c_out).astype(jnp.float32)
    w_hwio = jnp.transpose(weight_oihw, (2, 3, 1, 0)) * scale      # (KH,KW,Cin,Cout)
    w_col = w_hwio.reshape(k_real, c_out)                          # im2col weight
    w_col = jnp.pad(w_col, ((0, k_pad - k_real),
                            (0, n_pad - c_out))).astype(jnp.bfloat16)

    kernel = functools.partial(
        _conv_bn_relu_kernel,
        kh_size=kh, kw_size=kw, dilation=dilation, padding=padding,
        out_h=out_h, out_w=out_w)

    out_nhwc = pl.pallas_call(
        kernel,
        out_shape=jax.ShapeDtypeStruct((n, out_h, out_w, c_out), jnp.float32),
        grid_spec=pltpu.PrefetchScalarGridSpec(
            num_scalar_prefetch=0,
            grid=(n,),
            in_specs=[
                pl.BlockSpec((1, h, w, c_in), lambda b: (b, 0, 0, 0)),
                pl.BlockSpec((k_pad, n_pad), lambda b: (0, 0)),   # resident weights
                pl.BlockSpec((1, c_out), lambda b: (0, 0)),        # resident bias
            ],
            out_specs=pl.BlockSpec((1, out_h, out_w, c_out),
                                   lambda b: (b, 0, 0, 0)),
            scratch_shapes=[
                pltpu.VMEM((h_pad, w_pad, c_in), jnp.bfloat16),     # padded input
                pltpu.VMEM((out_h, out_w, k_pad), jnp.bfloat16),    # im2col lhs
            ]),
        compiler_params=pltpu.CompilerParams(
            dimension_semantics=("parallel",)),
    )(x_nhwc, w_col, bias)

    # Return NCHW to match the PyTorch module interface (no channel slice needed:
    # the kernel already wrote only the real channels).
    return jnp.transpose(out_nhwc, (0, 3, 1, 2))


if __name__ == "__main__":
    key = jax.random.PRNGKey(0)
    k_x, k_w, k_g, k_b, k_m, k_v = jax.random.split(key, 6)

    # Small shapes consistent with the module: batch=2, in=4, out=8, 16x16, 3x3, pad=1.
    N, C_IN, H, W = 2, 4, 16, 16
    C_OUT, K = 8, 3
    PAD, DIL = 1, 1

    x = jax.random.normal(k_x, (N, C_IN, H, W), jnp.float32)
    weight = jax.random.normal(k_w, (C_OUT, C_IN, K, K), jnp.float32) * 0.1
    gamma = 1.0 + 0.1 * jax.random.normal(k_g, (C_OUT,), jnp.float32)
    beta = 0.1 * jax.random.normal(k_b, (C_OUT,), jnp.float32)
    running_mean = 0.1 * jax.random.normal(k_m, (C_OUT,), jnp.float32)
    running_var = jnp.abs(1.0 + 0.1 * jax.random.normal(k_v, (C_OUT,), jnp.float32))

    out = basic_conv2d(x, weight, gamma, beta, running_mean, running_var,
                       stride=1, padding=PAD, dilation=DIL)
    jax.block_until_ready(out)

    # Reference: same bf16-rounded conv inputs, f32 accumulation (matches the kernel's
    # MXU numerics), BN folded, ReLU.  Computed with lax.conv in plain JAX.
    scale = gamma / jnp.sqrt(running_var + 1e-5)
    bias = beta - running_mean * scale
    w_folded = (weight * scale[:, None, None, None]).astype(jnp.bfloat16).astype(jnp.float32)
    x_bf = x.astype(jnp.bfloat16).astype(jnp.float32)
    ref_conv = lax.conv_general_dilated(
        x_bf, w_folded, window_strides=(1, 1), padding=((PAD, PAD), (PAD, PAD)),
        rhs_dilation=(DIL, DIL), dimension_numbers=("NCHW", "OIHW", "NCHW"),
        precision=lax.Precision.HIGHEST)
    ref = jnp.maximum(ref_conv + bias[None, :, None, None], 0.0)

    assert out.shape == (N, C_OUT, H, W), out.shape
    max_err = float(jnp.max(jnp.abs(out - ref)))
    assert jnp.allclose(out, ref, atol=2e-3, rtol=2e-3), max_err

    print("KERNEL_OK")
</pallas_src>

<mosaic_0001>
module attributes {stable_mosaic.version = 11 : i64} {
  func.func @_conv_bn_relu_kernel(%arg0: i32, %arg1: memref<1x16x16x4xbf16, #tpu.memory_space<vmem>>, %arg2: memref<128x128xbf16, #tpu.memory_space<vmem>>, %arg3: memref<1x8xf32, #tpu.memory_space<vmem>>, %arg4: memref<1x16x16x8xf32, #tpu.memory_space<vmem>>, %arg5: memref<18x18x4xbf16, #tpu.memory_space<vmem>>, %arg6: memref<16x16x128xbf16, #tpu.memory_space<vmem>>) attributes {dimension_semantics = [#tpu.dimension_semantics<parallel>], iteration_bounds = array<i64: 2>, scalar_prefetch = 0 : i64, scratch_operands = 2 : i64, tpu.core_type = #tpu.core_type<tc>, window_params = [{transform_indices = @transform_0, window_bounds = array<i64: 1, 16, 16, 4>}, {pipeline_mode = #tpu.pipeline_mode<synchronous>, transform_indices = @transform_1, window_bounds = array<i64: 128, 128>}, {pipeline_mode = #tpu.pipeline_mode<synchronous>, transform_indices = @transform_2, window_bounds = array<i64: 1, 8>}, {transform_indices = @transform_3, window_bounds = array<i64: 1, 16, 16, 8>}]} {
    %cst = arith.constant 0.000000e+00 : bf16
    %0 = vector.broadcast %cst : bf16 to vector<1x18x4xbf16>
    %c0 = arith.constant 0 : index
    %c0_0 = arith.constant 0 : index
    %c0_1 = arith.constant 0 : index
    %1 = vector.load %arg5[%c0, %c0_0, %c0_1] : memref<18x18x4xbf16, #tpu.memory_space<vmem>>, vector<1x18x4xbf16>
    tpu.vector_store %arg5[%c0, %c0_0, %c0_1], %0 {strides = array<i32>} : memref<18x18x4xbf16, #tpu.memory_space<vmem>>, vector<1x18x4xbf16>,
    %c17 = arith.constant 17 : index
    %c0_2 = arith.constant 0 : index
    %c0_3 = arith.constant 0 : index
    %2 = vector.load %arg5[%c17, %c0_2, %c0_3] : memref<18x18x4xbf16, #tpu.memory_space<vmem>>, vector<1x18x4xbf16>
    tpu.vector_store %arg5[%c17, %c0_2, %c0_3], %0 {strides = array<i32>} : memref<18x18x4xbf16, #tpu.memory_space<vmem>>, vector<1x18x4xbf16>,
    %cst_4 = arith.constant 0.000000e+00 : bf16
    %3 = vector.broadcast %cst_4 : bf16 to vector<18x1x4xbf16>
    %c0_5 = arith.constant 0 : index
    %c0_6 = arith.constant 0 : index
    %c0_7 = arith.constant 0 : index
    %4 = vector.load %arg5[%c0_5, %c0_6, %c0_7] : memref<18x18x4xbf16, #tpu.memory_space<vmem>>, vector<18x1x4xbf16>
    tpu.vector_store %arg5[%c0_5, %c0_6, %c0_7], %3 {strides = array<i32>} : memref<18x18x4xbf16, #tpu.memory_space<vmem>>, vector<18x1x4xbf16>,
    %c0_8 = arith.constant 0 : index
    %c17_9 = arith.constant 17 : index
    %c0_10 = arith.constant 0 : index
    %5 = vector.load %arg5[%c0_8, %c17_9, %c0_10] : memref<18x18x4xbf16, #tpu.memory_space<vmem>>, vector<18x1x4xbf16>
    tpu.vector_store %arg5[%c0_8, %c17_9, %c0_10], %3 {strides = array<i32>} : memref<18x18x4xbf16, #tpu.memory_space<vmem>>, vector<18x1x4xbf16>,
    %c0_11 = arith.constant 0 : index
    %c0_12 = arith.constant 0 : index
    %c0_13 = arith.constant 0 : index
    %c0_14 = arith.constant 0 : index
    %6 = vector.load %arg1[%c0_11, %c0_12, %c0_13, %c0_14] : memref<1x16x16x4xbf16, #tpu.memory_space<vmem>>, vector<1x16x16x4xbf16>
    %7 = vector.shape_cast %6 : vector<1x16x16x4xbf16> to vector<16x16x4xbf16>
    %c1 = arith.constant 1 : index
    %c1_15 = arith.constant 1 : index
    %c0_16 = arith.constant 0 : index
    %8 = vector.load %arg5[%c1, %c1_15, %c0_16] : memref<18x18x4xbf16, #tpu.memory_space<vmem>>, vector<16x16x4xbf16>
    tpu.vector_store %arg5[%c1, %c1_15, %c0_16], %7 {strides = array<i32>} : memref<18x18x4xbf16, #tpu.memory_space<vmem>>, vector<16x16x4xbf16>,
    %cst_17 = arith.constant 0.000000e+00 : bf16
    %9 = vector.broadcast %cst_17 : bf16 to vector<16x16x92xbf16>
    %c0_18 = arith.constant 0 : index
    %c0_19 = arith.constant 0 : index
    %c36 = arith.constant 36 : index
    %10 = vector.load %arg6[%c0_18, %c0_19, %c36] : memref<16x16x128xbf16, #tpu.memory_space<vmem>>, vector<16x16x92xbf16>
    tpu.vector_store %arg6[%c0_18, %c0_19, %c36], %9 {strides = array<i32>} : memref<16x16x128xbf16, #tpu.memory_space<vmem>>, vector<16x16x92xbf16>,
    %c0_20 = arith.constant 0 : index
    %c0_21 = arith.constant 0 : index
    %c0_22 = arith.constant 0 : index
    %11 = vector.load %arg5[%c0_20, %c0_21, %c0_22] : memref<18x18x4xbf16, #tpu.memory_space<vmem>>, vector<16x16x4xbf16>
    %c0_23 = arith.constant 0 : index
    %c0_24 = arith.constant 0 : index
    %c0_25 = arith.constant 0 : index
    %12 = vector.load %arg6[%c0_23, %c0_24, %c0_25] : memref<16x16x128xbf16, #tpu.memory_space<vmem>>, vector<16x16x4xbf16>
    tpu.vector_store %arg6[%c0_23, %c0_24, %c0_25], %11 {strides = array<i32>} : memref<16x16x128xbf16, #tpu.memory_space<vmem>>, vector<16x16x4xbf16>,
    %c0_26 = arith.constant 0 : index
    %c1_27 = arith.constant 1 : index
    %c0_28 = arith.constant 0 : index
    %13 = vector.load %arg5[%c0_26, %c1_27, %c0_28] : memref<18x18x4xbf16, #tpu.memory_space<vmem>>, vector<16x16x4xbf16>
    %c0_29 = arith.constant 0 : index
    %c0_30 = arith.constant 0 : index
    %c4 = arith.constant 4 : index
    %14 = vector.load %arg6[%c0_29, %c0_30, %c4] : memref<16x16x128xbf16, #tpu.memory_space<vmem>>, vector<16x16x4xbf16>
    tpu.vector_store %arg6[%c0_29, %c0_30, %c4], %13 {strides = array<i32>} : memref<16x16x128xbf16, #tpu.memory_space<vmem>>, vector<16x16x4xbf16>,
    %c0_31 = arith.constant 0 : index
    %c2 = arith.constant 2 : index
    %c0_32 = arith.constant 0 : index
    %15 = vector.load %arg5[%c0_31, %c2, %c0_32] : memref<18x18x4xbf16, #tpu.memory_space<vmem>>, vector<16x16x4xbf16>
    %c0_33 = arith.constant 0 : index
    %c0_34 = arith.constant 0 : index
    %c8 = arith.constant 8 : index
    %16 = vector.load %arg6[%c0_33, %c0_34, %c8] : memref<16x16x128xbf16, #tpu.memory_space<vmem>>, vector<16x16x4xbf16>
    tpu.vector_store %arg6[%c0_33, %c0_34, %c8], %15 {strides = array<i32>} : memref<16x16x128xbf16, #tpu.memory_space<vmem>>, vector<16x16x4xbf16>,
    %c1_35 = arith.constant 1 : index
    %c0_36 = arith.constant 0 : index
    %c0_37 = arith.constant 0 : index
    %17 = vector.load %arg5[%c1_35, %c0_36, %c0_37] : memref<18x18x4xbf16, #tpu.memory_space<vmem>>, vector<16x16x4xbf16>
    %c0_38 = arith.constant 0 : index
    %c0_39 = arith.constant 0 : index
    %c12 = arith.constant 12 : index
    %18 = vector.load %arg6[%c0_38, %c0_39, %c12] : memref<16x16x128xbf16, #tpu.memory_space<vmem>>, vector<16x16x4xbf16>
    tpu.vector_store %arg6[%c0_38, %c0_39, %c12], %17 {strides = array<i32>} : memref<16x16x128xbf16, #tpu.memory_space<vmem>>, vector<16x16x4xbf16>,
    %c1_40 = arith.constant 1 : index
    %c1_41 = arith.constant 1 : index
    %c0_42 = arith.constant 0 : index
    %19 = vector.load %arg5[%c1_40, %c1_41, %c0_42] : memref<18x18x4xbf16, #tpu.memory_space<vmem>>, vector<16x16x4xbf16>
    %c0_43 = arith.constant 0 : index
    %c0_44 = arith.constant 0 : index
    %c16 = arith.constant 16 : index
    %20 = vector.load %arg6[%c0_43, %c0_44, %c16] : memref<16x16x128xbf16, #tpu.memory_space<vmem>>, vector<16x16x4xbf16>
    tpu.vector_store %arg6[%c0_43, %c0_44, %c16], %19 {strides = array<i32>} : memref<16x16x128xbf16, #tpu.memory_space<vmem>>, vector<16x16x4xbf16>,
    %c1_45 = arith.constant 1 : index
    %c2_46 = arith.constant 2 : index
    %c0_47 = arith.constant 0 : index
    %21 = vector.load %arg5[%c1_45, %c2_46, %c0_47] : memref<18x18x4xbf16, #tpu.memory_space<vmem>>, vector<16x16x4xbf16>
    %c0_48 = arith.constant 0 : index
    %c0_49 = arith.constant 0 : index
    %c20 = arith.constant 20 : index
    %22 = vector.load %arg6[%c0_48, %c0_49, %c20] : memref<16x16x128xbf16, #tpu.memory_space<vmem>>, vector<16x16x4xbf16>
    tpu.vector_store %arg6[%c0_48, %c0_49, %c20], %21 {strides = array<i32>} : memref<16x16x128xbf16, #tpu.memory_space<vmem>>, vector<16x16x4xbf16>,
    %c2_50 = arith.constant 2 : index
    %c0_51 = arith.constant 0 : index
    %c0_52 = arith.constant 0 : index
    %23 = vector.load %arg5[%c2_50, %c0_51, %c0_52] : memref<18x18x4xbf16, #tpu.memory_space<vmem>>, vector<16x16x4xbf16>
    %c0_53 = arith.constant 0 : index
    %c0_54 = arith.constant 0 : index
    %c24 = arith.constant 24 : index
    %24 = vector.load %arg6[%c0_53, %c0_54, %c24] : memref<16x16x128xbf16, #tpu.memory_space<vmem>>, vector<16x16x4xbf16>
    tpu.vector_store %arg6[%c0_53, %c0_54, %c24], %23 {strides = array<i32>} : memref<16x16x128xbf16, #tpu.memory_space<vmem>>, vector<16x16x4xbf16>,
    %c2_55 = arith.constant 2 : index
    %c1_56 = arith.constant 1 : index
    %c0_57 = arith.constant 0 : index
    %25 = vector.load %arg5[%c2_55, %c1_56, %c0_57] : memref<18x18x4xbf16, #tpu.memory_space<vmem>>, vector<16x16x4xbf16>
    %c0_58 = arith.constant 0 : index
    %c0_59 = arith.constant 0 : index
    %c28 = arith.constant 28 : index
    %26 = vector.load %arg6[%c0_58, %c0_59, %c28] : memref<16x16x128xbf16, #tpu.memory_space<vmem>>, vector<16x16x4xbf16>
    tpu.vector_store %arg6[%c0_58, %c0_59, %c28], %25 {strides = array<i32>} : memref<16x16x128xbf16, #tpu.memory_space<vmem>>, vector<16x16x4xbf16>,
    %c2_60 = arith.constant 2 : index
    %c2_61 = arith.constant 2 : index
    %c0_62 = arith.constant 0 : index
    %27 = vector.load %arg5[%c2_60, %c2_61, %c0_62] : memref<18x18x4xbf16, #tpu.memory_space<vmem>>, vector<16x16x4xbf16>
    %c0_63 = arith.constant 0 : index
    %c0_64 = arith.constant 0 : index
    %c32 = arith.constant 32 : index
    %28 = vector.load %arg6[%c0_63, %c0_64, %c32] : memref<16x16x128xbf16, #tpu.memory_space<vmem>>, vector<16x16x4xbf16>
    tpu.vector_store %arg6[%c0_63, %c0_64, %c32], %27 {strides = array<i32>} : memref<16x16x128xbf16, #tpu.memory_space<vmem>>, vector<16x16x4xbf16>,
    %c0_65 = arith.constant 0 : index
    %c0_66 = arith.constant 0 : index
    %c0_67 = arith.constant 0 : index
    %29 = vector.load %arg6[%c0_65, %c0_66, %c0_67] : memref<16x16x128xbf16, #tpu.memory_space<vmem>>, vector<16x16x128xbf16>
    %30 = vector.shape_cast %29 : vector<16x16x128xbf16> to vector<256x128xbf16>
    %c0_68 = arith.constant 0 : index
    %c0_69 = arith.constant 0 : index
    %31 = vector.load %arg2[%c0_68, %c0_69] : memref<128x128xbf16, #tpu.memory_space<vmem>>, vector<128x128xbf16>
    %cst_70 = arith.constant dense<0.000000e+00> : vector<256x128xf32>
    %32 = tpu.matmul %30, %31, %cst_70 {dimension_numbers = #tpu.dot_dimension_numbers<[1], [0], [0], [1], [0, 0, 1, 1], [], []>} : vector<256x128xbf16>, vector<128x128xbf16>, vector<256x128xf32> -> vector<256x128xf32>
    %33 = vector.extract_strided_slice %32 {offsets = [0, 0], sizes = [256, 8], strides = [1, 1]} : vector<256x128xf32> to vector<256x8xf32>
    %c0_71 = arith.constant 0 : index
    %c0_72 = arith.constant 0 : index
    %34 = vector.load %arg3[%c0_71, %c0_72] : memref<1x8xf32, #tpu.memory_space<vmem>>, vector<1x8xf32>
    %35 = vector.broadcast %34 : vector<1x8xf32> to vector<256x8xf32>
    %36 = arith.addf %33, %35 : vector<256x8xf32>
    %cst_73 = arith.constant 0.000000e+00 : f32
    %37 = vector.broadcast %cst_73 : f32 to vector<256x8xf32>
    %38 = arith.maximumf %36, %37 : vector<256x8xf32>
    %39 = vector.shape_cast %38 : vector<256x8xf32> to vector<16x16x8xf32>
    %c0_74 = arith.constant 0 : index
    %c0_75 = arith.constant 0 : index
    %c0_76 = arith.constant 0 : index
    %c0_77 = arith.constant 0 : index
    %40 = vector.load %arg4[%c0_74, %c0_75, %c0_76, %c0_77] : memref<1x16x16x8xf32, #tpu.memory_space<vmem>>, vector<1x16x16x8xf32>
    %41 = vector.shape_cast %40 : vector<1x16x16x8xf32> to vector<16x16x8xf32>
    %42 = vector.shape_cast %39 : vector<16x16x8xf32> to vector<1x16x16x8xf32>
    tpu.vector_store %arg4[%c0_74, %c0_75, %c0_76, %c0_77], %42 {strides = array<i32>} : memref<1x16x16x8xf32, #tpu.memory_space<vmem>>, vector<1x16x16x8xf32>,
    return
  }
  func.func @transform_0(%arg0: i32) -> (i32, i32, i32, i32) {
    %c0_i32 = arith.constant 0 : i32
    %c0_i32_0 = arith.constant 0 : i32
    %c0_i32_1 = arith.constant 0 : i32
    %c0_i32_2 = arith.constant 0 : i32
    return %arg0, %c0_i32, %c0_i32_0, %c0_i32_1 : i32, i32, i32, i32
  }
  func.func @transform_1(%arg0: i32) -> (i32, i32) {
    %c0_i32 = arith.constant 0 : i32
    %c0_i32_0 = arith.constant 0 : i32
    %c0_i32_1 = arith.constant 0 : i32
    return %c0_i32, %c0_i32_0 : i32, i32
  }
  func.func @transform_2(%arg0: i32) -> (i32, i32) {
    %c0_i32 = arith.constant 0 : i32
    %c0_i32_0 = arith.constant 0 : i32
    %c0_i32_1 = arith.constant 0 : i32
    return %c0_i32, %c0_i32_0 : i32, i32
  }
  func.func @transform_3(%arg0: i32) -> (i32, i32, i32, i32) {
    %c0_i32 = arith.constant 0 : i32
    %c0_i32_0 = arith.constant 0 : i32
    %c0_i32_1 = arith.constant 0 : i32
    %c0_i32_2 = arith.constant 0 : i32
    return %arg0, %c0_i32, %c0_i32_0, %c0_i32_1 : i32, i32, i32, i32
  }
}

</mosaic_0001>

<llo_original>
// kernel: tpu_custom_call.1
$region0: #{tpu_custom_call.1}
  #allocation0 [shape = 'u32[]', space=smem, size = 0x4, offset = 0x4, fixed_abs, tag = 'smem constant byte address 0x4 - core index']
  #allocation1 [shape = 'u32[144,128]{1,0:T(1,128)}', space=vmem, size = 0x12000, scoped, tag = 'internal scratch']
  #allocation2 [shape = 'bf16[18,18,4]{2,1,0:T(8,128)(2,1)}', space=vmem, size = 0x1b000, scoped, tag = 'scratch operand']
  #allocation3 [shape = 'bf16[16,16,128]{2,1,0:T(8,128)(2,1)}', space=vmem, size = 0x10000, scoped, tag = 'scratch operand']
  %s0 = inlined_call_operand.vmem [shape: bf16[2,16,16,4], index: 0, kind: input, shape index: {}]
  %s1 = inlined_call_operand.vmem [shape: bf16[128,128], index: 1, kind: input, shape index: {}]
  %s2 = inlined_call_operand.vmem [shape: f32[1,8], index: 2, kind: input, shape index: {}]
  %s3 = inlined_call_operand.vmem [shape: f32[2,16,16,8], index: 3, kind: output, shape index: {}]
  %s4 = sld [smem:[#allocation0]]
  $region45: #{tpu_custom_call.1} parent=0
    _
  %s6 = ssub.s32 1, %s4
  %s7 = scalar_select 0, %s6, %s4
  loop: start=0, step=1, limit=4
  $region2: #{tpu_custom_call.1} parent=0 // loop_pre_header
    _
  $region3: #{tpu_custom_call.1} parent=0 // loop_header
    %s9 = sphi 0, %s13
    %p10 = scmp.ge.s32.totalorder %s9, 4
    %s19 = sphi 0, %s21
    %s22 = sphi 0, %s19
    %s23 = sphi 0, %s22
    %s39 = sphi 0, %s23
    %s43 = sphi 0, %s43
    %s45 = sphi 0, %s43
    %s46 = sphi 0, %s45
    %s60 = sphi 0, %s46
    %s64 = sphi 0, %s64
    %s66 = sphi 0, %s64
    %s67 = sphi 0, %s66
    %s81 = sphi 0, %s67
    %s87 = sphi 0, %s89
    %s90 = sphi 0, %s87
    %s91 = sphi 0, %s90
    %s107 = sphi 0, %s91
  $region4: #{tpu_custom_call.1} parent=0 // loop_header_branch
    %12 = sbr.rel (%p10) target = $region8
  $region5: #{tpu_custom_call.1} parent=0 // loop_body
    %s14 = ssub.s32 %s9, 1
    %s15 = ssub.s32 %s9, 2
    %s16 = sadd.s32 %s9, 1
    %s17 = ssub.s32 %s9, %s16
    %p18 = scmp.eq.s32.totalorder %s17, 0
    %s20 = sadd.s32 %s19, 1
    %s21 = scalar_select %p18, %s19, %s20
    %p24 = pneg %p18
    %p25 = scmp.eq.s32.totalorder %s9, 1
    %p26 = por %p24, %p25
    %p27 = scmp.ne.s32.totalorder %s19, %s22
    %p28 = scmp.eq.s32.totalorder %s9, 0
    %p29 = por %p27, %p28
    %p30 = scmp.ne.s32.totalorder %s19, %s22
    %p31 = scmp.eq.s32.totalorder %s14, 1
    %p32 = por %p30, %p31
    %p33 = scmp.ne.s32.totalorder %s22, %s23
    %p34 = scmp.eq.s32.totalorder %s14, 0
    %p35 = por %p33, %p34
    %p36 = scmp.ne.s32.totalorder %s22, %s23
    %p37 = scmp.eq.s32.totalorder %s15, 1
    %p38 = por %p36, %p37
    %p40 = scmp.ne.s32.totalorder %s23, %s39
    %p41 = scmp.eq.s32.totalorder %s15, 0
    %p42 = por %p40, %p41
    %s44 = sadd.s32 %s43, 1
    %p47 = scmp.eq.s32.totalorder %s9, 1
    %p48 = scmp.ne.s32.totalorder %s43, %s45
    %p49 = scmp.eq.s32.totalorder %s9, 0
    %p50 = por %p48, %p49
    %p51 = scmp.ne.s32.totalorder %s43, %s45
    %p52 = scmp.eq.s32.totalorder %s14, 1
    %p53 = por %p51, %p52
    %p54 = scmp.ne.s32.totalorder %s45, %s46
    %p55 = scmp.eq.s32.totalorder %s14, 0
    %p56 = por %p54, %p55
    %p57 = scmp.ne.s32.totalorder %s45, %s46
    %p58 = scmp.eq.s32.totalorder %s15, 1
    %p59 = por %p57, %p58
    %p61 = scmp.ne.s32.totalorder %s46, %s60
    %p62 = scmp.eq.s32.totalorder %s15, 0
    %p63 = por %p61, %p62
    %s65 = sadd.s32 %s64, 1
    %p68 = scmp.eq.s32.totalorder %s9, 1
    %p69 = scmp.ne.s32.totalorder %s64, %s66
    %p70 = scmp.eq.s32.totalorder %s9, 0
    %p71 = por %p69, %p70
    %p72 = scmp.ne.s32.totalorder %s64, %s66
    %p73 = scmp.eq.s32.totalorder %s14, 1
    %p74 = por %p72, %p73
    %p75 = scmp.ne.s32.totalorder %s66, %s67
    %p76 = scmp.eq.s32.totalorder %s14, 0
    %p77 = por %p75, %p76
    %p78 = scmp.ne.s32.totalorder %s66, %s67
    %p79 = scmp.eq.s32.totalorder %s15, 1
    %p80 = por %p78, %p79
    %p82 = scmp.ne.s32.totalorder %s67, %s81
    %p83 = scmp.eq.s32.totalorder %s15, 0
    %p84 = por %p82, %p83
    %s85 = ssub.s32 %s9, %s16
    %p86 = scmp.eq.s32.totalorder %s85, 0
    %s88 = sadd.s32 %s87, 1
    %s89 = scalar_select %p86, %s87, %s88
    %p92 = pneg %p86
    %p93 = scmp.eq.s32.totalorder %s9, 1
    %p94 = por %p92, %p93
    %p95 = scmp.ne.s32.totalorder %s87, %s90
    %p96 = scmp.eq.s32.totalorder %s9, 0
    %p97 = por %p95, %p96
    %p98 = scmp.ne.s32.totalorder %s87, %s90
    %p99 = scmp.eq.s32.totalorder %s14, 1
    %p100 = por %p98, %p99
    %p101 = scmp.ne.s32.totalorder %s90, %s91
    %p102 = scmp.eq.s32.totalorder %s14, 0
    %p103 = por %p101, %p102
    %p104 = scmp.ne.s32.totalorder %s90, %s91
    %p105 = scmp.eq.s32.totalorder %s15, 1
    %p106 = por %p104, %p105
    %p108 = scmp.ne.s32.totalorder %s91, %s107
    %p109 = scmp.eq.s32.totalorder %s15, 0
    %p110 = por %p108, %p109
    %p111 = scmp.le.s32.totalorder 1, %s9
    %p112 = scmp.lt.s32.totalorder %s9, 3
    %p113 = pnand %p111, %p112
    %p114 = pneg %p113
    // Predicated region
    $region9: #{tpu_custom_call.1} parent=5 // pred_check
      _
    $region10: #{tpu_custom_call.1} parent=5 // pred_check_branch
      %116 = sbr.rel (%p113) target = $region12
    $region11: #{tpu_custom_call.1} parent=5 // pred_region
      %s117 = ssub.s32 %s9, 1
      // Predicated region
      $region13: #{tpu_custom_call.1} parent=11 // pred_check
        %p118 = pneg %p56
      $region14: #{tpu_custom_call.1} parent=11 // pred_check_branch
        %120 = sbr.rel (%p118) target = $region16
      $region15: #{tpu_custom_call.1} parent=11 // pred_region
        _
      $region16: #{tpu_custom_call.1} parent=11 // pred_fallthru
        _
      // Predicated region
      $region17: #{tpu_custom_call.1} parent=11 // pred_check
        %p121 = pneg %p77
      $region18: #{tpu_custom_call.1} parent=11 // pred_check_branch
        %123 = sbr.rel (%p121) target = $region20
      $region19: #{tpu_custom_call.1} parent=11 // pred_region
        _
      $region20: #{tpu_custom_call.1} parent=11 // pred_fallthru
        _
    $region12: #{tpu_custom_call.1} parent=5 // pred_fallthru
      _
    %p124 = scmp.lt.s32.totalorder %s9, 2
    // Predicated region
    $region21: #{tpu_custom_call.1} parent=5 // pred_check
      %p125 = pneg %p124
    $region22: #{tpu_custom_call.1} parent=5 // pred_check_branch
      %127 = sbr.rel (%p125) target = $region24
    $region23: #{tpu_custom_call.1} parent=5 // pred_region
      // Predicated region
      $region25: #{tpu_custom_call.1} parent=23 // pred_check
        %p128 = pneg %p29
      $region26: #{tpu_custom_call.1} parent=23 // pred_check_branch
        %130 = sbr.rel (%p128) target = $region28
      $region27: #{tpu_custom_call.1} parent=23 // pred_region
        %p131 = scmp.lt.s32.totalorder %s9, 1
        %s132 = scalar_select %p131, %s9, 1
        %s133 = smul.addr %s132, 32
        %s134 = smul.addr %s133, 4
        %s135 = scalar_lea.vmem %s0, %s134
      $region28: #{tpu_custom_call.1} parent=23 // pred_fallthru
        _
    $region24: #{tpu_custom_call.1} parent=5 // pred_fallthru
      _
    %p136 = scmp.le.s32.totalorder 1, %s9
    %p137 = scmp.lt.s32.totalorder %s9, 3
    %p138 = pnand %p136, %p137
    %p139 = pneg %p138
    // Predicated region
    $region29: #{tpu_custom_call.1} parent=5 // pred_check
      _
    $region30: #{tpu_custom_call.1} parent=5 // pred_check_branch
      %141 = sbr.rel (%p138) target = $region32
    $region31: #{tpu_custom_call.1} parent=5 // pred_region
      %s142 = ssub.s32 %s9, 1
      %p143 = scmp.lt.s32.totalorder %s14, 1
      %s144 = scalar_select %p143, %s14, 1
      %s145 = smul.addr %s144, 32
      %s146 = smul.addr %s145, 4
      %s147 = scalar_lea.vmem %s0, %s146
      %p148 = pneg %p35
      %p149 = pneg %p32
      %p150 = pneg %p56
      %p151 = pneg %p53
      %p152 = pneg %p77
      %p153 = pneg %p74
      %p154 = pneg %p103
      %p155 = pneg %p100
      %p156 = scmp.lt.s32.totalorder %s14, 1
      %s157 = scalar_select %p156, %s14, 1
      %s158 = smul.addr %s157, 32
      %s159 = smul.addr %s158, 8
      %s160 = scalar_lea.vmem %s3, %s159
      %p161 = scmp.lt.s32.totalorder %s14, 1
      %s162 = scalar_select %p161, %s14, 1
      %s163 = smul.addr %s162, 32
      %s164 = smul.addr %s163, 4
      %s165 = scalar_lea.vmem %s0, %s164
      %p166 = scmp.lt.s32.totalorder %s14, 1
      %s167 = scalar_select %p166, %s14, 1
      %s168 = smul.addr %s167, 32
      %s169 = smul.addr %s168, 8
      %s170 = scalar_lea.vmem %s3, %s169
      %vm172 = vcmask 27648
      %173 = vst.msk [vmem:[#allocation2] sm:$0xf] %vm172, 0
      %174 = vst.msk [vmem:[#allocation2 + $0x4] sm:$0xf] %vm172, 0
      %vm175 = vcmask 24576
      %176 = vst.msk [vmem:[#allocation2 + $0x8] sm:$0x1] %vm175, 0
      %s177 = scalar_lea.vmem [#allocation2], 204
      %178 = vst.msk [vmem:[%s177] sm:$0xf] %vm172, 0
      %179 = vst.msk [vmem:[%s177 + $0x4] sm:$0xf] %vm172, 0
      %180 = vst.msk [vmem:[%s177 + $0x8] sm:$0x1] %vm175, 0
      %vm181 = vcmask 24576
      %vm182 = vsmask.f32 256
      %vm183 = vmand %vm181, %vm182
      %v184 = vld [vmem:[#allocation2] sm:$0x1]
      %v185 = vsel %vm183, 0, %v184
      %186 = vst [vmem:[#allocation2] sm:$0x1] %v185
      %v187 = vld [vmem:[#allocation2 + $0xc] sm:$0x1]
      %v188 = vsel %vm183, 0, %v187
      %189 = vst [vmem:[#allocation2 + $0xc] sm:$0x1] %v188
      %v190 = vld [vmem:[#allocation2 + $0x18] sm:$0x1]
      %v191 = vsel %vm183, 0, %v190
      %192 = vst [vmem:[#allocation2 + $0x18] sm:$0x1] %v191
      %v193 = vld [vmem:[#allocation2 + $0x24] sm:$0x1]
      %v194 = vsel %vm183, 0, %v193
      %195 = vst [vmem:[#allocation2 + $0x24] sm:$0x1] %v194
      %v196 = vld [vmem:[#allocation2 + $0x30] sm:$0x1]
      %v197 = vsel %vm183, 0, %v196
      %198 = vst [vmem:[#allocation2 + $0x30] sm:$0x1] %v197
      %v199 = vld [vmem:[#allocation2 + $0x3c] sm:$0x1]
      %v200 = vsel %vm183, 0, %v199
      %201 = vst [vmem:[#allocation2 + $0x3c] sm:$0x1] %v200
      %v202 = vld [vmem:[#allocation2 + $0x48] sm:$0x1]
      %v203 = vsel %vm183, 0, %v202
      %204 = vst [vmem:[#allocation2 + $0x48] sm:$0x1] %v203
      %v205 = vld [vmem:[#allocation2 + $0x54] sm:$0x1]
      %v206 = vsel %vm183, 0, %v205
      %207 = vst [vmem:[#allocation2 + $0x54] sm:$0x1] %v206
      %v208 = vld [vmem:[#allocation2 + $0x60] sm:$0x1]
      %v209 = vsel %vm183, 0, %v208
      %210 = vst [vmem:[#allocation2 + $0x60] sm:$0x1] %v209
      %v211 = vld [vmem:[#allocation2 + $0x6c] sm:$0x1]
      %v212 = vsel %vm183, 0, %v211
      %213 = vst [vmem:[#allocation2 + $0x6c] sm:$0x1] %v212
      %v214 = vld [vmem:[#allocation2 + $0x78] sm:$0x1]
      %v215 = vsel %vm183, 0, %v214
      %216 = vst [vmem:[#allocation2 + $0x78] sm:$0x1] %v215
      %v217 = vld [vmem:[#allocation2 + $0x84] sm:$0x1]
      %v218 = vsel %vm183, 0, %v217
      %219 = vst [vmem:[#allocation2 + $0x84] sm:$0x1] %v218
      %v220 = vld [vmem:[#allocation2 + $0x90] sm:$0x1]
      %v221 = vsel %vm183, 0, %v220
      %222 = vst [vmem:[#allocation2 + $0x90] sm:$0x1] %v221
      %v223 = vld [vmem:[#allocation2 + $0x9c] sm:$0x1]
      %v224 = vsel %vm183, 0, %v223
      %225 = vst [vmem:[#allocation2 + $0x9c] sm:$0x1] %v224
      %v226 = vld [vmem:[#allocation2 + $0xa8] sm:$0x1]
      %v227 = vsel %vm183, 0, %v226
      %228 = vst [vmem:[#allocation2 + $0xa8] sm:$0x1] %v227
      %v229 = vld [vmem:[#allocation2 + $0xb4] sm:$0x1]
      %v230 = vsel %vm183, 0, %v229
      %231 = vst [vmem:[#allocation2 + $0xb4] sm:$0x1] %v230
      %v232 = vld [vmem:[#allocation2 + $0xc0] sm:$0x1]
      %v233 = vsel %vm183, 0, %v232
      %234 = vst [vmem:[#allocation2 + $0xc0] sm:$0x1] %v233
      %v235 = vld [vmem:[#allocation2 + $0xcc] sm:$0x1]
      %v236 = vsel %vm183, 0, %v235
      %237 = vst [vmem:[#allocation2 + $0xcc] sm:$0x1] %v236
      %vm238 = vsmask.f32 7938
      %vm239 = vmand %vm181, %vm238
      %v240 = vld [vmem:[#allocation2 + $0x8] sm:$0x1]
      %v241 = vsel %vm239, 0, %v240
      %242 = vst [vmem:[#allocation2 + $0x8] sm:$0x1] %v241
      %v243 = vld [vmem:[#allocation2 + $0x14] sm:$0x1]
      %v244 = vsel %vm239, 0, %v243
      %245 = vst [vmem:[#allocation2 + $0x14] sm:$0x1] %v244
      %v246 = vld [vmem:[#allocation2 + $0x20] sm:$0x1]
      %v247 = vsel %vm239, 0, %v246
      %248 = vst [vmem:[#allocation2 + $0x20] sm:$0x1] %v247
      %v249 = vld [vmem:[#allocation2 + $0x2c] sm:$0x1]
      %v250 = vsel %vm239, 0, %v249
      %251 = vst [vmem:[#allocation2 + $0x2c] sm:$0x1] %v250
      %v252 = vld [vmem:[#allocation2 + $0x38] sm:$0x1]
      %v253 = vsel %vm239, 0, %v252
      %254 = vst [vmem:[#allocation2 + $0x38] sm:$0x1] %v253
      %v255 = vld [vmem:[#allocation2 + $0x44] sm:$0x1]
      %v256 = vsel %vm239, 0, %v255
      %257 = vst [vmem:[#allocation2 + $0x44] sm:$0x1] %v256
      %v258 = vld [vmem:[#allocation2 + $0x50] sm:$0x1]
      %v259 = vsel %vm239, 0, %v258
      %260 = vst [vmem:[#allocation2 + $0x50] sm:$0x1] %v259
      %v261 = vld [vmem:[#allocation2 + $0x5c] sm:$0x1]
      %v262 = vsel %vm239, 0, %v261
      %263 = vst [vmem:[#allocation2 + $0x5c] sm:$0x1] %v262
      %v264 = vld [vmem:[#allocation2 + $0x68] sm:$0x1]
      %v265 = vsel %vm239, 0, %v264
      %266 = vst [vmem:[#allocation2 + $0x68] sm:$0x1] %v265
      %v267 = vld [vmem:[#allocation2 + $0x74] sm:$0x1]
      %v268 = vsel %vm239, 0, %v267
      %269 = vst [vmem:[#allocation2 + $0x74] sm:$0x1] %v268
      %v270 = vld [vmem:[#allocation2 + $0x80] sm:$0x1]
      %v271 = vsel %vm239, 0, %v270
      %272 = vst [vmem:[#allocation2 + $0x80] sm:$0x1] %v271
      %v273 = vld [vmem:[#allocation2 + $0x8c] sm:$0x1]
      %v274 = vsel %vm239, 0, %v273
      %275 = vst [vmem:[#allocation2 + $0x8c] sm:$0x1] %v274
      %v276 = vld [vmem:[#allocation2 + $0x98] sm:$0x1]
      %v277 = vsel %vm239, 0, %v276
      %278 = vst [vmem:[#allocation2 + $0x98] sm:$0x1] %v277
      %v279 = vld [vmem:[#allocation2 + $0xa4] sm:$0x1]
      %v280 = vsel %vm239, 0, %v279
      %281 = vst [vmem:[#allocation2 + $0xa4] sm:$0x1] %v280
      %v282 = vld [vmem:[#allocation2 + $0xb0] sm:$0x1]
      %v283 = vsel %vm239, 0, %v282
      %284 = vst [vmem:[#allocation2 + $0xb0] sm:$0x1] %v283
      %v285 = vld [vmem:[#allocation2 + $0xbc] sm:$0x1]
      %v286 = vsel %vm239, 0, %v285
      %287 = vst [vmem:[#allocation2 + $0xbc] sm:$0x1] %v286
      %v288 = vld [vmem:[#allocation2 + $0xc8] sm:$0x1]
      %v289 = vsel %vm239, 0, %v288
      %290 = vst [vmem:[#allocation2 + $0xc8] sm:$0x1] %v289
      %v291 = vld [vmem:[#allocation2 + $0xd4] sm:$0x1]
      %v292 = vsel %vm239, 0, %v291
      %293 = vst [vmem:[#allocation2 + $0xd4] sm:$0x1] %v292
      %v294 = vld [vmem:[%s165] sm:$0xf]
      %v295 = vld [vmem:[%s165 + $0x4] sm:$0xf]
      %v296 = vld [vmem:[%s165 + $0x8] sm:$0xf]
      %v297 = vld [vmem:[%s165 + $0xc] sm:$0xf]
      %v298 = vld [vmem:[%s165 + $0x10] sm:$0xf]
      %v299 = vld [vmem:[%s165 + $0x14] sm:$0xf]
      %v300 = vld [vmem:[%s165 + $0x18] sm:$0xf]
      %v301 = vld [vmem:[%s165 + $0x1c] sm:$0xf]
      %v302 = vld [vmem:[%s165 + $0x20] sm:$0xf]
      %v303 = vld [vmem:[%s165 + $0x24] sm:$0xf]
      %v304 = vld [vmem:[%s165 + $0x28] sm:$0xf]
      %v305 = vld [vmem:[%s165 + $0x2c] sm:$0xf]
      %v306 = vld [vmem:[%s165 + $0x30] sm:$0xf]
      %v307 = vld [vmem:[%s165 + $0x34] sm:$0xf]
      %v308 = vld [vmem:[%s165 + $0x38] sm:$0xf]
      %v309 = vld [vmem:[%s165 + $0x3c] sm:$0xf]
      %v310 = vld [vmem:[%s165 + $0x40] sm:$0xf]
      %v311 = vld [vmem:[%s165 + $0x44] sm:$0xf]
      %v312 = vld [vmem:[%s165 + $0x48] sm:$0xf]
      %v313 = vld [vmem:[%s165 + $0x4c] sm:$0xf]
      %v314 = vld [vmem:[%s165 + $0x50] sm:$0xf]
      %v315 = vld [vmem:[%s165 + $0x54] sm:$0xf]
      %v316 = vld [vmem:[%s165 + $0x58] sm:$0xf]
      %v317 = vld [vmem:[%s165 + $0x5c] sm:$0xf]
      %v318 = vld [vmem:[%s165 + $0x60] sm:$0xf]
      %v319 = vld [vmem:[%s165 + $0x64] sm:$0xf]
      %v320 = vld [vmem:[%s165 + $0x68] sm:$0xf]
      %v321 = vld [vmem:[%s165 + $0x6c] sm:$0xf]
      %v322 = vld [vmem:[%s165 + $0x70] sm:$0xf]
      %v323 = vld [vmem:[%s165 + $0x74] sm:$0xf]
      %v324 = vld [vmem:[%s165 + $0x78] sm:$0xf]
      %v325 = vld [vmem:[%s165 + $0x7c] sm:$0xf]
      %vm326 = vsmask.f32 4368
      %vm327 = vmor %vm182, %vm326
      %v329 = vshrl.u32 %v294, 16
      %v331 = vrot.slane %v329, 7
      %v332 = vshll.u32 %v294, 16
      %v334 = vor.u32 %v331, %v332
      %v335 = vrot.slane %v331, 4
      %v337 = vshrl.u32 %v295, 16
      %v339 = vrot.slane %v337, 7
      %v340 = vshll.u32 %v295, 16
      %v342 = vor.u32 %v339, %v340
      %v343 = vsel %vm327, %v335, %v342
      %v344 = vrot.slane %v339, 4
      %v346 = vshrl.u32 %v296, 16
      %v348 = vrot.slane %v346, 7
      %v349 = vshll.u32 %v296, 16
      %v351 = vor.u32 %v348, %v349
      %v352 = vrot.slane %v348, 4
      %v354 = vshrl.u32 %v297, 16
      %v356 = vrot.slane %v354, 7
      %v357 = vshll.u32 %v297, 16
      %v359 = vor.u32 %v356, %v357
      %v360 = vsel %vm327, %v352, %v359
      %v361 = vrot.slane %v356, 4
      %v363 = vshrl.u32 %v298, 16
      %v365 = vrot.slane %v363, 7
      %v366 = vshll.u32 %v298, 16
      %v368 = vor.u32 %v365, %v366
      %v369 = vrot.slane %v365, 4
      %v371 = vshrl.u32 %v299, 16
      %v373 = vrot.slane %v371, 7
      %v374 = vshll.u32 %v299, 16
      %v376 = vor.u32 %v373, %v374
      %v377 = vsel %vm327, %v369, %v376
      %v378 = vrot.slane %v373, 4
      %v380 = vshrl.u32 %v300, 16
      %v382 = vrot.slane %v380, 7
      %v383 = vshll.u32 %v300, 16
      %v385 = vor.u32 %v382, %v383
      %v386 = vrot.slane %v382, 4
      %v388 = vshrl.u32 %v301, 16
      %v390 = vrot.slane %v388, 7
      %v391 = vshll.u32 %v301, 16
      %v393 = vor.u32 %v390, %v391
      %v394 = vsel %vm327, %v386, %v393
      %v395 = vrot.slane %v390, 4
      %v397 = vshrl.u32 %v302, 16
      %v399 = vrot.slane %v397, 7
      %v400 = vshll.u32 %v302, 16
      %v402 = vor.u32 %v399, %v400
      %v403 = vrot.slane %v399, 4
      %v405 = vshrl.u32 %v303, 16
      %v407 = vrot.slane %v405, 7
      %v408 = vshll.u32 %v303, 16
      %v410 = vor.u32 %v407, %v408
      %v411 = vsel %vm327, %v403, %v410
      %v412 = vrot.slane %v407, 4
      %v414 = vshrl.u32 %v304, 16
      %v416 = vrot.slane %v414, 7
      %v417 = vshll.u32 %v304, 16
      %v419 = vor.u32 %v416, %v417
      %v420 = vrot.slane %v416, 4
      %v422 = vshrl.u32 %v305, 16
      %v424 = vrot.slane %v422, 7
      %v425 = vshll.u32 %v305, 16
      %v427 = vor.u32 %v424, %v425
      %v428 = vsel %vm327, %v420, %v427
      %v429 = vrot.slane %v424, 4
      %v431 = vshrl.u32 %v306, 16
      %v433 = vrot.slane %v431, 7
      %v434 = vshll.u32 %v306, 16
      %v436 = vor.u32 %v433, %v434
      %v437 = vrot.slane %v433, 4
      %v439 = vshrl.u32 %v307, 16
      %v441 = vrot.slane %v439, 7
      %v442 = vshll.u32 %v307, 16
      %v444 = vor.u32 %v441, %v442
      %v445 = vsel %vm327, %v437, %v444
      %v446 = vrot.slane %v441, 4
      %v448 = vshrl.u32 %v308, 16
      %v450 = vrot.slane %v448, 7
      %v451 = vshll.u32 %v308, 16
      %v453 = vor.u32 %v450, %v451
      %v454 = vrot.slane %v450, 4
      %v456 = vshrl.u32 %v309, 16
      %v458 = vrot.slane %v456, 7
      %v459 = vshll.u32 %v309, 16
      %v461 = vor.u32 %v458, %v459
      %v462 = vsel %vm327, %v454, %v461
      %v463 = vrot.slane %v458, 4
      %v465 = vshrl.u32 %v310, 16
      %v467 = vrot.slane %v465, 7
      %v468 = vshll.u32 %v310, 16
      %v470 = vor.u32 %v467, %v468
      %v471 = vrot.slane %v467, 4
      %v473 = vshrl.u32 %v311, 16
      %v475 = vrot.slane %v473, 7
      %v476 = vshll.u32 %v311, 16
      %v478 = vor.u32 %v475, %v476
      %v479 = vsel %vm327, %v471, %v478
      %v480 = vrot.slane %v475, 4
      %v482 = vshrl.u32 %v312, 16
      %v484 = vrot.slane %v482, 7
      %v485 = vshll.u32 %v312, 16
      %v487 = vor.u32 %v484, %v485
      %v488 = vrot.slane %v484, 4
      %v490 = vshrl.u32 %v313, 16
      %v492 = vrot.slane %v490, 7
      %v493 = vshll.u32 %v313, 16
      %v495 = vor.u32 %v492, %v493
      %v496 = vsel %vm327, %v488, %v495
      %v497 = vrot.slane %v492, 4
      %v499 = vshrl.u32 %v314, 16
      %v501 = vrot.slane %v499, 7
      %v502 = vshll.u32 %v314, 16
      %v504 = vor.u32 %v501, %v502
      %v505 = vrot.slane %v501, 4
      %v507 = vshrl.u32 %v315, 16
      %v509 = vrot.slane %v507, 7
      %v510 = vshll.u32 %v315, 16
      %v512 = vor.u32 %v509, %v510
      %v513 = vsel %vm327, %v505, %v512
      %v514 = vrot.slane %v509, 4
      %v516 = vshrl.u32 %v316, 16
      %v518 = vrot.slane %v516, 7
      %v519 = vshll.u32 %v316, 16
      %v521 = vor.u32 %v518, %v519
      %v522 = vrot.slane %v518, 4
      %v524 = vshrl.u32 %v317, 16
      %v526 = vrot.slane %v524, 7
      %v527 = vshll.u32 %v317, 16
      %v529 = vor.u32 %v526, %v527
      %v530 = vsel %vm327, %v522, %v529
      %v531 = vrot.slane %v526, 4
      %v533 = vshrl.u32 %v318, 16
      %v535 = vrot.slane %v533, 7
      %v536 = vshll.u32 %v318, 16
      %v538 = vor.u32 %v535, %v536
      %v539 = vrot.slane %v535, 4
      %v541 = vshrl.u32 %v319, 16
      %v543 = vrot.slane %v541, 7
      %v544 = vshll.u32 %v319, 16
      %v546 = vor.u32 %v543, %v544
      %v547 = vsel %vm327, %v539, %v546
      %v548 = vrot.slane %v543, 4
      %v550 = vshrl.u32 %v320, 16
      %v552 = vrot.slane %v550, 7
      %v553 = vshll.u32 %v320, 16
      %v555 = vor.u32 %v552, %v553
      %v556 = vrot.slane %v552, 4
      %v558 = vshrl.u32 %v321, 16
      %v560 = vrot.slane %v558, 7
      %v561 = vshll.u32 %v321, 16
      %v563 = vor.u32 %v560, %v561
      %v564 = vsel %vm327, %v556, %v563
      %v565 = vrot.slane %v560, 4
      %v567 = vshrl.u32 %v322, 16
      %v569 = vrot.slane %v567, 7
      %v570 = vshll.u32 %v322, 16
      %v572 = vor.u32 %v569, %v570
      %v573 = vrot.slane %v569, 4
      %v575 = vshrl.u32 %v323, 16
      %v577 = vrot.slane %v575, 7
      %v578 = vshll.u32 %v323, 16
      %v580 = vor.u32 %v577, %v578
      %v581 = vsel %vm327, %v573, %v580
      %v582 = vrot.slane %v577, 4
      %v584 = vshrl.u32 %v324, 16
      %v586 = vrot.slane %v584, 7
      %v587 = vshll.u32 %v324, 16
      %v589 = vor.u32 %v586, %v587
      %v590 = vrot.slane %v586, 4
      %v592 = vshrl.u32 %v325, 16
      %v594 = vrot.slane %v592, 7
      %v595 = vshll.u32 %v325, 16
      %v597 = vor.u32 %v594, %v595
      %v598 = vsel %vm327, %v590, %v597
      %v599 = vrot.slane %v594, 4
      %s648 = scalar_lea.vmem [#allocation2], 12
      %vm649 = vcmask 27648
      %vm650 = vmand %vm649, %vm238
      %v651 = vld [vmem:[%s648] sm:$0xf]
      %v652 = vsel %vm650, %v334, %v651
      %653 = vst [vmem:[%s648] sm:$0xf] %v652
      %654 = vst.msk [vmem:[%s648 + $0x4] sm:$0xf] %vm172, %v343
      %v655 = vld [vmem:[%s648 + $0x8] sm:$0x1]
      %v656 = vsel %vm183, %v344, %v655
      %657 = vst [vmem:[%s648 + $0x8] sm:$0x1] %v656
      %v658 = vld [vmem:[%s648 + $0xc] sm:$0xf]
      %v659 = vsel %vm650, %v351, %v658
      %660 = vst [vmem:[%s648 + $0xc] sm:$0xf] %v659
      %661 = vst.msk [vmem:[%s648 + $0x10] sm:$0xf] %vm172, %v360
      %v662 = vld [vmem:[%s648 + $0x14] sm:$0x1]
      %v663 = vsel %vm183, %v361, %v662
      %664 = vst [vmem:[%s648 + $0x14] sm:$0x1] %v663
      %v665 = vld [vmem:[%s648 + $0x18] sm:$0xf]
      %v666 = vsel %vm650, %v368, %v665
      %667 = vst [vmem:[%s648 + $0x18] sm:$0xf] %v666
      %668 = vst.msk [vmem:[%s648 + $0x1c] sm:$0xf] %vm172, %v377
      %v669 = vld [vmem:[%s648 + $0x20] sm:$0x1]
      %v670 = vsel %vm183, %v378, %v669
      %671 = vst [vmem:[%s648 + $0x20] sm:$0x1] %v670
      %v672 = vld [vmem:[%s648 + $0x24] sm:$0xf]
      %v673 = vsel %vm650, %v385, %v672
      %674 = vst [vmem:[%s648 + $0x24] sm:$0xf] %v673
      %675 = vst.msk [vmem:[%s648 + $0x28] sm:$0xf] %vm172, %v394
      %v676 = vld [vmem:[%s648 + $0x2c] sm:$0x1]
      %v677 = vsel %vm183, %v395, %v676
      %678 = vst [vmem:[%s648 + $0x2c] sm:$0x1] %v677
      %v679 = vld [vmem:[%s648 + $0x30] sm:$0xf]
      %v680 = vsel %vm650, %v402, %v679
      %681 = vst [vmem:[%s648 + $0x30] sm:$0xf] %v680
      %682 = vst.msk [vmem:[%s648 + $0x34] sm:$0xf] %vm172, %v411
      %v683 = vld [vmem:[%s648 + $0x38] sm:$0x1]
      %v684 = vsel %vm183, %v412, %v683
      %685 = vst [vmem:[%s648 + $0x38] sm:$0x1] %v684
      %v686 = vld [vmem:[%s648 + $0x3c] sm:$0xf]
      %v687 = vsel %vm650, %v419, %v686
      %688 = vst [vmem:[%s648 + $0x3c] sm:$0xf] %v687
      %689 = vst.msk [vmem:[%s648 + $0x40] sm:$0xf] %vm172, %v428
      %v690 = vld [vmem:[%s648 + $0x44] sm:$0x1]
      %v691 = vsel %vm183, %v429, %v690
      %692 = vst [vmem:[%s648 + $0x44] sm:$0x1] %v691
      %v693 = vld [vmem:[%s648 + $0x48] sm:$0xf]
      %v694 = vsel %vm650, %v436, %v693
      %695 = vst [vmem:[%s648 + $0x48] sm:$0xf] %v694
      %696 = vst.msk [vmem:[%s648 + $0x4c] sm:$0xf] %vm172, %v445
      %v697 = vld [vmem:[%s648 + $0x50] sm:$0x1]
      %v698 = vsel %vm183, %v446, %v697
      %699 = vst [vmem:[%s648 + $0x50] sm:$0x1] %v698
      %v700 = vld [vmem:[%s648 + $0x54] sm:$0xf]
      %v701 = vsel %vm650, %v453, %v700
      %702 = vst [vmem:[%s648 + $0x54] sm:$0xf] %v701
      %703 = vst.msk [vmem:[%s648 + $0x58] sm:$0xf] %vm172, %v462
      %v704 = vld [vmem:[%s648 + $0x5c] sm:$0x1]
      %v705 = vsel %vm183, %v463, %v704
      %706 = vst [vmem:[%s648 + $0x5c] sm:$0x1] %v705
      %v707 = vld [vmem:[%s648 + $0x60] sm:$0xf]
      %v708 = vsel %vm650, %v470, %v707
      %709 = vst [vmem:[%s648 + $0x60] sm:$0xf] %v708
      %710 = vst.msk [vmem:[%s648 + $0x64] sm:$0xf] %vm172, %v479
      %v711 = vld [vmem:[%s648 + $0x68] sm:$0x1]
      %v712 = vsel %vm183, %v480, %v711
      %713 = vst [vmem:[%s648 + $0x68] sm:$0x1] %v712
      %v714 = vld [vmem:[%s648 + $0x6c] sm:$0xf]
      %v715 = vsel %vm650, %v487, %v714
      %716 = vst [vmem:[%s648 + $0x6c] sm:$0xf] %v715
      %717 = vst.msk [vmem:[%s648 + $0x70] sm:$0xf] %vm172, %v496
      %v718 = vld [vmem:[%s648 + $0x74] sm:$0x1]
      %v719 = vsel %vm183, %v497, %v718
      %720 = vst [vmem:[%s648 + $0x74] sm:$0x1] %v719
      %v721 = vld [vmem:[%s648 + $0x78] sm:$0xf]
      %v722 = vsel %vm650, %v504, %v721
      %723 = vst [vmem:[%s648 + $0x78] sm:$0xf] %v722
      %724 = vst.msk [vmem:[%s648 + $0x7c] sm:$0xf] %vm172, %v513
      %v725 = vld [vmem:[%s648 + $0x80] sm:$0x1]
      %v726 = vsel %vm183, %v514, %v725
      %727 = vst [vmem:[%s648 + $0x80] sm:$0x1] %v726
      %v728 = vld [vmem:[%s648 + $0x84] sm:$0xf]
      %v729 = vsel %vm650, %v521, %v728
      %730 = vst [vmem:[%s648 + $0x84] sm:$0xf] %v729
      %731 = vst.msk [vmem:[%s648 + $0x88] sm:$0xf] %vm172, %v530
      %v732 = vld [vmem:[%s648 + $0x8c] sm:$0x1]
      %v733 = vsel %vm183, %v531, %v732
      %734 = vst [vmem:[%s648 + $0x8c] sm:$0x1] %v733
      %v735 = vld [vmem:[%s648 + $0x90] sm:$0xf]
      %v736 = vsel %vm650, %v538, %v735
      %737 = vst [vmem:[%s648 + $0x90] sm:$0xf] %v736
      %738 = vst.msk [vmem:[%s648 + $0x94] sm:$0xf] %vm172, %v547
      %v739 = vld [vmem:[%s648 + $0x98] sm:$0x1]
      %v740 = vsel %vm183, %v548, %v739
      %741 = vst [vmem:[%s648 + $0x98] sm:$0x1] %v740
      %v742 = vld [vmem:[%s648 + $0x9c] sm:$0xf]
      %v743 = vsel %vm650, %v555, %v742
      %744 = vst [vmem:[%s648 + $0x9c] sm:$0xf] %v743
      %745 = vst.msk [vmem:[%s648 + $0xa0] sm:$0xf] %vm172, %v564
      %v746 = vld [vmem:[%s648 + $0xa4] sm:$0x1]
      %v747 = vsel %vm183, %v565, %v746
      %748 = vst [vmem:[%s648 + $0xa4] sm:$0x1] %v747
      %v749 = vld [vmem:[%s648 + $0xa8] sm:$0xf]
      %v750 = vsel %vm650, %v572, %v749
      %751 = vst [vmem:[%s648 + $0xa8] sm:$0xf] %v750
      %752 = vst.msk [vmem:[%s648 + $0xac] sm:$0xf] %vm172, %v581
      %v753 = vld [vmem:[%s648 + $0xb0] sm:$0x1]
      %v754 = vsel %vm183, %v582, %v753
      %755 = vst [vmem:[%s648 + $0xb0] sm:$0x1] %v754
      %v756 = vld [vmem:[%s648 + $0xb4] sm:$0xf]
      %v757 = vsel %vm650, %v589, %v756
      %758 = vst [vmem:[%s648 + $0xb4] sm:$0xf] %v757
      %759 = vst.msk [vmem:[%s648 + $0xb8] sm:$0xf] %vm172, %v598
      %v760 = vld [vmem:[%s648 + $0xbc] sm:$0x1]
      %v761 = vsel %vm183, %v599, %v760
      %762 = vst [vmem:[%s648 + $0xbc] sm:$0x1] %v761
      %vm763 = vcmask 1043744
      %764 = vst.msk [vmem:[#allocation3] sm:$0xf] %vm763, 0
      %765 = vst.msk [vmem:[#allocation3 + $0x4] sm:$0xf] %vm763, 0
      %766 = vst.msk [vmem:[#allocation3 + $0x8] sm:$0xf] %vm763, 0
      %767 = vst.msk [vmem:[#allocation3 + $0xc] sm:$0xf] %vm763, 0
      %768 = vst.msk [vmem:[#allocation3 + $0x10] sm:$0xf] %vm763, 0
      %769 = vst.msk [vmem:[#allocation3 + $0x14] sm:$0xf] %vm763, 0
      %770 = vst.msk [vmem:[#allocation3 + $0x18] sm:$0xf] %vm763, 0
      %771 = vst.msk [vmem:[#allocation3 + $0x1c] sm:$0xf] %vm763, 0
      %772 = vst.msk [vmem:[#allocation3 + $0x20] sm:$0xf] %vm763, 0
      %773 = vst.msk [vmem:[#allocation3 + $0x24] sm:$0xf] %vm763, 0
      %774 = vst.msk [vmem:[#allocation3 + $0x28] sm:$0xf] %vm763, 0
      %775 = vst.msk [vmem:[#allocation3 + $0x2c] sm:$0xf] %vm763, 0
      %776 = vst.msk [vmem:[#allocation3 + $0x30] sm:$0xf] %vm763, 0
      %777 = vst.msk [vmem:[#allocation3 + $0x34] sm:$0xf] %vm763, 0
      %778 = vst.msk [vmem:[#allocation3 + $0x38] sm:$0xf] %vm763, 0
      %779 = vst.msk [vmem:[#allocation3 + $0x3c] sm:$0xf] %vm763, 0
      %780 = vst.msk [vmem:[#allocation3 + $0x40] sm:$0xf] %vm763, 0
      %781 = vst.msk [vmem:[#allocation3 + $0x44] sm:$0xf] %vm763, 0
      %782 = vst.msk [vmem:[#allocation3 + $0x48] sm:$0xf] %vm763, 0
      %783 = vst.msk [vmem:[#allocation3 + $0x4c] sm:$0xf] %vm763, 0
      %784 = vst.msk [vmem:[#allocation3 + $0x50] sm:$0xf] %vm763, 0
      %785 = vst.msk [vmem:[#allocation3 + $0x54] sm:$0xf] %vm763, 0
      %786 = vst.msk [vmem:[#allocation3 + $0x58] sm:$0xf] %vm763, 0
      %787 = vst.msk [vmem:[#allocation3 + $0x5c] sm:$0xf] %vm763, 0
      %788 = vst.msk [vmem:[#allocation3 + $0x60] sm:$0xf] %vm763, 0
      %789 = vst.msk [vmem:[#allocation3 + $0x64] sm:$0xf] %vm763, 0
      %790 = vst.msk [vmem:[#allocation3 + $0x68] sm:$0xf] %vm763, 0
      %791 = vst.msk [vmem:[#allocation3 + $0x6c] sm:$0xf] %vm763, 0
      %792 = vst.msk [vmem:[#allocation3 + $0x70] sm:$0xf] %vm763, 0
      %793 = vst.msk [vmem:[#allocation3 + $0x74] sm:$0xf] %vm763, 0
      %794 = vst.msk [vmem:[#allocation3 + $0x78] sm:$0xf] %vm763, 0
      %795 = vst.msk [vmem:[#allocation3 + $0x7c] sm:$0xf] %vm763, 0
      %v796 = vld [vmem:[#allocation2] sm:$0xf]
      %v797 = vld [vmem:[#allocation2 + $0x4] sm:$0xf]
      %v798 = vld [vmem:[#allocation2 + $0xc] sm:$0xf]
      %v799 = vld [vmem:[#allocation2 + $0x10] sm:$0xf]
      %v800 = vld [vmem:[#allocation2 + $0x18] sm:$0xf]
      %v801 = vld [vmem:[#allocation2 + $0x1c] sm:$0xf]
      %v802 = vld [vmem:[#allocation2 + $0x24] sm:$0xf]
      %v803 = vld [vmem:[#allocation2 + $0x28] sm:$0xf]
      %v804 = vld [vmem:[#allocation2 + $0x30] sm:$0xf]
      %v805 = vld [vmem:[#allocation2 + $0x34] sm:$0xf]
      %v806 = vld [vmem:[#allocation2 + $0x3c] sm:$0xf]
      %v807 = vld [vmem:[#allocation2 + $0x40] sm:$0xf]
      %v808 = vld [vmem:[#allocation2 + $0x48] sm:$0xf]
      %v809 = vld [vmem:[#allocation2 + $0x4c] sm:$0xf]
      %v810 = vld [vmem:[#allocation2 + $0x54] sm:$0xf]
      %v811 = vld [vmem:[#allocation2 + $0x58] sm:$0xf]
      %v812 = vld [vmem:[#allocation2 + $0x60] sm:$0xf]
      %v813 = vld [vmem:[#allocation2 + $0x64] sm:$0xf]
      %v814 = vld [vmem:[#allocation2 + $0x6c] sm:$0xf]
      %v815 = vld [vmem:[#allocation2 + $0x70] sm:$0xf]
      %v816 = vld [vmem:[#allocation2 + $0x78] sm:$0xf]
      %v817 = vld [vmem:[#allocation2 + $0x7c] sm:$0xf]
      %v818 = vld [vmem:[#allocation2 + $0x84] sm:$0xf]
      %v819 = vld [vmem:[#allocation2 + $0x88] sm:$0xf]
      %v820 = vld [vmem:[#allocation2 + $0x90] sm:$0xf]
      %v821 = vld [vmem:[#allocation2 + $0x94] sm:$0xf]
      %v822 = vld [vmem:[#allocation2 + $0x9c] sm:$0xf]
      %v823 = vld [vmem:[#allocation2 + $0xa0] sm:$0xf]
      %v824 = vld [vmem:[#allocation2 + $0xa8] sm:$0xf]
      %v825 = vld [vmem:[#allocation2 + $0xac] sm:$0xf]
      %v826 = vld [vmem:[#allocation2 + $0xb4] sm:$0xf]
      %v827 = vld [vmem:[#allocation2 + $0xb8] sm:$0xf]
      %828 = vst.msk [vmem:[#allocation3] sm:$0xf] %vm172, %v796
      %829 = vst.msk [vmem:[#allocation3 + $0x4] sm:$0xf] %vm172, %v797
      %830 = vst.msk [vmem:[#allocation3 + $0x8] sm:$0xf] %vm172, %v798
      %831 = vst.msk [vmem:[#allocation3 + $0xc] sm:$0xf] %vm172, %v799
      %832 = vst.msk [vmem:[#allocation3 + $0x10] sm:$0xf] %vm172, %v800
      %833 = vst.msk [vmem:[#allocation3 + $0x14] sm:$0xf] %vm172, %v801
      %834 = vst.msk [vmem:[#allocation3 + $0x18] sm:$0xf] %vm172, %v802
      %835 = vst.msk [vmem:[#allocation3 + $0x1c] sm:$0xf] %vm172, %v803
      %836 = vst.msk [vmem:[#allocation3 + $0x20] sm:$0xf] %vm172, %v804
      %837 = vst.msk [vmem:[#allocation3 + $0x24] sm:$0xf] %vm172, %v805
      %838 = vst.msk [vmem:[#allocation3 + $0x28] sm:$0xf] %vm172, %v806
      %839 = vst.msk [vmem:[#allocation3 + $0x2c] sm:$0xf] %vm172, %v807
      %840 = vst.msk [vmem:[#allocation3 + $0x30] sm:$0xf] %vm172, %v808
      %841 = vst.msk [vmem:[#allocation3 + $0x34] sm:$0xf] %vm172, %v809
      %842 = vst.msk [vmem:[#allocation3 + $0x38] sm:$0xf] %vm172, %v810
      %843 = vst.msk [vmem:[#allocation3 + $0x3c] sm:$0xf] %vm172, %v811
      %844 = vst.msk [vmem:[#allocation3 + $0x40] sm:$0xf] %vm172, %v812
      %845 = vst.msk [vmem:[#allocation3 + $0x44] sm:$0xf] %vm172, %v813
      %846 = vst.msk [vmem:[#allocation3 + $0x48] sm:$0xf] %vm172, %v814
      %847 = vst.msk [vmem:[#allocation3 + $0x4c] sm:$0xf] %vm172, %v815
      %848 = vst.msk [vmem:[#allocation3 + $0x50] sm:$0xf] %vm172, %v816
      %849 = vst.msk [vmem:[#allocation3 + $0x54] sm:$0xf] %vm172, %v817
      %850 = vst.msk [vmem:[#allocation3 + $0x58] sm:$0xf] %vm172, %v818
      %851 = vst.msk [vmem:[#allocation3 + $0x5c] sm:$0xf] %vm172, %v819
      %852 = vst.msk [vmem:[#allocation3 + $0x60] sm:$0xf] %vm172, %v820
      %853 = vst.msk [vmem:[#allocation3 + $0x64] sm:$0xf] %vm172, %v821
      %854 = vst.msk [vmem:[#allocation3 + $0x68] sm:$0xf] %vm172, %v822
      %855 = vst.msk [vmem:[#allocation3 + $0x6c] sm:$0xf] %vm172, %v823
      %856 = vst.msk [vmem:[#allocation3 + $0x70] sm:$0xf] %vm172, %v824
      %857 = vst.msk [vmem:[#allocation3 + $0x74] sm:$0xf] %vm172, %v825
      %858 = vst.msk [vmem:[#allocation3 + $0x78] sm:$0xf] %vm172, %v826
      %859 = vst.msk [vmem:[#allocation3 + $0x7c] sm:$0xf] %vm172, %v827
      %v860 = vld [vmem:[#allocation2] sm:$0xf]
      %v861 = vld [vmem:[#allocation2 + $0x4] sm:$0xf]
      %v862 = vld [vmem:[#allocation2 + $0x8] sm:$0x1]
      %v863 = vld [vmem:[#allocation2 + $0xc] sm:$0xf]
      %v864 = vld [vmem:[#allocation2 + $0x10] sm:$0xf]
      %v865 = vld [vmem:[#allocation2 + $0x14] sm:$0x1]
      %v866 = vld [vmem:[#allocation2 + $0x18] sm:$0xf]
      %v867 = vld [vmem:[#allocation2 + $0x1c] sm:$0xf]
      %v868 = vld [vmem:[#allocation2 + $0x20] sm:$0x1]
      %v869 = vld [vmem:[#allocation2 + $0x24] sm:$0xf]
      %v870 = vld [vmem:[#allocation2 + $0x28] sm:$0xf]
      %v871 = vld [vmem:[#allocation2 + $0x2c] sm:$0x1]
      %v872 = vld [vmem:[#allocation2 + $0x30] sm:$0xf]
      %v873 = vld [vmem:[#allocation2 + $0x34] sm:$0xf]
      %v874 = vld [vmem:[#allocation2 + $0x38] sm:$0x1]
      %v875 = vld [vmem:[#allocation2 + $0x3c] sm:$0xf]
      %v876 = vld [vmem:[#allocation2 + $0x40] sm:$0xf]
      %v877 = vld [vmem:[#allocation2 + $0x44] sm:$0x1]
      %v878 = vld [vmem:[#allocation2 + $0x48] sm:$0xf]
      %v879 = vld [vmem:[#allocation2 + $0x4c] sm:$0xf]
      %v880 = vld [vmem:[#allocation2 + $0x50] sm:$0x1]
      %v881 = vld [vmem:[#allocation2 + $0x54] sm:$0xf]
      %v882 = vld [vmem:[#allocation2 + $0x58] sm:$0xf]
      %v883 = vld [vmem:[#allocation2 + $0x5c] sm:$0x1]
      %v884 = vld [vmem:[#allocation2 + $0x60] sm:$0xf]
      %v885 = vld [vmem:[#allocation2 + $0x64] sm:$0xf]
      %v886 = vld [vmem:[#allocation2 + $0x68] sm:$0x1]
      %v887 = vld [vmem:[#allocation2 + $0x6c] sm:$0xf]
      %v888 = vld [vmem:[#allocation2 + $0x70] sm:$0xf]
      %v889 = vld [vmem:[#allocation2 + $0x74] sm:$0x1]
      %v890 = vld [vmem:[#allocation2 + $0x78] sm:$0xf]
      %v891 = vld [vmem:[#allocation2 + $0x7c] sm:$0xf]
      %v892 = vld [vmem:[#allocation2 + $0x80] sm:$0x1]
      %v893 = vld [vmem:[#allocation2 + $0x84] sm:$0xf]
      %v894 = vld [vmem:[#allocation2 + $0x88] sm:$0xf]
      %v895 = vld [vmem:[#allocation2 + $0x8c] sm:$0x1]
      %v896 = vld [vmem:[#allocation2 + $0x90] sm:$0xf]
      %v897 = vld [vmem:[#allocation2 + $0x94] sm:$0xf]
      %v898 = vld [vmem:[#allocation2 + $0x98] sm:$0x1]
      %v899 = vld [vmem:[#allocation2 + $0x9c] sm:$0xf]
      %v900 = vld [vmem:[#allocation2 + $0xa0] sm:$0xf]
      %v901 = vld [vmem:[#allocation2 + $0xa4] sm:$0x1]
      %v902 = vld [vmem:[#allocation2 + $0xa8] sm:$0xf]
      %v903 = vld [vmem:[#allocation2 + $0xac] sm:$0xf]
      %v904 = vld [vmem:[#allocation2 + $0xb0] sm:$0x1]
      %v905 = vld [vmem:[#allocation2 + $0xb4] sm:$0xf]
      %v906 = vld [vmem:[#allocation2 + $0xb8] sm:$0xf]
      %v907 = vld [vmem:[#allocation2 + $0xbc] sm:$0x1]
      %vm908 = vsmask.f32 3328
      %vm909 = vsmask.f32 7440
      %vm910 = vmor %vm908, %vm909
      %v912 = vshrl.u32 %v860, 16
      %v914 = vrot.slane %v912, 4
      %v915 = vshll.u32 %v860, 16
      %v917 = vrot.slane %v915, 5
      %v918 = vor.u32 %v914, %v917
      %v919 = vrot.slane %v918, 4
      %v921 = vshll.u32 %v861, 16
      %v923 = vrot.slane %v921, 5
      %v924 = vsel %vm910, %v919, %v923
      %v925 = vshrl.u32 %v861, 16
      %v927 = vrot.slane %v925, 4
      %v928 = vor.u32 %v927, %v923
      %v929 = vrot.slane %v928, 4
      %v931 = vshll.u32 %v862, 16
      %v933 = vrot.slane %v931, 5
      %v934 = vsel %vm910, %v929, %v933
      %v936 = vshrl.u32 %v863, 16
      %v938 = vrot.slane %v936, 4
      %v939 = vshll.u32 %v863, 16
      %v941 = vrot.slane %v939, 5
      %v942 = vor.u32 %v938, %v941
      %v943 = vrot.slane %v942, 4
      %v945 = vshll.u32 %v864, 16
      %v947 = vrot.slane %v945, 5
      %v948 = vsel %vm910, %v943, %v947
      %v949 = vshrl.u32 %v864, 16
      %v951 = vrot.slane %v949, 4
      %v952 = vor.u32 %v951, %v947
      %v953 = vrot.slane %v952, 4
      %v955 = vshll.u32 %v865, 16
      %v957 = vrot.slane %v955, 5
      %v958 = vsel %vm910, %v953, %v957
      %v960 = vshrl.u32 %v866, 16
      %v962 = vrot.slane %v960, 4
      %v963 = vshll.u32 %v866, 16
      %v965 = vrot.slane %v963, 5
      %v966 = vor.u32 %v962, %v965
      %v967 = vrot.slane %v966, 4
      %v969 = vshll.u32 %v867, 16
      %v971 = vrot.slane %v969, 5
      %v972 = vsel %vm910, %v967, %v971
      %v973 = vshrl.u32 %v867, 16
      %v975 = vrot.slane %v973, 4
      %v976 = vor.u32 %v975, %v971
      %v977 = vrot.slane %v976, 4
      %v979 = vshll.u32 %v868, 16
      %v981 = vrot.slane %v979, 5
      %v982 = vsel %vm910, %v977, %v981
      %v984 = vshrl.u32 %v869, 16
      %v986 = vrot.slane %v984, 4
      %v987 = vshll.u32 %v869, 16
      %v989 = vrot.slane %v987, 5
      %v990 = vor.u32 %v986, %v989
      %v991 = vrot.slane %v990, 4
      %v993 = vshll.u32 %v870, 16
      %v995 = vrot.slane %v993, 5
      %v996 = vsel %vm910, %v991, %v995
      %v997 = vshrl.u32 %v870, 16
      %v999 = vrot.slane %v997, 4
      %v1000 = vor.u32 %v999, %v995
      %v1001 = vrot.slane %v1000, 4
      %v1003 = vshll.u32 %v871, 16
      %v1005 = vrot.slane %v1003, 5
      %v1006 = vsel %vm910, %v1001, %v1005
      %v1008 = vshrl.u32 %v872, 16
      %v1010 = vrot.slane %v1008, 4
      %v1011 = vshll.u32 %v872, 16
      %v1013 = vrot.slane %v1011, 5
      %v1014 = vor.u32 %v1010, %v1013
      %v1015 = vrot.slane %v1014, 4
      %v1017 = vshll.u32 %v873, 16
      %v1019 = vrot.slane %v1017, 5
      %v1020 = vsel %vm910, %v1015, %v1019
      %v1021 = vshrl.u32 %v873, 16
      %v1023 = vrot.slane %v1021, 4
      %v1024 = vor.u32 %v1023, %v1019
      %v1025 = vrot.slane %v1024, 4
      %v1027 = vshll.u32 %v874, 16
      %v1029 = vrot.slane %v1027, 5
      %v1030 = vsel %vm910, %v1025, %v1029
      %v1032 = vshrl.u32 %v875, 16
      %v1034 = vrot.slane %v1032, 4
      %v1035 = vshll.u32 %v875, 16
      %v1037 = vrot.slane %v1035, 5
      %v1038 = vor.u32 %v1034, %v1037
      %v1039 = vrot.slane %v1038, 4
      %v1041 = vshll.u32 %v876, 16
      %v1043 = vrot.slane %v1041, 5
      %v1044 = vsel %vm910, %v1039, %v1043
      %v1045 = vshrl.u32 %v876, 16
      %v1047 = vrot.slane %v1045, 4
      %v1048 = vor.u32 %v1047, %v1043
      %v1049 = vrot.slane %v1048, 4
      %v1051 = vshll.u32 %v877, 16
      %v1053 = vrot.slane %v1051, 5
      %v1054 = vsel %vm910, %v1049, %v1053
      %v1056 = vshrl.u32 %v878, 16
      %v1058 = vrot.slane %v1056, 4
      %v1059 = vshll.u32 %v878, 16
      %v1061 = vrot.slane %v1059, 5
      %v1062 = vor.u32 %v1058, %v1061
      %v1063 = vrot.slane %v1062, 4
      %v1065 = vshll.u32 %v879, 16
      %v1067 = vrot.slane %v1065, 5
      %v1068 = vsel %vm910, %v1063, %v1067
      %v1069 = vshrl.u32 %v879, 16
      %v1071 = vrot.slane %v1069, 4
      %v1072 = vor.u32 %v1071, %v1067
      %v1073 = vrot.slane %v1072, 4
      %v1075 = vshll.u32 %v880, 16
      %v1077 = vrot.slane %v1075, 5
      %v1078 = vsel %vm910, %v1073, %v1077
      %v1080 = vshrl.u32 %v881, 16
      %v1082 = vrot.slane %v1080, 4
      %v1083 = vshll.u32 %v881, 16
      %v1085 = vrot.slane %v1083, 5
      %v1086 = vor.u32 %v1082, %v1085
      %v1087 = vrot.slane %v1086, 4
      %v1089 = vshll.u32 %v882, 16
      %v1091 = vrot.slane %v1089, 5
      %v1092 = vsel %vm910, %v1087, %v1091
      %v1093 = vshrl.u32 %v882, 16
      %v1095 = vrot.slane %v1093, 4
      %v1096 = vor.u32 %v1095, %v1091
      %v1097 = vrot.slane %v1096, 4
      %v1099 = vshll.u32 %v883, 16
      %v1101 = vrot.slane %v1099, 5
      %v1102 = vsel %vm910, %v1097, %v1101
      %v1104 = vshrl.u32 %v884, 16
      %v1106 = vrot.slane %v1104, 4
      %v1107 = vshll.u32 %v884, 16
      %v1109 = vrot.slane %v1107, 5
      %v1110 = vor.u32 %v1106, %v1109
      %v1111 = vrot.slane %v1110, 4
      %v1113 = vshll.u32 %v885, 16
      %v1115 = vrot.slane %v1113, 5
      %v1116 = vsel %vm910, %v1111, %v1115
      %v1117 = vshrl.u32 %v885, 16
      %v1119 = vrot.slane %v1117, 4
      %v1120 = vor.u32 %v1119, %v1115
      %v1121 = vrot.slane %v1120, 4
      %v1123 = vshll.u32 %v886, 16
      %v1125 = vrot.slane %v1123, 5
      %v1126 = vsel %vm910, %v1121, %v1125
      %v1128 = vshrl.u32 %v887, 16
      %v1130 = vrot.slane %v1128, 4
      %v1131 = vshll.u32 %v887, 16
      %v1133 = vrot.slane %v1131, 5
      %v1134 = vor.u32 %v1130, %v1133
      %v1135 = vrot.slane %v1134, 4
      %v1137 = vshll.u32 %v888, 16
      %v1139 = vrot.slane %v1137, 5
      %v1140 = vsel %vm910, %v1135, %v1139
      %v1141 = vshrl.u32 %v888, 16
      %v1143 = vrot.slane %v1141, 4
      %v1144 = vor.u32 %v1143, %v1139
      %v1145 = vrot.slane %v1144, 4
      %v1147 = vshll.u32 %v889, 16
      %v1149 = vrot.slane %v1147, 5
      %v1150 = vsel %vm910, %v1145, %v1149
      %v1152 = vshrl.u32 %v890, 16
      %v1154 = vrot.slane %v1152, 4
      %v1155 = vshll.u32 %v890, 16
      %v1157 = vrot.slane %v1155, 5
      %v1158 = vor.u32 %v1154, %v1157
      %v1159 = vrot.slane %v1158, 4
      %v1161 = vshll.u32 %v891, 16
      %v1163 = vrot.slane %v1161, 5
      %v1164 = vsel %vm910, %v1159, %v1163
      %v1165 = vshrl.u32 %v891, 16
      %v1167 = vrot.slane %v1165, 4
      %v1168 = vor.u32 %v1167, %v1163
      %v1169 = vrot.slane %v1168, 4
      %v1171 = vshll.u32 %v892, 16
      %v1173 = vrot.slane %v1171, 5
      %v1174 = vsel %vm910, %v1169, %v1173
      %v1176 = vshrl.u32 %v893, 16
      %v1178 = vrot.slane %v1176, 4
      %v1179 = vshll.u32 %v893, 16
      %v1181 = vrot.slane %v1179, 5
      %v1182 = vor.u32 %v1178, %v1181
      %v1183 = vrot.slane %v1182, 4
      %v1185 = vshll.u32 %v894, 16
      %v1187 = vrot.slane %v1185, 5
      %v1188 = vsel %vm910, %v1183, %v1187
      %v1189 = vshrl.u32 %v894, 16
      %v1191 = vrot.slane %v1189, 4
      %v1192 = vor.u32 %v1191, %v1187
      %v1193 = vrot.slane %v1192, 4
      %v1195 = vshll.u32 %v895, 16
      %v1197 = vrot.slane %v1195, 5
      %v1198 = vsel %vm910, %v1193, %v1197
      %v1200 = vshrl.u32 %v896, 16
      %v1202 = vrot.slane %v1200, 4
      %v1203 = vshll.u32 %v896, 16
      %v1205 = vrot.slane %v1203, 5
      %v1206 = vor.u32 %v1202, %v1205
      %v1207 = vrot.slane %v1206, 4
      %v1209 = vshll.u32 %v897, 16
      %v1211 = vrot.slane %v1209, 5
      %v1212 = vsel %vm910, %v1207, %v1211
      %v1213 = vshrl.u32 %v897, 16
      %v1215 = vrot.slane %v1213, 4
      %v1216 = vor.u32 %v1215, %v1211
      %v1217 = vrot.slane %v1216, 4
      %v1219 = vshll.u32 %v898, 16
      %v1221 = vrot.slane %v1219, 5
      %v1222 = vsel %vm910, %v1217, %v1221
      %v1224 = vshrl.u32 %v899, 16
      %v1226 = vrot.slane %v1224, 4
      %v1227 = vshll.u32 %v899, 16
      %v1229 = vrot.slane %v1227, 5
      %v1230 = vor.u32 %v1226, %v1229
      %v1231 = vrot.slane %v1230, 4
      %v1233 = vshll.u32 %v900, 16
      %v1235 = vrot.slane %v1233, 5
      %v1236 = vsel %vm910, %v1231, %v1235
      %v1237 = vshrl.u32 %v900, 16
      %v1239 = vrot.slane %v1237, 4
      %v1240 = vor.u32 %v1239, %v1235
      %v1241 = vrot.slane %v1240, 4
      %v1243 = vshll.u32 %v901, 16
      %v1245 = vrot.slane %v1243, 5
      %v1246 = vsel %vm910, %v1241, %v1245
      %v1248 = vshrl.u32 %v902, 16
      %v1250 = vrot.slane %v1248, 4
      %v1251 = vshll.u32 %v902, 16
      %v1253 = vrot.slane %v1251, 5
      %v1254 = vor.u32 %v1250, %v1253
      %v1255 = vrot.slane %v1254, 4
      %v1257 = vshll.u32 %v903, 16
      %v1259 = vrot.slane %v1257, 5
      %v1260 = vsel %vm910, %v1255, %v1259
      %v1261 = vshrl.u32 %v903, 16
      %v1263 = vrot.slane %v1261, 4
      %v1264 = vor.u32 %v1263, %v1259
      %v1265 = vrot.slane %v1264, 4
      %v1267 = vshll.u32 %v904, 16
      %v1269 = vrot.slane %v1267, 5
      %v1270 = vsel %vm910, %v1265, %v1269
      %v1272 = vshrl.u32 %v905, 16
      %v1274 = vrot.slane %v1272, 4
      %v1275 = vshll.u32 %v905, 16
      %v1277 = vrot.slane %v1275, 5
      %v1278 = vor.u32 %v1274, %v1277
      %v1279 = vrot.slane %v1278, 4
      %v1281 = vshll.u32 %v906, 16
      %v1283 = vrot.slane %v1281, 5
      %v1284 = vsel %vm910, %v1279, %v1283
      %v1285 = vshrl.u32 %v906, 16
      %v1287 = vrot.slane %v1285, 4
      %v1288 = vor.u32 %v1287, %v1283
      %v1289 = vrot.slane %v1288, 4
      %v1291 = vshll.u32 %v907, 16
      %v1293 = vrot.slane %v1291, 5
      %v1294 = vsel %vm910, %v1289, %v1293
      %1295 = vrot.lane.b32.xlu0 %v924, 4
      %v1296 = vpop.permute.xlu0 %1295
      %1297 = vrot.lane.b32.xlu0 %v934, 4
      %v1298 = vpop.permute.xlu0 %1297
      %1299 = vrot.lane.b32.xlu0 %v948, 4
      %v1300 = vpop.permute.xlu0 %1299
      %1301 = vrot.lane.b32.xlu0 %v958, 4
      %v1302 = vpop.permute.xlu0 %1301
      %1303 = vrot.lane.b32.xlu0 %v972, 4
      %v1304 = vpop.permute.xlu0 %1303
      %1305 = vrot.lane.b32.xlu0 %v982, 4
      %v1306 = vpop.permute.xlu0 %1305
      %1307 = vrot.lane.b32.xlu0 %v996, 4
      %v1308 = vpop.permute.xlu0 %1307
      %1309 = vrot.lane.b32.xlu0 %v1006, 4
      %v1310 = vpop.permute.xlu0 %1309
      %1311 = vrot.lane.b32.xlu0 %v1020, 4
      %v1312 = vpop.permute.xlu0 %1311
      %1313 = vrot.lane.b32.xlu0 %v1030, 4
      %v1314 = vpop.permute.xlu0 %1313
      %1315 = vrot.lane.b32.xlu0 %v1044, 4
      %v1316 = vpop.permute.xlu0 %1315
      %1317 = vrot.lane.b32.xlu0 %v1054, 4
      %v1318 = vpop.permute.xlu0 %1317
      %1319 = vrot.lane.b32.xlu0 %v1068, 4
      %v1320 = vpop.permute.xlu0 %1319
      %1321 = vrot.lane.b32.xlu0 %v1078, 4
      %v1322 = vpop.permute.xlu0 %1321
      %1323 = vrot.lane.b32.xlu0 %v1092, 4
      %v1324 = vpop.permute.xlu0 %1323
      %1325 = vrot.lane.b32.xlu0 %v1102, 4
      %v1326 = vpop.permute.xlu0 %1325
      %1327 = vrot.lane.b32.xlu0 %v1116, 4
      %v1328 = vpop.permute.xlu0 %1327
      %1329 = vrot.lane.b32.xlu0 %v1126, 4
      %v1330 = vpop.permute.xlu0 %1329
      %1331 = vrot.lane.b32.xlu0 %v1140, 4
      %v1332 = vpop.permute.xlu0 %1331
      %1333 = vrot.lane.b32.xlu0 %v1150, 4
      %v1334 = vpop.permute.xlu0 %1333
      %1335 = vrot.lane.b32.xlu0 %v1164, 4
      %v1336 = vpop.permute.xlu0 %1335
      %1337 = vrot.lane.b32.xlu0 %v1174, 4
      %v1338 = vpop.permute.xlu0 %1337
      %1339 = vrot.lane.b32.xlu0 %v1188, 4
      %v1340 = vpop.permute.xlu0 %1339
      %1341 = vrot.lane.b32.xlu0 %v1198, 4
      %v1342 = vpop.permute.xlu0 %1341
      %1343 = vrot.lane.b32.xlu0 %v1212, 4
      %v1344 = vpop.permute.xlu0 %1343
      %1345 = vrot.lane.b32.xlu0 %v1222, 4
      %v1346 = vpop.permute.xlu0 %1345
      %1347 = vrot.lane.b32.xlu0 %v1236, 4
      %v1348 = vpop.permute.xlu0 %1347
      %1349 = vrot.lane.b32.xlu0 %v1246, 4
      %v1350 = vpop.permute.xlu0 %1349
      %1351 = vrot.lane.b32.xlu0 %v1260, 4
      %v1352 = vpop.permute.xlu0 %1351
      %1353 = vrot.lane.b32.xlu0 %v1270, 4
      %v1354 = vpop.permute.xlu0 %1353
      %1355 = vrot.lane.b32.xlu0 %v1284, 4
      %v1356 = vpop.permute.xlu0 %1355
      %1357 = vrot.lane.b32.xlu0 %v1294, 4
      %v1358 = vpop.permute.xlu0 %1357
      %vm1391 = vcmask 60448
      %1392 = vst.msk [vmem:[#allocation3] sm:$0xf] %vm1391, %v1296
      %1393 = vst.msk [vmem:[#allocation3 + $0x4] sm:$0xf] %vm1391, %v1298
      %1394 = vst.msk [vmem:[#allocation3 + $0x8] sm:$0xf] %vm1391, %v1300
      %1395 = vst.msk [vmem:[#allocation3 + $0xc] sm:$0xf] %vm1391, %v1302
      %1396 = vst.msk [vmem:[#allocation3 + $0x10] sm:$0xf] %vm1391, %v1304
      %1397 = vst.msk [vmem:[#allocation3 + $0x14] sm:$0xf] %vm1391, %v1306
      %1398 = vst.msk [vmem:[#allocation3 + $0x18] sm:$0xf] %vm1391, %v1308
      %1399 = vst.msk [vmem:[#allocation3 + $0x1c] sm:$0xf] %vm1391, %v1310
      %1400 = vst.msk [vmem:[#allocation3 + $0x20] sm:$0xf] %vm1391, %v1312
      %1401 = vst.msk [vmem:[#allocation3 + $0x24] sm:$0xf] %vm1391, %v1314
      %1402 = vst.msk [vmem:[#allocation3 + $0x28] sm:$0xf] %vm1391, %v1316
      %1403 = vst.msk [vmem:[#allocation3 + $0x2c] sm:$0xf] %vm1391, %v1318
      %1404 = vst.msk [vmem:[#allocation3 + $0x30] sm:$0xf] %vm1391, %v1320
      %1405 = vst.msk [vmem:[#allocation3 + $0x34] sm:$0xf] %vm1391, %v1322
      %1406 = vst.msk [vmem:[#allocation3 + $0x38] sm:$0xf] %vm1391, %v1324
      %1407 = vst.msk [vmem:[#allocation3 + $0x3c] sm:$0xf] %vm1391, %v1326
      %1408 = vst.msk [vmem:[#allocation3 + $0x40] sm:$0xf] %vm1391, %v1328
      %1409 = vst.msk [vmem:[#allocation3 + $0x44] sm:$0xf] %vm1391, %v1330
      %1410 = vst.msk [vmem:[#allocation3 + $0x48] sm:$0xf] %vm1391, %v1332
      %1411 = vst.msk [vmem:[#allocation3 + $0x4c] sm:$0xf] %vm1391, %v1334
      %1412 = vst.msk [vmem:[#allocation3 + $0x50] sm:$0xf] %vm1391, %v1336
      %1413 = vst.msk [vmem:[#allocation3 + $0x54] sm:$0xf] %vm1391, %v1338
      %1414 = vst.msk [vmem:[#allocation3 + $0x58] sm:$0xf] %vm1391, %v1340
      %1415 = vst.msk [vmem:[#allocation3 + $0x5c] sm:$0xf] %vm1391, %v1342
      %1416 = vst.msk [vmem:[#allocation3 + $0x60] sm:$0xf] %vm1391, %v1344
      %1417 = vst.msk [vmem:[#allocation3 + $0x64] sm:$0xf] %vm1391, %v1346
      %1418 = vst.msk [vmem:[#allocation3 + $0x68] sm:$0xf] %vm1391, %v1348
      %1419 = vst.msk [vmem:[#allocation3 + $0x6c] sm:$0xf] %vm1391, %v1350
      %1420 = vst.msk [vmem:[#allocation3 + $0x70] sm:$0xf] %vm1391, %v1352
      %1421 = vst.msk [vmem:[#allocation3 + $0x74] sm:$0xf] %vm1391, %v1354
      %1422 = vst.msk [vmem:[#allocation3 + $0x78] sm:$0xf] %vm1391, %v1356
      %1423 = vst.msk [vmem:[#allocation3 + $0x7c] sm:$0xf] %vm1391, %v1358
      %v1424 = vld [vmem:[#allocation2] sm:$0xe]
      %v1425 = vld [vmem:[#allocation2 + $0x4] sm:$0xf]
      %v1426 = vld [vmem:[#allocation2 + $0x8] sm:$0x1]
      %v1427 = vld [vmem:[#allocation2 + $0xc] sm:$0xe]
      %v1428 = vld [vmem:[#allocation2 + $0x10] sm:$0xf]
      %v1429 = vld [vmem:[#allocation2 + $0x14] sm:$0x1]
      %v1430 = vld [vmem:[#allocation2 + $0x18] sm:$0xe]
      %v1431 = vld [vmem:[#allocation2 + $0x1c] sm:$0xf]
      %v1432 = vld [vmem:[#allocation2 + $0x20] sm:$0x1]
      %v1433 = vld [vmem:[#allocation2 + $0x24] sm:$0xe]
      %v1434 = vld [vmem:[#allocation2 + $0x28] sm:$0xf]
      %v1435 = vld [vmem:[#allocation2 + $0x2c] sm:$0x1]
      %v1436 = vld [vmem:[#allocation2 + $0x30] sm:$0xe]
      %v1437 = vld [vmem:[#allocation2 + $0x34] sm:$0xf]
      %v1438 = vld [vmem:[#allocation2 + $0x38] sm:$0x1]
      %v1439 = vld [vmem:[#allocation2 + $0x3c] sm:$0xe]
      %v1440 = vld [vmem:[#allocation2 + $0x40] sm:$0xf]
      %v1441 = vld [vmem:[#allocation2 + $0x44] sm:$0x1]
      %v1442 = vld [vmem:[#allocation2 + $0x48] sm:$0xe]
      %v1443 = vld [vmem:[#allocation2 + $0x4c] sm:$0xf]
      %v1444 = vld [vmem:[#allocation2 + $0x50] sm:$0x1]
      %v1445 = vld [vmem:[#allocation2 + $0x54] sm:$0xe]
      %v1446 = vld [vmem:[#allocation2 + $0x58] sm:$0xf]
      %v1447 = vld [vmem:[#allocation2 + $0x5c] sm:$0x1]
      %v1448 = vld [vmem:[#allocation2 + $0x60] sm:$0xe]
      %v1449 = vld [vmem:[#allocation2 + $0x64] sm:$0xf]
      %v1450 = vld [vmem:[#allocation2 + $0x68] sm:$0x1]
      %v1451 = vld [vmem:[#allocation2 + $0x6c] sm:$0xe]
      %v1452 = vld [vmem:[#allocation2 + $0x70] sm:$0xf]
      %v1453 = vld [vmem:[#allocation2 + $0x74] sm:$0x1]
      %v1454 = vld [vmem:[#allocation2 + $0x78] sm:$0xe]
      %v1455 = vld [vmem:[#allocation2 + $0x7c] sm:$0xf]
      %v1456 = vld [vmem:[#allocation2 + $0x80] sm:$0x1]
      %v1457 = vld [vmem:[#allocation2 + $0x84] sm:$0xe]
      %v1458 = vld [vmem:[#allocation2 + $0x88] sm:$0xf]
      %v1459 = vld [vmem:[#allocation2 + $0x8c] sm:$0x1]
      %v1460 = vld [vmem:[#allocation2 + $0x90] sm:$0xe]
      %v1461 = vld [vmem:[#allocation2 + $0x94] sm:$0xf]
      %v1462 = vld [vmem:[#allocation2 + $0x98] sm:$0x1]
      %v1463 = vld [vmem:[#allocation2 + $0x9c] sm:$0xe]
      %v1464 = vld [vmem:[#allocation2 + $0xa0] sm:$0xf]
      %v1465 = vld [vmem:[#allocation2 + $0xa4] sm:$0x1]
      %v1466 = vld [vmem:[#allocation2 + $0xa8] sm:$0xe]
      %v1467 = vld [vmem:[#allocation2 + $0xac] sm:$0xf]
      %v1468 = vld [vmem:[#allocation2 + $0xb0] sm:$0x1]
      %v1469 = vld [vmem:[#allocation2 + $0xb4] sm:$0xe]
      %v1470 = vld [vmem:[#allocation2 + $0xb8] sm:$0xf]
      %v1471 = vld [vmem:[#allocation2 + $0xbc] sm:$0x1]
      %vm1520 = vcmask 1042432
      %vm1521 = vcmask 1046532
      %vm1522 = vmor %vm1520, %vm1521
      %v1523 = vrot.slane %v1424, 5
      %v1524 = vrot.slane %v1523, 4
      %v1525 = vrot.slane %v1425, 5
      %v1526 = vsel %vm1522, %v1524, %v1525
      %v1527 = vrot.slane %v1525, 4
      %v1528 = vrot.slane %v1426, 5
      %v1529 = vsel %vm1522, %v1527, %v1528
      %v1530 = vrot.slane %v1427, 5
      %v1531 = vrot.slane %v1530, 4
      %v1532 = vrot.slane %v1428, 5
      %v1533 = vsel %vm1522, %v1531, %v1532
      %v1534 = vrot.slane %v1532, 4
      %v1535 = vrot.slane %v1429, 5
      %v1536 = vsel %vm1522, %v1534, %v1535
      %v1537 = vrot.slane %v1430, 5
      %v1538 = vrot.slane %v1537, 4
      %v1539 = vrot.slane %v1431, 5
      %v1540 = vsel %vm1522, %v1538, %v1539
      %v1541 = vrot.slane %v1539, 4
      %v1542 = vrot.slane %v1432, 5
      %v1543 = vsel %vm1522, %v1541, %v1542
      %v1544 = vrot.slane %v1433, 5
      %v1545 = vrot.slane %v1544, 4
      %v1546 = vrot.slane %v1434, 5
      %v1547 = vsel %vm1522, %v1545, %v1546
      %v1548 = vrot.slane %v1546, 4
      %v1549 = vrot.slane %v1435, 5
      %v1550 = vsel %vm1522, %v1548, %v1549
      %v1551 = vrot.slane %v1436, 5
      %v1552 = vrot.slane %v1551, 4
      %v1553 = vrot.slane %v1437, 5
      %v1554 = vsel %vm1522, %v1552, %v1553
      %v1555 = vrot.slane %v1553, 4
      %v1556 = vrot.slane %v1438, 5
      %v1557 = vsel %vm1522, %v1555, %v1556
      %v1558 = vrot.slane %v1439, 5
      %v1559 = vrot.slane %v1558, 4
      %v1560 = vrot.slane %v1440, 5
      %v1561 = vsel %vm1522, %v1559, %v1560
      %v1562 = vrot.slane %v1560, 4
      %v1563 = vrot.slane %v1441, 5
      %v1564 = vsel %vm1522, %v1562, %v1563
      %v1565 = vrot.slane %v1442, 5
      %v1566 = vrot.slane %v1565, 4
      %v1567 = vrot.slane %v1443, 5
      %v1568 = vsel %vm1522, %v1566, %v1567
      %v1569 = vrot.slane %v1567, 4
      %v1570 = vrot.slane %v1444, 5
      %v1571 = vsel %vm1522, %v1569, %v1570
      %v1572 = vrot.slane %v1445, 5
      %v1573 = vrot.slane %v1572, 4
      %v1574 = vrot.slane %v1446, 5
      %v1575 = vsel %vm1522, %v1573, %v1574
      %v1576 = vrot.slane %v1574, 4
      %v1577 = vrot.slane %v1447, 5
      %v1578 = vsel %vm1522, %v1576, %v1577
      %v1579 = vrot.slane %v1448, 5
      %v1580 = vrot.slane %v1579, 4
      %v1581 = vrot.slane %v1449, 5
      %v1582 = vsel %vm1522, %v1580, %v1581
      %v1583 = vrot.slane %v1581, 4
      %v1584 = vrot.slane %v1450, 5
      %v1585 = vsel %vm1522, %v1583, %v1584
      %v1586 = vrot.slane %v1451, 5
      %v1587 = vrot.slane %v1586, 4
      %v1588 = vrot.slane %v1452, 5
      %v1589 = vsel %vm1522, %v1587, %v1588
      %v1590 = vrot.slane %v1588, 4
      %v1591 = vrot.slane %v1453, 5
      %v1592 = vsel %vm1522, %v1590, %v1591
      %v1593 = vrot.slane %v1454, 5
      %v1594 = vrot.slane %v1593, 4
      %v1595 = vrot.slane %v1455, 5
      %v1596 = vsel %vm1522, %v1594, %v1595
      %v1597 = vrot.slane %v1595, 4
      %v1598 = vrot.slane %v1456, 5
      %v1599 = vsel %vm1522, %v1597, %v1598
      %v1600 = vrot.slane %v1457, 5
      %v1601 = vrot.slane %v1600, 4
      %v1602 = vrot.slane %v1458, 5
      %v1603 = vsel %vm1522, %v1601, %v1602
      %v1604 = vrot.slane %v1602, 4
      %v1605 = vrot.slane %v1459, 5
      %v1606 = vsel %vm1522, %v1604, %v1605
      %v1607 = vrot.slane %v1460, 5
      %v1608 = vrot.slane %v1607, 4
      %v1609 = vrot.slane %v1461, 5
      %v1610 = vsel %vm1522, %v1608, %v1609
      %v1611 = vrot.slane %v1609, 4
      %v1612 = vrot.slane %v1462, 5
      %v1613 = vsel %vm1522, %v1611, %v1612
      %v1614 = vrot.slane %v1463, 5
      %v1615 = vrot.slane %v1614, 4
      %v1616 = vrot.slane %v1464, 5
      %v1617 = vsel %vm1522, %v1615, %v1616
      %v1618 = vrot.slane %v1616, 4
      %v1619 = vrot.slane %v1465, 5
      %v1620 = vsel %vm1522, %v1618, %v1619
      %v1621 = vrot.slane %v1466, 5
      %v1622 = vrot.slane %v1621, 4
      %v1623 = vrot.slane %v1467, 5
      %v1624 = vsel %vm1522, %v1622, %v1623
      %v1625 = vrot.slane %v1623, 4
      %v1626 = vrot.slane %v1468, 5
      %v1627 = vsel %vm1522, %v1625, %v1626
      %v1628 = vrot.slane %v1469, 5
      %v1629 = vrot.slane %v1628, 4
      %v1630 = vrot.slane %v1470, 5
      %v1631 = vsel %vm1522, %v1629, %v1630
      %v1632 = vrot.slane %v1630, 4
      %v1633 = vrot.slane %v1471, 5
      %v1634 = vsel %vm1522, %v1632, %v1633
      %1635 = vrot.lane.b32.xlu0 %v1526, 8
      %v1636 = vpop.permute.xlu0 %1635
      %1637 = vrot.lane.b32.xlu0 %v1529, 8
      %v1638 = vpop.permute.xlu0 %1637
      %1639 = vrot.lane.b32.xlu0 %v1533, 8
      %v1640 = vpop.permute.xlu0 %1639
      %1641 = vrot.lane.b32.xlu0 %v1536, 8
      %v1642 = vpop.permute.xlu0 %1641
      %1643 = vrot.lane.b32.xlu0 %v1540, 8
      %v1644 = vpop.permute.xlu0 %1643
      %1645 = vrot.lane.b32.xlu0 %v1543, 8
      %v1646 = vpop.permute.xlu0 %1645
      %1647 = vrot.lane.b32.xlu0 %v1547, 8
      %v1648 = vpop.permute.xlu0 %1647
      %1649 = vrot.lane.b32.xlu0 %v1550, 8
      %v1650 = vpop.permute.xlu0 %1649
      %1651 = vrot.lane.b32.xlu0 %v1554, 8
      %v1652 = vpop.permute.xlu0 %1651
      %1653 = vrot.lane.b32.xlu0 %v1557, 8
      %v1654 = vpop.permute.xlu0 %1653
      %1655 = vrot.lane.b32.xlu0 %v1561, 8
      %v1656 = vpop.permute.xlu0 %1655
      %1657 = vrot.lane.b32.xlu0 %v1564, 8
      %v1658 = vpop.permute.xlu0 %1657
      %1659 = vrot.lane.b32.xlu0 %v1568, 8
      %v1660 = vpop.permute.xlu0 %1659
      %1661 = vrot.lane.b32.xlu0 %v1571, 8
      %v1662 = vpop.permute.xlu0 %1661
      %1663 = vrot.lane.b32.xlu0 %v1575, 8
      %v1664 = vpop.permute.xlu0 %1663
      %1665 = vrot.lane.b32.xlu0 %v1578, 8
      %v1666 = vpop.permute.xlu0 %1665
      %1667 = vrot.lane.b32.xlu0 %v1582, 8
      %v1668 = vpop.permute.xlu0 %1667
      %1669 = vrot.lane.b32.xlu0 %v1585, 8
      %v1670 = vpop.permute.xlu0 %1669
      %1671 = vrot.lane.b32.xlu0 %v1589, 8
      %v1672 = vpop.permute.xlu0 %1671
      %1673 = vrot.lane.b32.xlu0 %v1592, 8
      %v1674 = vpop.permute.xlu0 %1673
      %1675 = vrot.lane.b32.xlu0 %v1596, 8
      %v1676 = vpop.permute.xlu0 %1675
      %1677 = vrot.lane.b32.xlu0 %v1599, 8
      %v1678 = vpop.permute.xlu0 %1677
      %1679 = vrot.lane.b32.xlu0 %v1603, 8
      %v1680 = vpop.permute.xlu0 %1679
      %1681 = vrot.lane.b32.xlu0 %v1606, 8
      %v1682 = vpop.permute.xlu0 %1681
      %1683 = vrot.lane.b32.xlu0 %v1610, 8
      %v1684 = vpop.permute.xlu0 %1683
      %1685 = vrot.lane.b32.xlu0 %v1613, 8
      %v1686 = vpop.permute.xlu0 %1685
      %1687 = vrot.lane.b32.xlu0 %v1617, 8
      %v1688 = vpop.permute.xlu0 %1687
      %1689 = vrot.lane.b32.xlu0 %v1620, 8
      %v1690 = vpop.permute.xlu0 %1689
      %1691 = vrot.lane.b32.xlu0 %v1624, 8
      %v1692 = vpop.permute.xlu0 %1691
      %1693 = vrot.lane.b32.xlu0 %v1627, 8
      %v1694 = vpop.permute.xlu0 %1693
      %1695 = vrot.lane.b32.xlu0 %v1631, 8
      %v1696 = vpop.permute.xlu0 %1695
      %1697 = vrot.lane.b32.xlu0 %v1634, 8
      %v1698 = vpop.permute.xlu0 %1697
      %vm1731 = vcmask 93248
      %1732 = vst.msk [vmem:[#allocation3] sm:$0xf] %vm1731, %v1636
      %1733 = vst.msk [vmem:[#allocation3 + $0x4] sm:$0xf] %vm1731, %v1638
      %1734 = vst.msk [vmem:[#allocation3 + $0x8] sm:$0xf] %vm1731, %v1640
      %1735 = vst.msk [vmem:[#allocation3 + $0xc] sm:$0xf] %vm1731, %v1642
      %1736 = vst.msk [vmem:[#allocation3 + $0x10] sm:$0xf] %vm1731, %v1644
      %1737 = vst.msk [vmem:[#allocation3 + $0x14] sm:$0xf] %vm1731, %v1646
      %1738 = vst.msk [vmem:[#allocation3 + $0x18] sm:$0xf] %vm1731, %v1648
      %1739 = vst.msk [vmem:[#allocation3 + $0x1c] sm:$0xf] %vm1731, %v1650
      %1740 = vst.msk [vmem:[#allocation3 + $0x20] sm:$0xf] %vm1731, %v1652
      %1741 = vst.msk [vmem:[#allocation3 + $0x24] sm:$0xf] %vm1731, %v1654
      %1742 = vst.msk [vmem:[#allocation3 + $0x28] sm:$0xf] %vm1731, %v1656
      %1743 = vst.msk [vmem:[#allocation3 + $0x2c] sm:$0xf] %vm1731, %v1658
      %1744 = vst.msk [vmem:[#allocation3 + $0x30] sm:$0xf] %vm1731, %v1660
      %1745 = vst.msk [vmem:[#allocation3 + $0x34] sm:$0xf] %vm1731, %v1662
      %1746 = vst.msk [vmem:[#allocation3 + $0x38] sm:$0xf] %vm1731, %v1664
      %1747 = vst.msk [vmem:[#allocation3 + $0x3c] sm:$0xf] %vm1731, %v1666
      %1748 = vst.msk [vmem:[#allocation3 + $0x40] sm:$0xf] %vm1731, %v1668
      %1749 = vst.msk [vmem:[#allocation3 + $0x44] sm:$0xf] %vm1731, %v1670
      %1750 = vst.msk [vmem:[#allocation3 + $0x48] sm:$0xf] %vm1731, %v1672
      %1751 = vst.msk [vmem:[#allocation3 + $0x4c] sm:$0xf] %vm1731, %v1674
      %1752 = vst.msk [vmem:[#allocation3 + $0x50] sm:$0xf] %vm1731, %v1676
      %1753 = vst.msk [vmem:[#allocation3 + $0x54] sm:$0xf] %vm1731, %v1678
      %1754 = vst.msk [vmem:[#allocation3 + $0x58] sm:$0xf] %vm1731, %v1680
      %1755 = vst.msk [vmem:[#allocation3 + $0x5c] sm:$0xf] %vm1731, %v1682
      %1756 = vst.msk [vmem:[#allocation3 + $0x60] sm:$0xf] %vm1731, %v1684
      %1757 = vst.msk [vmem:[#allocation3 + $0x64] sm:$0xf] %vm1731, %v1686
      %1758 = vst.msk [vmem:[#allocation3 + $0x68] sm:$0xf] %vm1731, %v1688
      %1759 = vst.msk [vmem:[#allocation3 + $0x6c] sm:$0xf] %vm1731, %v1690
      %1760 = vst.msk [vmem:[#allocation3 + $0x70] sm:$0xf] %vm1731, %v1692
      %1761 = vst.msk [vmem:[#allocation3 + $0x74] sm:$0xf] %vm1731, %v1694
      %1762 = vst.msk [vmem:[#allocation3 + $0x78] sm:$0xf] %vm1731, %v1696
      %1763 = vst.msk [vmem:[#allocation3 + $0x7c] sm:$0xf] %vm1731, %v1698
      %v1764 = vld [vmem:[%s648] sm:$0xf]
      %v1765 = vld [vmem:[%s648 + $0x4] sm:$0xf]
      %v1766 = vld [vmem:[%s648 + $0xc] sm:$0xf]
      %v1767 = vld [vmem:[%s648 + $0x10] sm:$0xf]
      %v1768 = vld [vmem:[%s648 + $0x18] sm:$0xf]
      %v1769 = vld [vmem:[%s648 + $0x1c] sm:$0xf]
      %v1770 = vld [vmem:[%s648 + $0x24] sm:$0xf]
      %v1771 = vld [vmem:[%s648 + $0x28] sm:$0xf]
      %v1772 = vld [vmem:[%s648 + $0x30] sm:$0xf]
      %v1773 = vld [vmem:[%s648 + $0x34] sm:$0xf]
      %v1774 = vld [vmem:[%s648 + $0x3c] sm:$0xf]
      %v1775 = vld [vmem:[%s648 + $0x40] sm:$0xf]
      %v1776 = vld [vmem:[%s648 + $0x48] sm:$0xf]
      %v1777 = vld [vmem:[%s648 + $0x4c] sm:$0xf]
      %v1778 = vld [vmem:[%s648 + $0x54] sm:$0xf]
      %v1779 = vld [vmem:[%s648 + $0x58] sm:$0xf]
      %v1780 = vld [vmem:[%s648 + $0x60] sm:$0xf]
      %v1781 = vld [vmem:[%s648 + $0x64] sm:$0xf]
      %v1782 = vld [vmem:[%s648 + $0x6c] sm:$0xf]
      %v1783 = vld [vmem:[%s648 + $0x70] sm:$0xf]
      %v1784 = vld [vmem:[%s648 + $0x78] sm:$0xf]
      %v1785 = vld [vmem:[%s648 + $0x7c] sm:$0xf]
      %v1786 = vld [vmem:[%s648 + $0x84] sm:$0xf]
      %v1787 = vld [vmem:[%s648 + $0x88] sm:$0xf]
      %v1788 = vld [vmem:[%s648 + $0x90] sm:$0xf]
      %v1789 = vld [vmem:[%s648 + $0x94] sm:$0xf]
      %v1790 = vld [vmem:[%s648 + $0x9c] sm:$0xf]
      %v1791 = vld [vmem:[%s648 + $0xa0] sm:$0xf]
      %v1792 = vld [vmem:[%s648 + $0xa8] sm:$0xf]
      %v1793 = vld [vmem:[%s648 + $0xac] sm:$0xf]
      %v1794 = vld [vmem:[%s648 + $0xb4] sm:$0xf]
      %v1795 = vld [vmem:[%s648 + $0xb8] sm:$0xf]
      %1828 = vrot.lane.b32.xlu0 %v1764, 12
      %v1829 = vpop.permute.xlu0 %1828
      %1830 = vrot.lane.b32.xlu0 %v1765, 12
      %v1831 = vpop.permute.xlu0 %1830
      %1832 = vrot.lane.b32.xlu0 %v1766, 12
      %v1833 = vpop.permute.xlu0 %1832
      %1834 = vrot.lane.b32.xlu0 %v1767, 12
      %v1835 = vpop.permute.xlu0 %1834
      %1836 = vrot.lane.b32.xlu0 %v1768, 12
      %v1837 = vpop.permute.xlu0 %1836
      %1838 = vrot.lane.b32.xlu0 %v1769, 12
      %v1839 = vpop.permute.xlu0 %1838
      %1840 = vrot.lane.b32.xlu0 %v1770, 12
      %v1841 = vpop.permute.xlu0 %1840
      %1842 = vrot.lane.b32.xlu0 %v1771, 12
      %v1843 = vpop.permute.xlu0 %1842
      %1844 = vrot.lane.b32.xlu0 %v1772, 12
      %v1845 = vpop.permute.xlu0 %1844
      %1846 = vrot.lane.b32.xlu0 %v1773, 12
      %v1847 = vpop.permute.xlu0 %1846
      %1848 = vrot.lane.b32.xlu0 %v1774, 12
      %v1849 = vpop.permute.xlu0 %1848
      %1850 = vrot.lane.b32.xlu0 %v1775, 12
      %v1851 = vpop.permute.xlu0 %1850
      %1852 = vrot.lane.b32.xlu0 %v1776, 12
      %v1853 = vpop.permute.xlu0 %1852
      %1854 = vrot.lane.b32.xlu0 %v1777, 12
      %v1855 = vpop.permute.xlu0 %1854
      %1856 = vrot.lane.b32.xlu0 %v1778, 12
      %v1857 = vpop.permute.xlu0 %1856
      %1858 = vrot.lane.b32.xlu0 %v1779, 12
      %v1859 = vpop.permute.xlu0 %1858
      %1860 = vrot.lane.b32.xlu0 %v1780, 12
      %v1861 = vpop.permute.xlu0 %1860
      %1862 = vrot.lane.b32.xlu0 %v1781, 12
      %v1863 = vpop.permute.xlu0 %1862
      %1864 = vrot.lane.b32.xlu0 %v1782, 12
      %v1865 = vpop.permute.xlu0 %1864
      %1866 = vrot.lane.b32.xlu0 %v1783, 12
      %v1867 = vpop.permute.xlu0 %1866
      %1868 = vrot.lane.b32.xlu0 %v1784, 12
      %v1869 = vpop.permute.xlu0 %1868
      %1870 = vrot.lane.b32.xlu0 %v1785, 12
      %v1871 = vpop.permute.xlu0 %1870
      %1872 = vrot.lane.b32.xlu0 %v1786, 12
      %v1873 = vpop.permute.xlu0 %1872
      %1874 = vrot.lane.b32.xlu0 %v1787, 12
      %v1875 = vpop.permute.xlu0 %1874
      %1876 = vrot.lane.b32.xlu0 %v1788, 12
      %v1877 = vpop.permute.xlu0 %1876
      %1878 = vrot.lane.b32.xlu0 %v1789, 12
      %v1879 = vpop.permute.xlu0 %1878
      %1880 = vrot.lane.b32.xlu0 %v1790, 12
      %v1881 = vpop.permute.xlu0 %1880
      %1882 = vrot.lane.b32.xlu0 %v1791, 12
      %v1883 = vpop.permute.xlu0 %1882
      %1884 = vrot.lane.b32.xlu0 %v1792, 12
      %v1885 = vpop.permute.xlu0 %1884
      %1886 = vrot.lane.b32.xlu0 %v1793, 12
      %v1887 = vpop.permute.xlu0 %1886
      %1888 = vrot.lane.b32.xlu0 %v1794, 12
      %v1889 = vpop.permute.xlu0 %1888
      %1890 = vrot.lane.b32.xlu0 %v1795, 12
      %v1891 = vpop.permute.xlu0 %1890
      %vm1924 = vcmask 126048
      %1925 = vst.msk [vmem:[#allocation3] sm:$0xf] %vm1924, %v1829
      %1926 = vst.msk [vmem:[#allocation3 + $0x4] sm:$0xf] %vm1924, %v1831
      %1927 = vst.msk [vmem:[#allocation3 + $0x8] sm:$0xf] %vm1924, %v1833
      %1928 = vst.msk [vmem:[#allocation3 + $0xc] sm:$0xf] %vm1924, %v1835
      %1929 = vst.msk [vmem:[#allocation3 + $0x10] sm:$0xf] %vm1924, %v1837
      %1930 = vst.msk [vmem:[#allocation3 + $0x14] sm:$0xf] %vm1924, %v1839
      %1931 = vst.msk [vmem:[#allocation3 + $0x18] sm:$0xf] %vm1924, %v1841
      %1932 = vst.msk [vmem:[#allocation3 + $0x1c] sm:$0xf] %vm1924, %v1843
      %1933 = vst.msk [vmem:[#allocation3 + $0x20] sm:$0xf] %vm1924, %v1845
      %1934 = vst.msk [vmem:[#allocation3 + $0x24] sm:$0xf] %vm1924, %v1847
      %1935 = vst.msk [vmem:[#allocation3 + $0x28] sm:$0xf] %vm1924, %v1849
      %1936 = vst.msk [vmem:[#allocation3 + $0x2c] sm:$0xf] %vm1924, %v1851
      %1937 = vst.msk [vmem:[#allocation3 + $0x30] sm:$0xf] %vm1924, %v1853
      %1938 = vst.msk [vmem:[#allocation3 + $0x34] sm:$0xf] %vm1924, %v1855
      %1939 = vst.msk [vmem:[#allocation3 + $0x38] sm:$0xf] %vm1924, %v1857
      %1940 = vst.msk [vmem:[#allocation3 + $0x3c] sm:$0xf] %vm1924, %v1859
      %1941 = vst.msk [vmem:[#allocation3 + $0x40] sm:$0xf] %vm1924, %v1861
      %1942 = vst.msk [vmem:[#allocation3 + $0x44] sm:$0xf] %vm1924, %v1863
      %1943 = vst.msk [vmem:[#allocation3 + $0x48] sm:$0xf] %vm1924, %v1865
      %1944 = vst.msk [vmem:[#allocation3 + $0x4c] sm:$0xf] %vm1924, %v1867
      %1945 = vst.msk [vmem:[#allocation3 + $0x50] sm:$0xf] %vm1924, %v1869
      %1946 = vst.msk [vmem:[#allocation3 + $0x54] sm:$0xf] %vm1924, %v1871
      %1947 = vst.msk [vmem:[#allocation3 + $0x58] sm:$0xf] %vm1924, %v1873
      %1948 = vst.msk [vmem:[#allocation3 + $0x5c] sm:$0xf] %vm1924, %v1875
      %1949 = vst.msk [vmem:[#allocation3 + $0x60] sm:$0xf] %vm1924, %v1877
      %1950 = vst.msk [vmem:[#allocation3 + $0x64] sm:$0xf] %vm1924, %v1879
      %1951 = vst.msk [vmem:[#allocation3 + $0x68] sm:$0xf] %vm1924, %v1881
      %1952 = vst.msk [vmem:[#allocation3 + $0x6c] sm:$0xf] %vm1924, %v1883
      %1953 = vst.msk [vmem:[#allocation3 + $0x70] sm:$0xf] %vm1924, %v1885
      %1954 = vst.msk [vmem:[#allocation3 + $0x74] sm:$0xf] %vm1924, %v1887
      %1955 = vst.msk [vmem:[#allocation3 + $0x78] sm:$0xf] %vm1924, %v1889
      %1956 = vst.msk [vmem:[#allocation3 + $0x7c] sm:$0xf] %vm1924, %v1891
      %v1957 = vld [vmem:[%s648] sm:$0xf]
      %v1958 = vld [vmem:[%s648 + $0x4] sm:$0xf]
      %v1959 = vld [vmem:[%s648 + $0x8] sm:$0x1]
      %v1960 = vld [vmem:[%s648 + $0xc] sm:$0xf]
      %v1961 = vld [vmem:[%s648 + $0x10] sm:$0xf]
      %v1962 = vld [vmem:[%s648 + $0x14] sm:$0x1]
      %v1963 = vld [vmem:[%s648 + $0x18] sm:$0xf]
      %v1964 = vld [vmem:[%s648 + $0x1c] sm:$0xf]
      %v1965 = vld [vmem:[%s648 + $0x20] sm:$0x1]
      %v1966 = vld [vmem:[%s648 + $0x24] sm:$0xf]
      %v1967 = vld [vmem:[%s648 + $0x28] sm:$0xf]
      %v1968 = vld [vmem:[%s648 + $0x2c] sm:$0x1]
      %v1969 = vld [vmem:[%s648 + $0x30] sm:$0xf]
      %v1970 = vld [vmem:[%s648 + $0x34] sm:$0xf]
      %v1971 = vld [vmem:[%s648 + $0x38] sm:$0x1]
      %v1972 = vld [vmem:[%s648 + $0x3c] sm:$0xf]
      %v1973 = vld [vmem:[%s648 + $0x40] sm:$0xf]
      %v1974 = vld [vmem:[%s648 + $0x44] sm:$0x1]
      %v1975 = vld [vmem:[%s648 + $0x48] sm:$0xf]
      %v1976 = vld [vmem:[%s648 + $0x4c] sm:$0xf]
      %v1977 = vld [vmem:[%s648 + $0x50] sm:$0x1]
      %v1978 = vld [vmem:[%s648 + $0x54] sm:$0xf]
      %v1979 = vld [vmem:[%s648 + $0x58] sm:$0xf]
      %v1980 = vld [vmem:[%s648 + $0x5c] sm:$0x1]
      %v1981 = vld [vmem:[%s648 + $0x60] sm:$0xf]
      %v1982 = vld [vmem:[%s648 + $0x64] sm:$0xf]
      %v1983 = vld [vmem:[%s648 + $0x68] sm:$0x1]
      %v1984 = vld [vmem:[%s648 + $0x6c] sm:$0xf]
      %v1985 = vld [vmem:[%s648 + $0x70] sm:$0xf]
      %v1986 = vld [vmem:[%s648 + $0x74] sm:$0x1]
      %v1987 = vld [vmem:[%s648 + $0x78] sm:$0xf]
      %v1988 = vld [vmem:[%s648 + $0x7c] sm:$0xf]
      %v1989 = vld [vmem:[%s648 + $0x80] sm:$0x1]
      %v1990 = vld [vmem:[%s648 + $0x84] sm:$0xf]
      %v1991 = vld [vmem:[%s648 + $0x88] sm:$0xf]
      %v1992 = vld [vmem:[%s648 + $0x8c] sm:$0x1]
      %v1993 = vld [vmem:[%s648 + $0x90] sm:$0xf]
      %v1994 = vld [vmem:[%s648 + $0x94] sm:$0xf]
      %v1995 = vld [vmem:[%s648 + $0x98] sm:$0x1]
      %v1996 = vld [vmem:[%s648 + $0x9c] sm:$0xf]
      %v1997 = vld [vmem:[%s648 + $0xa0] sm:$0xf]
      %v1998 = vld [vmem:[%s648 + $0xa4] sm:$0x1]
      %v1999 = vld [vmem:[%s648 + $0xa8] sm:$0xf]
      %v2000 = vld [vmem:[%s648 + $0xac] sm:$0xf]
      %v2001 = vld [vmem:[%s648 + $0xb0] sm:$0x1]
      %v2002 = vld [vmem:[%s648 + $0xb4] sm:$0xf]
      %v2003 = vld [vmem:[%s648 + $0xb8] sm:$0xf]
      %v2004 = vld [vmem:[%s648 + $0xbc] sm:$0x1]
      %v2006 = vshrl.u32 %v1957, 16
      %v2008 = vrot.slane %v2006, 4
      %v2009 = vshll.u32 %v1957, 16
      %v2011 = vrot.slane %v2009, 5
      %v2012 = vor.u32 %v2008, %v2011
      %v2013 = vrot.slane %v2012, 4
      %v2015 = vshll.u32 %v1958, 16
      %v2017 = vrot.slane %v2015, 5
      %v2018 = vsel %vm910, %v2013, %v2017
      %v2019 = vshrl.u32 %v1958, 16
      %v2021 = vrot.slane %v2019, 4
      %v2022 = vor.u32 %v2021, %v2017
      %v2023 = vrot.slane %v2022, 4
      %v2025 = vshll.u32 %v1959, 16
      %v2027 = vrot.slane %v2025, 5
      %v2028 = vsel %vm910, %v2023, %v2027
      %v2030 = vshrl.u32 %v1960, 16
      %v2032 = vrot.slane %v2030, 4
      %v2033 = vshll.u32 %v1960, 16
      %v2035 = vrot.slane %v2033, 5
      %v2036 = vor.u32 %v2032, %v2035
      %v2037 = vrot.slane %v2036, 4
      %v2039 = vshll.u32 %v1961, 16
      %v2041 = vrot.slane %v2039, 5
      %v2042 = vsel %vm910, %v2037, %v2041
      %v2043 = vshrl.u32 %v1961, 16
      %v2045 = vrot.slane %v2043, 4
      %v2046 = vor.u32 %v2045, %v2041
      %v2047 = vrot.slane %v2046, 4
      %v2049 = vshll.u32 %v1962, 16
      %v2051 = vrot.slane %v2049, 5
      %v2052 = vsel %vm910, %v2047, %v2051
      %v2054 = vshrl.u32 %v1963, 16
      %v2056 = vrot.slane %v2054, 4
      %v2057 = vshll.u32 %v1963, 16
      %v2059 = vrot.slane %v2057, 5
      %v2060 = vor.u32 %v2056, %v2059
      %v2061 = vrot.slane %v2060, 4
      %v2063 = vshll.u32 %v1964, 16
      %v2065 = vrot.slane %v2063, 5
      %v2066 = vsel %vm910, %v2061, %v2065
      %v2067 = vshrl.u32 %v1964, 16
      %v2069 = vrot.slane %v2067, 4
      %v2070 = vor.u32 %v2069, %v2065
      %v2071 = vrot.slane %v2070, 4
      %v2073 = vshll.u32 %v1965, 16
      %v2075 = vrot.slane %v2073, 5
      %v2076 = vsel %vm910, %v2071, %v2075
      %v2078 = vshrl.u32 %v1966, 16
      %v2080 = vrot.slane %v2078, 4
      %v2081 = vshll.u32 %v1966, 16
      %v2083 = vrot.slane %v2081, 5
      %v2084 = vor.u32 %v2080, %v2083
      %v2085 = vrot.slane %v2084, 4
      %v2087 = vshll.u32 %v1967, 16
      %v2089 = vrot.slane %v2087, 5
      %v2090 = vsel %vm910, %v2085, %v2089
      %v2091 = vshrl.u32 %v1967, 16
      %v2093 = vrot.slane %v2091, 4
      %v2094 = vor.u32 %v2093, %v2089
      %v2095 = vrot.slane %v2094, 4
      %v2097 = vshll.u32 %v1968, 16
      %v2099 = vrot.slane %v2097, 5
      %v2100 = vsel %vm910, %v2095, %v2099
      %v2102 = vshrl.u32 %v1969, 16
      %v2104 = vrot.slane %v2102, 4
      %v2105 = vshll.u32 %v1969, 16
      %v2107 = vrot.slane %v2105, 5
      %v2108 = vor.u32 %v2104, %v2107
      %v2109 = vrot.slane %v2108, 4
      %v2111 = vshll.u32 %v1970, 16
      %v2113 = vrot.slane %v2111, 5
      %v2114 = vsel %vm910, %v2109, %v2113
      %v2115 = vshrl.u32 %v1970, 16
      %v2117 = vrot.slane %v2115, 4
      %v2118 = vor.u32 %v2117, %v2113
      %v2119 = vrot.slane %v2118, 4
      %v2121 = vshll.u32 %v1971, 16
      %v2123 = vrot.slane %v2121, 5
      %v2124 = vsel %vm910, %v2119, %v2123
      %v2126 = vshrl.u32 %v1972, 16
      %v2128 = vrot.slane %v2126, 4
      %v2129 = vshll.u32 %v1972, 16
      %v2131 = vrot.slane %v2129, 5
      %v2132 = vor.u32 %v2128, %v2131
      %v2133 = vrot.slane %v2132, 4
      %v2135 = vshll.u32 %v1973, 16
      %v2137 = vrot.slane %v2135, 5
      %v2138 = vsel %vm910, %v2133, %v2137
      %v2139 = vshrl.u32 %v1973, 16
      %v2141 = vrot.slane %v2139, 4
      %v2142 = vor.u32 %v2141, %v2137
      %v2143 = vrot.slane %v2142, 4
      %v2145 = vshll.u32 %v1974, 16
      %v2147 = vrot.slane %v2145, 5
      %v2148 = vsel %vm910, %v2143, %v2147
      %v2150 = vshrl.u32 %v1975, 16
      %v2152 = vrot.slane %v2150, 4
      %v2153 = vshll.u32 %v1975, 16
      %v2155 = vrot.slane %v2153, 5
      %v2156 = vor.u32 %v2152, %v2155
      %v2157 = vrot.slane %v2156, 4
      %v2159 = vshll.u32 %v1976, 16
      %v2161 = vrot.slane %v2159, 5
      %v2162 = vsel %vm910, %v2157, %v2161
      %v2163 = vshrl.u32 %v1976, 16
      %v2165 = vrot.slane %v2163, 4
      %v2166 = vor.u32 %v2165, %v2161
      %v2167 = vrot.slane %v2166, 4
      %v2169 = vshll.u32 %v1977, 16
      %v2171 = vrot.slane %v2169, 5
      %v2172 = vsel %vm910, %v2167, %v2171
      %v2174 = vshrl.u32 %v1978, 16
      %v2176 = vrot.slane %v2174, 4
      %v2177 = vshll.u32 %v1978, 16
      %v2179 = vrot.slane %v2177, 5
      %v2180 = vor.u32 %v2176, %v2179
      %v2181 = vrot.slane %v2180, 4
      %v2183 = vshll.u32 %v1979, 16
      %v2185 = vrot.slane %v2183, 5
      %v2186 = vsel %vm910, %v2181, %v2185
      %v2187 = vshrl.u32 %v1979, 16
      %v2189 = vrot.slane %v2187, 4
      %v2190 = vor.u32 %v2189, %v2185
      %v2191 = vrot.slane %v2190, 4
      %v2193 = vshll.u32 %v1980, 16
      %v2195 = vrot.slane %v2193, 5
      %v2196 = vsel %vm910, %v2191, %v2195
      %v2198 = vshrl.u32 %v1981, 16
      %v2200 = vrot.slane %v2198, 4
      %v2201 = vshll.u32 %v1981, 16
      %v2203 = vrot.slane %v2201, 5
      %v2204 = vor.u32 %v2200, %v2203
      %v2205 = vrot.slane %v2204, 4
      %v2207 = vshll.u32 %v1982, 16
      %v2209 = vrot.slane %v2207, 5
      %v2210 = vsel %vm910, %v2205, %v2209
      %v2211 = vshrl.u32 %v1982, 16
      %v2213 = vrot.slane %v2211, 4
      %v2214 = vor.u32 %v2213, %v2209
      %v2215 = vrot.slane %v2214, 4
      %v2217 = vshll.u32 %v1983, 16
      %v2219 = vrot.slane %v2217, 5
      %v2220 = vsel %vm910, %v2215, %v2219
      %v2222 = vshrl.u32 %v1984, 16
      %v2224 = vrot.slane %v2222, 4
      %v2225 = vshll.u32 %v1984, 16
      %v2227 = vrot.slane %v2225, 5
      %v2228 = vor.u32 %v2224, %v2227
      %v2229 = vrot.slane %v2228, 4
      %v2231 = vshll.u32 %v1985, 16
      %v2233 = vrot.slane %v2231, 5
      %v2234 = vsel %vm910, %v2229, %v2233
      %v2235 = vshrl.u32 %v1985, 16
      %v2237 = vrot.slane %v2235, 4
      %v2238 = vor.u32 %v2237, %v2233
      %v2239 = vrot.slane %v2238, 4
      %v2241 = vshll.u32 %v1986, 16
      %v2243 = vrot.slane %v2241, 5
      %v2244 = vsel %vm910, %v2239, %v2243
      %v2246 = vshrl.u32 %v1987, 16
      %v2248 = vrot.slane %v2246, 4
      %v2249 = vshll.u32 %v1987, 16
      %v2251 = vrot.slane %v2249, 5
      %v2252 = vor.u32 %v2248, %v2251
      %v2253 = vrot.slane %v2252, 4
      %v2255 = vshll.u32 %v1988, 16
      %v2257 = vrot.slane %v2255, 5
      %v2258 = vsel %vm910, %v2253, %v2257
      %v2259 = vshrl.u32 %v1988, 16
      %v2261 = vrot.slane %v2259, 4
      %v2262 = vor.u32 %v2261, %v2257
      %v2263 = vrot.slane %v2262, 4
      %v2265 = vshll.u32 %v1989, 16
      %v2267 = vrot.slane %v2265, 5
      %v2268 = vsel %vm910, %v2263, %v2267
      %v2270 = vshrl.u32 %v1990, 16
      %v2272 = vrot.slane %v2270, 4
      %v2273 = vshll.u32 %v1990, 16
      %v2275 = vrot.slane %v2273, 5
      %v2276 = vor.u32 %v2272, %v2275
      %v2277 = vrot.slane %v2276, 4
      %v2279 = vshll.u32 %v1991, 16
      %v2281 = vrot.slane %v2279, 5
      %v2282 = vsel %vm910, %v2277, %v2281
      %v2283 = vshrl.u32 %v1991, 16
      %v2285 = vrot.slane %v2283, 4
      %v2286 = vor.u32 %v2285, %v2281
      %v2287 = vrot.slane %v2286, 4
      %v2289 = vshll.u32 %v1992, 16
      %v2291 = vrot.slane %v2289, 5
      %v2292 = vsel %vm910, %v2287, %v2291
      %v2294 = vshrl.u32 %v1993, 16
      %v2296 = vrot.slane %v2294, 4
      %v2297 = vshll.u32 %v1993, 16
      %v2299 = vrot.slane %v2297, 5
      %v2300 = vor.u32 %v2296, %v2299
      %v2301 = vrot.slane %v2300, 4
      %v2303 = vshll.u32 %v1994, 16
      %v2305 = vrot.slane %v2303, 5
      %v2306 = vsel %vm910, %v2301, %v2305
      %v2307 = vshrl.u32 %v1994, 16
      %v2309 = vrot.slane %v2307, 4
      %v2310 = vor.u32 %v2309, %v2305
      %v2311 = vrot.slane %v2310, 4
      %v2313 = vshll.u32 %v1995, 16
      %v2315 = vrot.slane %v2313, 5
      %v2316 = vsel %vm910, %v2311, %v2315
      %v2318 = vshrl.u32 %v1996, 16
      %v2320 = vrot.slane %v2318, 4
      %v2321 = vshll.u32 %v1996, 16
      %v2323 = vrot.slane %v2321, 5
      %v2324 = vor.u32 %v2320, %v2323
      %v2325 = vrot.slane %v2324, 4
      %v2327 = vshll.u32 %v1997, 16
      %v2329 = vrot.slane %v2327, 5
      %v2330 = vsel %vm910, %v2325, %v2329
      %v2331 = vshrl.u32 %v1997, 16
      %v2333 = vrot.slane %v2331, 4
      %v2334 = vor.u32 %v2333, %v2329
      %v2335 = vrot.slane %v2334, 4
      %v2337 = vshll.u32 %v1998, 16
      %v2339 = vrot.slane %v2337, 5
      %v2340 = vsel %vm910, %v2335, %v2339
      %v2342 = vshrl.u32 %v1999, 16
      %v2344 = vrot.slane %v2342, 4
      %v2345 = vshll.u32 %v1999, 16
      %v2347 = vrot.slane %v2345, 5
      %v2348 = vor.u32 %v2344, %v2347
      %v2349 = vrot.slane %v2348, 4
      %v2351 = vshll.u32 %v2000, 16
      %v2353 = vrot.slane %v2351, 5
      %v2354 = vsel %vm910, %v2349, %v2353
      %v2355 = vshrl.u32 %v2000, 16
      %v2357 = vrot.slane %v2355, 4
      %v2358 = vor.u32 %v2357, %v2353
      %v2359 = vrot.slane %v2358, 4
      %v2361 = vshll.u32 %v2001, 16
      %v2363 = vrot.slane %v2361, 5
      %v2364 = vsel %vm910, %v2359, %v2363
      %v2366 = vshrl.u32 %v2002, 16
      %v2368 = vrot.slane %v2366, 4
      %v2369 = vshll.u32 %v2002, 16
      %v2371 = vrot.slane %v2369, 5
      %v2372 = vor.u32 %v2368, %v2371
      %v2373 = vrot.slane %v2372, 4
      %v2375 = vshll.u32 %v2003, 16
      %v2377 = vrot.slane %v2375, 5
      %v2378 = vsel %vm910, %v2373, %v2377
      %v2379 = vshrl.u32 %v2003, 16
      %v2381 = vrot.slane %v2379, 4
      %v2382 = vor.u32 %v2381, %v2377
      %v2383 = vrot.slane %v2382, 4
      %v2385 = vshll.u32 %v2004, 16
      %v2387 = vrot.slane %v2385, 5
      %v2388 = vsel %vm910, %v2383, %v2387
      %2389 = vrot.lane.b32.xlu0 %v2018, 16
      %v2390 = vpop.permute.xlu0 %2389
      %2391 = vrot.lane.b32.xlu0 %v2028, 16
      %v2392 = vpop.permute.xlu0 %2391
      %2393 = vrot.lane.b32.xlu0 %v2042, 16
      %v2394 = vpop.permute.xlu0 %2393
      %2395 = vrot.lane.b32.xlu0 %v2052, 16
      %v2396 = vpop.permute.xlu0 %2395
      %2397 = vrot.lane.b32.xlu0 %v2066, 16
      %v2398 = vpop.permute.xlu0 %2397
      %2399 = vrot.lane.b32.xlu0 %v2076, 16
      %v2400 = vpop.permute.xlu0 %2399
      %2401 = vrot.lane.b32.xlu0 %v2090, 16
      %v2402 = vpop.permute.xlu0 %2401
      %2403 = vrot.lane.b32.xlu0 %v2100, 16
      %v2404 = vpop.permute.xlu0 %2403
      %2405 = vrot.lane.b32.xlu0 %v2114, 16
      %v2406 = vpop.permute.xlu0 %2405
      %2407 = vrot.lane.b32.xlu0 %v2124, 16
      %v2408 = vpop.permute.xlu0 %2407
      %2409 = vrot.lane.b32.xlu0 %v2138, 16
      %v2410 = vpop.permute.xlu0 %2409
      %2411 = vrot.lane.b32.xlu0 %v2148, 16
      %v2412 = vpop.permute.xlu0 %2411
      %2413 = vrot.lane.b32.xlu0 %v2162, 16
      %v2414 = vpop.permute.xlu0 %2413
      %2415 = vrot.lane.b32.xlu0 %v2172, 16
      %v2416 = vpop.permute.xlu0 %2415
      %2417 = vrot.lane.b32.xlu0 %v2186, 16
      %v2418 = vpop.permute.xlu0 %2417
      %2419 = vrot.lane.b32.xlu0 %v2196, 16
      %v2420 = vpop.permute.xlu0 %2419
      %2421 = vrot.lane.b32.xlu0 %v2210, 16
      %v2422 = vpop.permute.xlu0 %2421
      %2423 = vrot.lane.b32.xlu0 %v2220, 16
      %v2424 = vpop.permute.xlu0 %2423
      %2425 = vrot.lane.b32.xlu0 %v2234, 16
      %v2426 = vpop.permute.xlu0 %2425
      %2427 = vrot.lane.b32.xlu0 %v2244, 16
      %v2428 = vpop.permute.xlu0 %2427
      %2429 = vrot.lane.b32.xlu0 %v2258, 16
      %v2430 = vpop.permute.xlu0 %2429
      %2431 = vrot.lane.b32.xlu0 %v2268, 16
      %v2432 = vpop.permute.xlu0 %2431
      %2433 = vrot.lane.b32.xlu0 %v2282, 16
      %v2434 = vpop.permute.xlu0 %2433
      %2435 = vrot.lane.b32.xlu0 %v2292, 16
      %v2436 = vpop.permute.xlu0 %2435
      %2437 = vrot.lane.b32.xlu0 %v2306, 16
      %v2438 = vpop.permute.xlu0 %2437
      %2439 = vrot.lane.b32.xlu0 %v2316, 16
      %v2440 = vpop.permute.xlu0 %2439
      %2441 = vrot.lane.b32.xlu0 %v2330, 16
      %v2442 = vpop.permute.xlu0 %2441
      %2443 = vrot.lane.b32.xlu0 %v2340, 16
      %v2444 = vpop.permute.xlu0 %2443
      %2445 = vrot.lane.b32.xlu0 %v2354, 16
      %v2446 = vpop.permute.xlu0 %2445
      %2447 = vrot.lane.b32.xlu0 %v2364, 16
      %v2448 = vpop.permute.xlu0 %2447
      %2449 = vrot.lane.b32.xlu0 %v2378, 16
      %v2450 = vpop.permute.xlu0 %2449
      %2451 = vrot.lane.b32.xlu0 %v2388, 16
      %v2452 = vpop.permute.xlu0 %2451
      %vm2485 = vcmask 158848
      %2486 = vst.msk [vmem:[#allocation3] sm:$0xf] %vm2485, %v2390
      %2487 = vst.msk [vmem:[#allocation3 + $0x4] sm:$0xf] %vm2485, %v2392
      %2488 = vst.msk [vmem:[#allocation3 + $0x8] sm:$0xf] %vm2485, %v2394
      %2489 = vst.msk [vmem:[#allocation3 + $0xc] sm:$0xf] %vm2485, %v2396
      %2490 = vst.msk [vmem:[#allocation3 + $0x10] sm:$0xf] %vm2485, %v2398
      %2491 = vst.msk [vmem:[#allocation3 + $0x14] sm:$0xf] %vm2485, %v2400
      %2492 = vst.msk [vmem:[#allocation3 + $0x18] sm:$0xf] %vm2485, %v2402
      %2493 = vst.msk [vmem:[#allocation3 + $0x1c] sm:$0xf] %vm2485, %v2404
      %2494 = vst.msk [vmem:[#allocation3 + $0x20] sm:$0xf] %vm2485, %v2406
      %2495 = vst.msk [vmem:[#allocation3 + $0x24] sm:$0xf] %vm2485, %v2408
      %2496 = vst.msk [vmem:[#allocation3 + $0x28] sm:$0xf] %vm2485, %v2410
      %2497 = vst.msk [vmem:[#allocation3 + $0x2c] sm:$0xf] %vm2485, %v2412
      %2498 = vst.msk [vmem:[#allocation3 + $0x30] sm:$0xf] %vm2485, %v2414
      %2499 = vst.msk [vmem:[#allocation3 + $0x34] sm:$0xf] %vm2485, %v2416
      %2500 = vst.msk [vmem:[#allocation3 + $0x38] sm:$0xf] %vm2485, %v2418
      %2501 = vst.msk [vmem:[#allocation3 + $0x3c] sm:$0xf] %vm2485, %v2420
      %2502 = vst.msk [vmem:[#allocation3 + $0x40] sm:$0xf] %vm2485, %v2422
      %2503 = vst.msk [vmem:[#allocation3 + $0x44] sm:$0xf] %vm2485, %v2424
      %2504 = vst.msk [vmem:[#allocation3 + $0x48] sm:$0xf] %vm2485, %v2426
      %2505 = vst.msk [vmem:[#allocation3 + $0x4c] sm:$0xf] %vm2485, %v2428
      %2506 = vst.msk [vmem:[#allocation3 + $0x50] sm:$0xf] %vm2485, %v2430
      %2507 = vst.msk [vmem:[#allocation3 + $0x54] sm:$0xf] %vm2485, %v2432
      %2508 = vst.msk [vmem:[#allocation3 + $0x58] sm:$0xf] %vm2485, %v2434
      %2509 = vst.msk [vmem:[#allocation3 + $0x5c] sm:$0xf] %vm2485, %v2436
      %2510 = vst.msk [vmem:[#allocation3 + $0x60] sm:$0xf] %vm2485, %v2438
      %2511 = vst.msk [vmem:[#allocation3 + $0x64] sm:$0xf] %vm2485, %v2440
      %2512 = vst.msk [vmem:[#allocation3 + $0x68] sm:$0xf] %vm2485, %v2442
      %2513 = vst.msk [vmem:[#allocation3 + $0x6c] sm:$0xf] %vm2485, %v2444
      %2514 = vst.msk [vmem:[#allocation3 + $0x70] sm:$0xf] %vm2485, %v2446
      %2515 = vst.msk [vmem:[#allocation3 + $0x74] sm:$0xf] %vm2485, %v2448
      %2516 = vst.msk [vmem:[#allocation3 + $0x78] sm:$0xf] %vm2485, %v2450
      %2517 = vst.msk [vmem:[#allocation3 + $0x7c] sm:$0xf] %vm2485, %v2452
      %v2518 = vld [vmem:[%s648] sm:$0xe]
      %v2519 = vld [vmem:[%s648 + $0x4] sm:$0xf]
      %v2520 = vld [vmem:[%s648 + $0x8] sm:$0x1]
      %v2521 = vld [vmem:[%s648 + $0xc] sm:$0xe]
      %v2522 = vld [vmem:[%s648 + $0x10] sm:$0xf]
      %v2523 = vld [vmem:[%s648 + $0x14] sm:$0x1]
      %v2524 = vld [vmem:[%s648 + $0x18] sm:$0xe]
      %v2525 = vld [vmem:[%s648 + $0x1c] sm:$0xf]
      %v2526 = vld [vmem:[%s648 + $0x20] sm:$0x1]
      %v2527 = vld [vmem:[%s648 + $0x24] sm:$0xe]
      %v2528 = vld [vmem:[%s648 + $0x28] sm:$0xf]
      %v2529 = vld [vmem:[%s648 + $0x2c] sm:$0x1]
      %v2530 = vld [vmem:[%s648 + $0x30] sm:$0xe]
      %v2531 = vld [vmem:[%s648 + $0x34] sm:$0xf]
      %v2532 = vld [vmem:[%s648 + $0x38] sm:$0x1]
      %v2533 = vld [vmem:[%s648 + $0x3c] sm:$0xe]
      %v2534 = vld [vmem:[%s648 + $0x40] sm:$0xf]
      %v2535 = vld [vmem:[%s648 + $0x44] sm:$0x1]
      %v2536 = vld [vmem:[%s648 + $0x48] sm:$0xe]
      %v2537 = vld [vmem:[%s648 + $0x4c] sm:$0xf]
      %v2538 = vld [vmem:[%s648 + $0x50] sm:$0x1]
      %v2539 = vld [vmem:[%s648 + $0x54] sm:$0xe]
      %v2540 = vld [vmem:[%s648 + $0x58] sm:$0xf]
      %v2541 = vld [vmem:[%s648 + $0x5c] sm:$0x1]
      %v2542 = vld [vmem:[%s648 + $0x60] sm:$0xe]
      %v2543 = vld [vmem:[%s648 + $0x64] sm:$0xf]
      %v2544 = vld [vmem:[%s648 + $0x68] sm:$0x1]
      %v2545 = vld [vmem:[%s648 + $0x6c] sm:$0xe]
      %v2546 = vld [vmem:[%s648 + $0x70] sm:$0xf]
      %v2547 = vld [vmem:[%s648 + $0x74] sm:$0x1]
      %v2548 = vld [vmem:[%s648 + $0x78] sm:$0xe]
      %v2549 = vld [vmem:[%s648 + $0x7c] sm:$0xf]
      %v2550 = vld [vmem:[%s648 + $0x80] sm:$0x1]
      %v2551 = vld [vmem:[%s648 + $0x84] sm:$0xe]
      %v2552 = vld [vmem:[%s648 + $0x88] sm:$0xf]
      %v2553 = vld [vmem:[%s648 + $0x8c] sm:$0x1]
      %v2554 = vld [vmem:[%s648 + $0x90] sm:$0xe]
      %v2555 = vld [vmem:[%s648 + $0x94] sm:$0xf]
      %v2556 = vld [vmem:[%s648 + $0x98] sm:$0x1]
      %v2557 = vld [vmem:[%s648 + $0x9c] sm:$0xe]
      %v2558 = vld [vmem:[%s648 + $0xa0] sm:$0xf]
      %v2559 = vld [vmem:[%s648 + $0xa4] sm:$0x1]
      %v2560 = vld [vmem:[%s648 + $0xa8] sm:$0xe]
      %v2561 = vld [vmem:[%s648 + $0xac] sm:$0xf]
      %v2562 = vld [vmem:[%s648 + $0xb0] sm:$0x1]
      %v2563 = vld [vmem:[%s648 + $0xb4] sm:$0xe]
      %v2564 = vld [vmem:[%s648 + $0xb8] sm:$0xf]
      %v2565 = vld [vmem:[%s648 + $0xbc] sm:$0x1]
      %v2614 = vrot.slane %v2518, 5
      %v2615 = vrot.slane %v2614, 4
      %v2616 = vrot.slane %v2519, 5
      %v2617 = vsel %vm1522, %v2615, %v2616
      %v2618 = vrot.slane %v2616, 4
      %v2619 = vrot.slane %v2520, 5
      %v2620 = vsel %vm1522, %v2618, %v2619
      %v2621 = vrot.slane %v2521, 5
      %v2622 = vrot.slane %v2621, 4
      %v2623 = vrot.slane %v2522, 5
      %v2624 = vsel %vm1522, %v2622, %v2623
      %v2625 = vrot.slane %v2623, 4
      %v2626 = vrot.slane %v2523, 5
      %v2627 = vsel %vm1522, %v2625, %v2626
      %v2628 = vrot.slane %v2524, 5
      %v2629 = vrot.slane %v2628, 4
      %v2630 = vrot.slane %v2525, 5
      %v2631 = vsel %vm1522, %v2629, %v2630
      %v2632 = vrot.slane %v2630, 4
      %v2633 = vrot.slane %v2526, 5
      %v2634 = vsel %vm1522, %v2632, %v2633
      %v2635 = vrot.slane %v2527, 5
      %v2636 = vrot.slane %v2635, 4
      %v2637 = vrot.slane %v2528, 5
      %v2638 = vsel %vm1522, %v2636, %v2637
      %v2639 = vrot.slane %v2637, 4
      %v2640 = vrot.slane %v2529, 5
      %v2641 = vsel %vm1522, %v2639, %v2640
      %v2642 = vrot.slane %v2530, 5
      %v2643 = vrot.slane %v2642, 4
      %v2644 = vrot.slane %v2531, 5
      %v2645 = vsel %vm1522, %v2643, %v2644
      %v2646 = vrot.slane %v2644, 4
      %v2647 = vrot.slane %v2532, 5
      %v2648 = vsel %vm1522, %v2646, %v2647
      %v2649 = vrot.slane %v2533, 5
      %v2650 = vrot.slane %v2649, 4
      %v2651 = vrot.slane %v2534, 5
      %v2652 = vsel %vm1522, %v2650, %v2651
      %v2653 = vrot.slane %v2651, 4
      %v2654 = vrot.slane %v2535, 5
      %v2655 = vsel %vm1522, %v2653, %v2654
      %v2656 = vrot.slane %v2536, 5
      %v2657 = vrot.slane %v2656, 4
      %v2658 = vrot.slane %v2537, 5
      %v2659 = vsel %vm1522, %v2657, %v2658
      %v2660 = vrot.slane %v2658, 4
      %v2661 = vrot.slane %v2538, 5
      %v2662 = vsel %vm1522, %v2660, %v2661
      %v2663 = vrot.slane %v2539, 5
      %v2664 = vrot.slane %v2663, 4
      %v2665 = vrot.slane %v2540, 5
      %v2666 = vsel %vm1522, %v2664, %v2665
      %v2667 = vrot.slane %v2665, 4
      %v2668 = vrot.slane %v2541, 5
      %v2669 = vsel %vm1522, %v2667, %v2668
      %v2670 = vrot.slane %v2542, 5
      %v2671 = vrot.slane %v2670, 4
      %v2672 = vrot.slane %v2543, 5
      %v2673 = vsel %vm1522, %v2671, %v2672
      %v2674 = vrot.slane %v2672, 4
      %v2675 = vrot.slane %v2544, 5
      %v2676 = vsel %vm1522, %v2674, %v2675
      %v2677 = vrot.slane %v2545, 5
      %v2678 = vrot.slane %v2677, 4
      %v2679 = vrot.slane %v2546, 5
      %v2680 = vsel %vm1522, %v2678, %v2679
      %v2681 = vrot.slane %v2679, 4
      %v2682 = vrot.slane %v2547, 5
      %v2683 = vsel %vm1522, %v2681, %v2682
      %v2684 = vrot.slane %v2548, 5
      %v2685 = vrot.slane %v2684, 4
      %v2686 = vrot.slane %v2549, 5
      %v2687 = vsel %vm1522, %v2685, %v2686
      %v2688 = vrot.slane %v2686, 4
      %v2689 = vrot.slane %v2550, 5
      %v2690 = vsel %vm1522, %v2688, %v2689
      %v2691 = vrot.slane %v2551, 5
      %v2692 = vrot.slane %v2691, 4
      %v2693 = vrot.slane %v2552, 5
      %v2694 = vsel %vm1522, %v2692, %v2693
      %v2695 = vrot.slane %v2693, 4
      %v2696 = vrot.slane %v2553, 5
      %v2697 = vsel %vm1522, %v2695, %v2696
      %v2698 = vrot.slane %v2554, 5
      %v2699 = vrot.slane %v2698, 4
      %v2700 = vrot.slane %v2555, 5
      %v2701 = vsel %vm1522, %v2699, %v2700
      %v2702 = vrot.slane %v2700, 4
      %v2703 = vrot.slane %v2556, 5
      %v2704 = vsel %vm1522, %v2702, %v2703
      %v2705 = vrot.slane %v2557, 5
      %v2706 = vrot.slane %v2705, 4
      %v2707 = vrot.slane %v2558, 5
      %v2708 = vsel %vm1522, %v2706, %v2707
      %v2709 = vrot.slane %v2707, 4
      %v2710 = vrot.slane %v2559, 5
      %v2711 = vsel %vm1522, %v2709, %v2710
      %v2712 = vrot.slane %v2560, 5
      %v2713 = vrot.slane %v2712, 4
      %v2714 = vrot.slane %v2561, 5
      %v2715 = vsel %vm1522, %v2713, %v2714
      %v2716 = vrot.slane %v2714, 4
      %v2717 = vrot.slane %v2562, 5
      %v2718 = vsel %vm1522, %v2716, %v2717
      %v2719 = vrot.slane %v2563, 5
      %v2720 = vrot.slane %v2719, 4
      %v2721 = vrot.slane %v2564, 5
      %v2722 = vsel %vm1522, %v2720, %v2721
      %v2723 = vrot.slane %v2721, 4
      %v2724 = vrot.slane %v2565, 5
      %v2725 = vsel %vm1522, %v2723, %v2724
      %2726 = vrot.lane.b32.xlu0 %v2617, 20
      %v2727 = vpop.permute.xlu0 %2726
      %2728 = vrot.lane.b32.xlu0 %v2620, 20
      %v2729 = vpop.permute.xlu0 %2728
      %2730 = vrot.lane.b32.xlu0 %v2624, 20
      %v2731 = vpop.permute.xlu0 %2730
      %2732 = vrot.lane.b32.xlu0 %v2627, 20
      %v2733 = vpop.permute.xlu0 %2732
      %2734 = vrot.lane.b32.xlu0 %v2631, 20
      %v2735 = vpop.permute.xlu0 %2734
      %2736 = vrot.lane.b32.xlu0 %v2634, 20
      %v2737 = vpop.permute.xlu0 %2736
      %2738 = vrot.lane.b32.xlu0 %v2638, 20
      %v2739 = vpop.permute.xlu0 %2738
      %2740 = vrot.lane.b32.xlu0 %v2641, 20
      %v2741 = vpop.permute.xlu0 %2740
      %2742 = vrot.lane.b32.xlu0 %v2645, 20
      %v2743 = vpop.permute.xlu0 %2742
      %2744 = vrot.lane.b32.xlu0 %v2648, 20
      %v2745 = vpop.permute.xlu0 %2744
      %2746 = vrot.lane.b32.xlu0 %v2652, 20
      %v2747 = vpop.permute.xlu0 %2746
      %2748 = vrot.lane.b32.xlu0 %v2655, 20
      %v2749 = vpop.permute.xlu0 %2748
      %2750 = vrot.lane.b32.xlu0 %v2659, 20
      %v2751 = vpop.permute.xlu0 %2750
      %2752 = vrot.lane.b32.xlu0 %v2662, 20
      %v2753 = vpop.permute.xlu0 %2752
      %2754 = vrot.lane.b32.xlu0 %v2666, 20
      %v2755 = vpop.permute.xlu0 %2754
      %2756 = vrot.lane.b32.xlu0 %v2669, 20
      %v2757 = vpop.permute.xlu0 %2756
      %2758 = vrot.lane.b32.xlu0 %v2673, 20
      %v2759 = vpop.permute.xlu0 %2758
      %2760 = vrot.lane.b32.xlu0 %v2676, 20
      %v2761 = vpop.permute.xlu0 %2760
      %2762 = vrot.lane.b32.xlu0 %v2680, 20
      %v2763 = vpop.permute.xlu0 %2762
      %2764 = vrot.lane.b32.xlu0 %v2683, 20
      %v2765 = vpop.permute.xlu0 %2764
      %2766 = vrot.lane.b32.xlu0 %v2687, 20
      %v2767 = vpop.permute.xlu0 %2766
      %2768 = vrot.lane.b32.xlu0 %v2690, 20
      %v2769 = vpop.permute.xlu0 %2768
      %2770 = vrot.lane.b32.xlu0 %v2694, 20
      %v2771 = vpop.permute.xlu0 %2770
      %2772 = vrot.lane.b32.xlu0 %v2697, 20
      %v2773 = vpop.permute.xlu0 %2772
      %2774 = vrot.lane.b32.xlu0 %v2701, 20
      %v2775 = vpop.permute.xlu0 %2774
      %2776 = vrot.lane.b32.xlu0 %v2704, 20
      %v2777 = vpop.permute.xlu0 %2776
      %2778 = vrot.lane.b32.xlu0 %v2708, 20
      %v2779 = vpop.permute.xlu0 %2778
      %2780 = vrot.lane.b32.xlu0 %v2711, 20
      %v2781 = vpop.permute.xlu0 %2780
      %2782 = vrot.lane.b32.xlu0 %v2715, 20
      %v2783 = vpop.permute.xlu0 %2782
      %2784 = vrot.lane.b32.xlu0 %v2718, 20
      %v2785 = vpop.permute.xlu0 %2784
      %2786 = vrot.lane.b32.xlu0 %v2722, 20
      %v2787 = vpop.permute.xlu0 %2786
      %2788 = vrot.lane.b32.xlu0 %v2725, 20
      %v2789 = vpop.permute.xlu0 %2788
      %vm2822 = vcmask 191648
      %2823 = vst.msk [vmem:[#allocation3] sm:$0xf] %vm2822, %v2727
      %2824 = vst.msk [vmem:[#allocation3 + $0x4] sm:$0xf] %vm2822, %v2729
      %2825 = vst.msk [vmem:[#allocation3 + $0x8] sm:$0xf] %vm2822, %v2731
      %2826 = vst.msk [vmem:[#allocation3 + $0xc] sm:$0xf] %vm2822, %v2733
      %2827 = vst.msk [vmem:[#allocation3 + $0x10] sm:$0xf] %vm2822, %v2735
      %2828 = vst.msk [vmem:[#allocation3 + $0x14] sm:$0xf] %vm2822, %v2737
      %2829 = vst.msk [vmem:[#allocation3 + $0x18] sm:$0xf] %vm2822, %v2739
      %2830 = vst.msk [vmem:[#allocation3 + $0x1c] sm:$0xf] %vm2822, %v2741
      %2831 = vst.msk [vmem:[#allocation3 + $0x20] sm:$0xf] %vm2822, %v2743
      %2832 = vst.msk [vmem:[#allocation3 + $0x24] sm:$0xf] %vm2822, %v2745
      %2833 = vst.msk [vmem:[#allocation3 + $0x28] sm:$0xf] %vm2822, %v2747
      %2834 = vst.msk [vmem:[#allocation3 + $0x2c] sm:$0xf] %vm2822, %v2749
      %2835 = vst.msk [vmem:[#allocation3 + $0x30] sm:$0xf] %vm2822, %v2751
      %2836 = vst.msk [vmem:[#allocation3 + $0x34] sm:$0xf] %vm2822, %v2753
      %2837 = vst.msk [vmem:[#allocation3 + $0x38] sm:$0xf] %vm2822, %v2755
      %2838 = vst.msk [vmem:[#allocation3 + $0x3c] sm:$0xf] %vm2822, %v2757
      %2839 = vst.msk [vmem:[#allocation3 + $0x40] sm:$0xf] %vm2822, %v2759
      %2840 = vst.msk [vmem:[#allocation3 + $0x44] sm:$0xf] %vm2822, %v2761
      %2841 = vst.msk [vmem:[#allocation3 + $0x48] sm:$0xf] %vm2822, %v2763
      %2842 = vst.msk [vmem:[#allocation3 + $0x4c] sm:$0xf] %vm2822, %v2765
      %2843 = vst.msk [vmem:[#allocation3 + $0x50] sm:$0xf] %vm2822, %v2767
      %2844 = vst.msk [vmem:[#allocation3 + $0x54] sm:$0xf] %vm2822, %v2769
      %2845 = vst.msk [vmem:[#allocation3 + $0x58] sm:$0xf] %vm2822, %v2771
      %2846 = vst.msk [vmem:[#allocation3 + $0x5c] sm:$0xf] %vm2822, %v2773
      %2847 = vst.msk [vmem:[#allocation3 + $0x60] sm:$0xf] %vm2822, %v2775
      %2848 = vst.msk [vmem:[#allocation3 + $0x64] sm:$0xf] %vm2822, %v2777
      %2849 = vst.msk [vmem:[#allocation3 + $0x68] sm:$0xf] %vm2822, %v2779
      %2850 = vst.msk [vmem:[#allocation3 + $0x6c] sm:$0xf] %vm2822, %v2781
      %2851 = vst.msk [vmem:[#allocation3 + $0x70] sm:$0xf] %vm2822, %v2783
      %2852 = vst.msk [vmem:[#allocation3 + $0x74] sm:$0xf] %vm2822, %v2785
      %2853 = vst.msk [vmem:[#allocation3 + $0x78] sm:$0xf] %vm2822, %v2787
      %2854 = vst.msk [vmem:[#allocation3 + $0x7c] sm:$0xf] %vm2822, %v2789
      %s2855 = scalar_lea.vmem [#allocation2], 24
      %v2856 = vld [vmem:[%s2855] sm:$0xf]
      %v2857 = vld [vmem:[%s2855 + $0x4] sm:$0xf]
      %v2858 = vld [vmem:[%s2855 + $0xc] sm:$0xf]
      %v2859 = vld [vmem:[%s2855 + $0x10] sm:$0xf]
      %v2860 = vld [vmem:[%s2855 + $0x18] sm:$0xf]
      %v2861 = vld [vmem:[%s2855 + $0x1c] sm:$0xf]
      %v2862 = vld [vmem:[%s2855 + $0x24] sm:$0xf]
      %v2863 = vld [vmem:[%s2855 + $0x28] sm:$0xf]
      %v2864 = vld [vmem:[%s2855 + $0x30] sm:$0xf]
      %v2865 = vld [vmem:[%s2855 + $0x34] sm:$0xf]
      %v2866 = vld [vmem:[%s2855 + $0x3c] sm:$0xf]
      %v2867 = vld [vmem:[%s2855 + $0x40] sm:$0xf]
      %v2868 = vld [vmem:[%s2855 + $0x48] sm:$0xf]
      %v2869 = vld [vmem:[%s2855 + $0x4c] sm:$0xf]
      %v2870 = vld [vmem:[%s2855 + $0x54] sm:$0xf]
      %v2871 = vld [vmem:[%s2855 + $0x58] sm:$0xf]
      %v2872 = vld [vmem:[%s2855 + $0x60] sm:$0xf]
      %v2873 = vld [vmem:[%s2855 + $0x64] sm:$0xf]
      %v2874 = vld [vmem:[%s2855 + $0x6c] sm:$0xf]
      %v2875 = vld [vmem:[%s2855 + $0x70] sm:$0xf]
      %v2876 = vld [vmem:[%s2855 + $0x78] sm:$0xf]
      %v2877 = vld [vmem:[%s2855 + $0x7c] sm:$0xf]
      %v2878 = vld [vmem:[%s2855 + $0x84] sm:$0xf]
      %v2879 = vld [vmem:[%s2855 + $0x88] sm:$0xf]
      %v2880 = vld [vmem:[%s2855 + $0x90] sm:$0xf]
      %v2881 = vld [vmem:[%s2855 + $0x94] sm:$0xf]
      %v2882 = vld [vmem:[%s2855 + $0x9c] sm:$0xf]
      %v2883 = vld [vmem:[%s2855 + $0xa0] sm:$0xf]
      %v2884 = vld [vmem:[%s2855 + $0xa8] sm:$0xf]
      %v2885 = vld [vmem:[%s2855 + $0xac] sm:$0xf]
      %v2886 = vld [vmem:[%s2855 + $0xb4] sm:$0xf]
      %v2887 = vld [vmem:[%s2855 + $0xb8] sm:$0xf]
      %2920 = vrot.lane.b32.xlu0 %v2856, 24
      %v2921 = vpop.permute.xlu0 %2920
      %2922 = vrot.lane.b32.xlu0 %v2857, 24
      %v2923 = vpop.permute.xlu0 %2922
      %2924 = vrot.lane.b32.xlu0 %v2858, 24
      %v2925 = vpop.permute.xlu0 %2924
      %2926 = vrot.lane.b32.xlu0 %v2859, 24
      %v2927 = vpop.permute.xlu0 %2926
      %2928 = vrot.lane.b32.xlu0 %v2860, 24
      %v2929 = vpop.permute.xlu0 %2928
      %2930 = vrot.lane.b32.xlu0 %v2861, 24
      %v2931 = vpop.permute.xlu0 %2930
      %2932 = vrot.lane.b32.xlu0 %v2862, 24
      %v2933 = vpop.permute.xlu0 %2932
      %2934 = vrot.lane.b32.xlu0 %v2863, 24
      %v2935 = vpop.permute.xlu0 %2934
      %2936 = vrot.lane.b32.xlu0 %v2864, 24
      %v2937 = vpop.permute.xlu0 %2936
      %2938 = vrot.lane.b32.xlu0 %v2865, 24
      %v2939 = vpop.permute.xlu0 %2938
      %2940 = vrot.lane.b32.xlu0 %v2866, 24
      %v2941 = vpop.permute.xlu0 %2940
      %2942 = vrot.lane.b32.xlu0 %v2867, 24
      %v2943 = vpop.permute.xlu0 %2942
      %2944 = vrot.lane.b32.xlu0 %v2868, 24
      %v2945 = vpop.permute.xlu0 %2944
      %2946 = vrot.lane.b32.xlu0 %v2869, 24
      %v2947 = vpop.permute.xlu0 %2946
      %2948 = vrot.lane.b32.xlu0 %v2870, 24
      %v2949 = vpop.permute.xlu0 %2948
      %2950 = vrot.lane.b32.xlu0 %v2871, 24
      %v2951 = vpop.permute.xlu0 %2950
      %2952 = vrot.lane.b32.xlu0 %v2872, 24
      %v2953 = vpop.permute.xlu0 %2952
      %2954 = vrot.lane.b32.xlu0 %v2873, 24
      %v2955 = vpop.permute.xlu0 %2954
      %2956 = vrot.lane.b32.xlu0 %v2874, 24
      %v2957 = vpop.permute.xlu0 %2956
      %2958 = vrot.lane.b32.xlu0 %v2875, 24
      %v2959 = vpop.permute.xlu0 %2958
      %2960 = vrot.lane.b32.xlu0 %v2876, 24
      %v2961 = vpop.permute.xlu0 %2960
      %2962 = vrot.lane.b32.xlu0 %v2877, 24
      %v2963 = vpop.permute.xlu0 %2962
      %2964 = vrot.lane.b32.xlu0 %v2878, 24
      %v2965 = vpop.permute.xlu0 %2964
      %2966 = vrot.lane.b32.xlu0 %v2879, 24
      %v2967 = vpop.permute.xlu0 %2966
      %2968 = vrot.lane.b32.xlu0 %v2880, 24
      %v2969 = vpop.permute.xlu0 %2968
      %2970 = vrot.lane.b32.xlu0 %v2881, 24
      %v2971 = vpop.permute.xlu0 %2970
      %2972 = vrot.lane.b32.xlu0 %v2882, 24
      %v2973 = vpop.permute.xlu0 %2972
      %2974 = vrot.lane.b32.xlu0 %v2883, 24
      %v2975 = vpop.permute.xlu0 %2974
      %2976 = vrot.lane.b32.xlu0 %v2884, 24
      %v2977 = vpop.permute.xlu0 %2976
      %2978 = vrot.lane.b32.xlu0 %v2885, 24
      %v2979 = vpop.permute.xlu0 %2978
      %2980 = vrot.lane.b32.xlu0 %v2886, 24
      %v2981 = vpop.permute.xlu0 %2980
      %2982 = vrot.lane.b32.xlu0 %v2887, 24
      %v2983 = vpop.permute.xlu0 %2982
      %vm3016 = vcmask 224448
      %3017 = vst.msk [vmem:[#allocation3] sm:$0xf] %vm3016, %v2921
      %3018 = vst.msk [vmem:[#allocation3 + $0x4] sm:$0xf] %vm3016, %v2923
      %3019 = vst.msk [vmem:[#allocation3 + $0x8] sm:$0xf] %vm3016, %v2925
      %3020 = vst.msk [vmem:[#allocation3 + $0xc] sm:$0xf] %vm3016, %v2927
      %3021 = vst.msk [vmem:[#allocation3 + $0x10] sm:$0xf] %vm3016, %v2929
      %3022 = vst.msk [vmem:[#allocation3 + $0x14] sm:$0xf] %vm3016, %v2931
      %3023 = vst.msk [vmem:[#allocation3 + $0x18] sm:$0xf] %vm3016, %v2933
      %3024 = vst.msk [vmem:[#allocation3 + $0x1c] sm:$0xf] %vm3016, %v2935
      %3025 = vst.msk [vmem:[#allocation3 + $0x20] sm:$0xf] %vm3016, %v2937
      %3026 = vst.msk [vmem:[#allocation3 + $0x24] sm:$0xf] %vm3016, %v2939
      %3027 = vst.msk [vmem:[#allocation3 + $0x28] sm:$0xf] %vm3016, %v2941
      %3028 = vst.msk [vmem:[#allocation3 + $0x2c] sm:$0xf] %vm3016, %v2943
      %3029 = vst.msk [vmem:[#allocation3 + $0x30] sm:$0xf] %vm3016, %v2945
      %3030 = vst.msk [vmem:[#allocation3 + $0x34] sm:$0xf] %vm3016, %v2947
      %3031 = vst.msk [vmem:[#allocation3 + $0x38] sm:$0xf] %vm3016, %v2949
      %3032 = vst.msk [vmem:[#allocation3 + $0x3c] sm:$0xf] %vm3016, %v2951
      %3033 = vst.msk [vmem:[#allocation3 + $0x40] sm:$0xf] %vm3016, %v2953
      %3034 = vst.msk [vmem:[#allocation3 + $0x44] sm:$0xf] %vm3016, %v2955
      %3035 = vst.msk [vmem:[#allocation3 + $0x48] sm:$0xf] %vm3016, %v2957
      %3036 = vst.msk [vmem:[#allocation3 + $0x4c] sm:$0xf] %vm3016, %v2959
      %3037 = vst.msk [vmem:[#allocation3 + $0x50] sm:$0xf] %vm3016, %v2961
      %3038 = vst.msk [vmem:[#allocation3 + $0x54] sm:$0xf] %vm3016, %v2963
      %3039 = vst.msk [vmem:[#allocation3 + $0x58] sm:$0xf] %vm3016, %v2965
      %3040 = vst.msk [vmem:[#allocation3 + $0x5c] sm:$0xf] %vm3016, %v2967
      %3041 = vst.msk [vmem:[#allocation3 + $0x60] sm:$0xf] %vm3016, %v2969
      %3042 = vst.msk [vmem:[#allocation3 + $0x64] sm:$0xf] %vm3016, %v2971
      %3043 = vst.msk [vmem:[#allocation3 + $0x68] sm:$0xf] %vm3016, %v2973
      %3044 = vst.msk [vmem:[#allocation3 + $0x6c] sm:$0xf] %vm3016, %v2975
      %3045 = vst.msk [vmem:[#allocation3 + $0x70] sm:$0xf] %vm3016, %v2977
      %3046 = vst.msk [vmem:[#allocation3 + $0x74] sm:$0xf] %vm3016, %v2979
      %3047 = vst.msk [vmem:[#allocation3 + $0x78] sm:$0xf] %vm3016, %v2981
      %3048 = vst.msk [vmem:[#allocation3 + $0x7c] sm:$0xf] %vm3016, %v2983
      %v3049 = vld [vmem:[%s2855] sm:$0xf]
      %v3050 = vld [vmem:[%s2855 + $0x4] sm:$0xf]
      %v3051 = vld [vmem:[%s2855 + $0x8] sm:$0x1]
      %v3052 = vld [vmem:[%s2855 + $0xc] sm:$0xf]
      %v3053 = vld [vmem:[%s2855 + $0x10] sm:$0xf]
      %v3054 = vld [vmem:[%s2855 + $0x14] sm:$0x1]
      %v3055 = vld [vmem:[%s2855 + $0x18] sm:$0xf]
      %v3056 = vld [vmem:[%s2855 + $0x1c] sm:$0xf]
      %v3057 = vld [vmem:[%s2855 + $0x20] sm:$0x1]
      %v3058 = vld [vmem:[%s2855 + $0x24] sm:$0xf]
      %v3059 = vld [vmem:[%s2855 + $0x28] sm:$0xf]
      %v3060 = vld [vmem:[%s2855 + $0x2c] sm:$0x1]
      %v3061 = vld [vmem:[%s2855 + $0x30] sm:$0xf]
      %v3062 = vld [vmem:[%s2855 + $0x34] sm:$0xf]
      %v3063 = vld [vmem:[%s2855 + $0x38] sm:$0x1]
      %v3064 = vld [vmem:[%s2855 + $0x3c] sm:$0xf]
      %v3065 = vld [vmem:[%s2855 + $0x40] sm:$0xf]
      %v3066 = vld [vmem:[%s2855 + $0x44] sm:$0x1]
      %v3067 = vld [vmem:[%s2855 + $0x48] sm:$0xf]
      %v3068 = vld [vmem:[%s2855 + $0x4c] sm:$0xf]
      %v3069 = vld [vmem:[%s2855 + $0x50] sm:$0x1]
      %v3070 = vld [vmem:[%s2855 + $0x54] sm:$0xf]
      %v3071 = vld [vmem:[%s2855 + $0x58] sm:$0xf]
      %v3072 = vld [vmem:[%s2855 + $0x5c] sm:$0x1]
      %v3073 = vld [vmem:[%s2855 + $0x60] sm:$0xf]
      %v3074 = vld [vmem:[%s2855 + $0x64] sm:$0xf]
      %v3075 = vld [vmem:[%s2855 + $0x68] sm:$0x1]
      %v3076 = vld [vmem:[%s2855 + $0x6c] sm:$0xf]
      %v3077 = vld [vmem:[%s2855 + $0x70] sm:$0xf]
      %v3078 = vld [vmem:[%s2855 + $0x74] sm:$0x1]
      %v3079 = vld [vmem:[%s2855 + $0x78] sm:$0xf]
      %v3080 = vld [vmem:[%s2855 + $0x7c] sm:$0xf]
      %v3081 = vld [vmem:[%s2855 + $0x80] sm:$0x1]
      %v3082 = vld [vmem:[%s2855 + $0x84] sm:$0xf]
      %v3083 = vld [vmem:[%s2855 + $0x88] sm:$0xf]
      %v3084 = vld [vmem:[%s2855 + $0x8c] sm:$0x1]
      %v3085 = vld [vmem:[%s2855 + $0x90] sm:$0xf]
      %v3086 = vld [vmem:[%s2855 + $0x94] sm:$0xf]
      %v3087 = vld [vmem:[%s2855 + $0x98] sm:$0x1]
      %v3088 = vld [vmem:[%s2855 + $0x9c] sm:$0xf]
      %v3089 = vld [vmem:[%s2855 + $0xa0] sm:$0xf]
      %v3090 = vld [vmem:[%s2855 + $0xa4] sm:$0x1]
      %v3091 = vld [vmem:[%s2855 + $0xa8] sm:$0xf]
      %v3092 = vld [vmem:[%s2855 + $0xac] sm:$0xf]
      %v3093 = vld [vmem:[%s2855 + $0xb0] sm:$0x1]
      %v3094 = vld [vmem:[%s2855 + $0xb4] sm:$0xf]
      %v3095 = vld [vmem:[%s2855 + $0xb8] sm:$0xf]
      %v3096 = vld [vmem:[%s2855 + $0xbc] sm:$0x1]
      %v3098 = vshrl.u32 %v3049, 16
      %v3100 = vrot.slane %v3098, 4
      %v3101 = vshll.u32 %v3049, 16
      %v3103 = vrot.slane %v3101, 5
      %v3104 = vor.u32 %v3100, %v3103
      %v3105 = vrot.slane %v3104, 4
      %v3107 = vshll.u32 %v3050, 16
      %v3109 = vrot.slane %v3107, 5
      %v3110 = vsel %vm910, %v3105, %v3109
      %v3111 = vshrl.u32 %v3050, 16
      %v3113 = vrot.slane %v3111, 4
      %v3114 = vor.u32 %v3113, %v3109
      %v3115 = vrot.slane %v3114, 4
      %v3117 = vshll.u32 %v3051, 16
      %v3119 = vrot.slane %v3117, 5
      %v3120 = vsel %vm910, %v3115, %v3119
      %v3122 = vshrl.u32 %v3052, 16
      %v3124 = vrot.slane %v3122, 4
      %v3125 = vshll.u32 %v3052, 16
      %v3127 = vrot.slane %v3125, 5
      %v3128 = vor.u32 %v3124, %v3127
      %v3129 = vrot.slane %v3128, 4
      %v3131 = vshll.u32 %v3053, 16
      %v3133 = vrot.slane %v3131, 5
      %v3134 = vsel %vm910, %v3129, %v3133
      %v3135 = vshrl.u32 %v3053, 16
      %v3137 = vrot.slane %v3135, 4
      %v3138 = vor.u32 %v3137, %v3133
      %v3139 = vrot.slane %v3138, 4
      %v3141 = vshll.u32 %v3054, 16
      %v3143 = vrot.slane %v3141, 5
      %v3144 = vsel %vm910, %v3139, %v3143
      %v3146 = vshrl.u32 %v3055, 16
      %v3148 = vrot.slane %v3146, 4
      %v3149 = vshll.u32 %v3055, 16
      %v3151 = vrot.slane %v3149, 5
      %v3152 = vor.u32 %v3148, %v3151
      %v3153 = vrot.slane %v3152, 4
      %v3155 = vshll.u32 %v3056, 16
      %v3157 = vrot.slane %v3155, 5
      %v3158 = vsel %vm910, %v3153, %v3157
      %v3159 = vshrl.u32 %v3056, 16
      %v3161 = vrot.slane %v3159, 4
      %v3162 = vor.u32 %v3161, %v3157
      %v3163 = vrot.slane %v3162, 4
      %v3165 = vshll.u32 %v3057, 16
      %v3167 = vrot.slane %v3165, 5
      %v3168 = vsel %vm910, %v3163, %v3167
      %v3170 = vshrl.u32 %v3058, 16
      %v3172 = vrot.slane %v3170, 4
      %v3173 = vshll.u32 %v3058, 16
      %v3175 = vrot.slane %v3173, 5
      %v3176 = vor.u32 %v3172, %v3175
      %v3177 = vrot.slane %v3176, 4
      %v3179 = vshll.u32 %v3059, 16
      %v3181 = vrot.slane %v3179, 5
      %v3182 = vsel %vm910, %v3177, %v3181
      %v3183 = vshrl.u32 %v3059, 16
      %v3185 = vrot.slane %v3183, 4
      %v3186 = vor.u32 %v3185, %v3181
      %v3187 = vrot.slane %v3186, 4
      %v3189 = vshll.u32 %v3060, 16
      %v3191 = vrot.slane %v3189, 5
      %v3192 = vsel %vm910, %v3187, %v3191
      %v3194 = vshrl.u32 %v3061, 16
      %v3196 = vrot.slane %v3194, 4
      %v3197 = vshll.u32 %v3061, 16
      %v3199 = vrot.slane %v3197, 5
      %v3200 = vor.u32 %v3196, %v3199
      %v3201 = vrot.slane %v3200, 4
      %v3203 = vshll.u32 %v3062, 16
      %v3205 = vrot.slane %v3203, 5
      %v3206 = vsel %vm910, %v3201, %v3205
      %v3207 = vshrl.u32 %v3062, 16
      %v3209 = vrot.slane %v3207, 4
      %v3210 = vor.u32 %v3209, %v3205
      %v3211 = vrot.slane %v3210, 4
      %v3213 = vshll.u32 %v3063, 16
      %v3215 = vrot.slane %v3213, 5
      %v3216 = vsel %vm910, %v3211, %v3215
      %v3218 = vshrl.u32 %v3064, 16
      %v3220 = vrot.slane %v3218, 4
      %v3221 = vshll.u32 %v3064, 16
      %v3223 = vrot.slane %v3221, 5
      %v3224 = vor.u32 %v3220, %v3223
      %v3225 = vrot.slane %v3224, 4
      %v3227 = vshll.u32 %v3065, 16
      %v3229 = vrot.slane %v3227, 5
      %v3230 = vsel %vm910, %v3225, %v3229
      %v3231 = vshrl.u32 %v3065, 16
      %v3233 = vrot.slane %v3231, 4
      %v3234 = vor.u32 %v3233, %v3229
      %v3235 = vrot.slane %v3234, 4
      %v3237 = vshll.u32 %v3066, 16
      %v3239 = vrot.slane %v3237, 5
      %v3240 = vsel %vm910, %v3235, %v3239
      %v3242 = vshrl.u32 %v3067, 16
      %v3244 = vrot.slane %v3242, 4
      %v3245 = vshll.u32 %v3067, 16
      %v3247 = vrot.slane %v3245, 5
      %v3248 = vor.u32 %v3244, %v3247
      %v3249 = vrot.slane %v3248, 4
      %v3251 = vshll.u32 %v3068, 16
      %v3253 = vrot.slane %v3251, 5
      %v3254 = vsel %vm910, %v3249, %v3253
      %v3255 = vshrl.u32 %v3068, 16
      %v3257 = vrot.slane %v3255, 4
      %v3258 = vor.u32 %v3257, %v3253
      %v3259 = vrot.slane %v3258, 4
      %v3261 = vshll.u32 %v3069, 16
      %v3263 = vrot.slane %v3261, 5
      %v3264 = vsel %vm910, %v3259, %v3263
      %v3266 = vshrl.u32 %v3070, 16
      %v3268 = vrot.slane %v3266, 4
      %v3269 = vshll.u32 %v3070, 16
      %v3271 = vrot.slane %v3269, 5
      %v3272 = vor.u32 %v3268, %v3271
      %v3273 = vrot.slane %v3272, 4
      %v3275 = vshll.u32 %v3071, 16
      %v3277 = vrot.slane %v3275, 5
      %v3278 = vsel %vm910, %v3273, %v3277
      %v3279 = vshrl.u32 %v3071, 16
      %v3281 = vrot.slane %v3279, 4
      %v3282 = vor.u32 %v3281, %v3277
      %v3283 = vrot.slane %v3282, 4
      %v3285 = vshll.u32 %v3072, 16
      %v3287 = vrot.slane %v3285, 5
      %v3288 = vsel %vm910, %v3283, %v3287
      %v3290 = vshrl.u32 %v3073, 16
      %v3292 = vrot.slane %v3290, 4
      %v3293 = vshll.u32 %v3073, 16
      %v3295 = vrot.slane %v3293, 5
      %v3296 = vor.u32 %v3292, %v3295
      %v3297 = vrot.slane %v3296, 4
      %v3299 = vshll.u32 %v3074, 16
      %v3301 = vrot.slane %v3299, 5
      %v3302 = vsel %vm910, %v3297, %v3301
      %v3303 = vshrl.u32 %v3074, 16
      %v3305 = vrot.slane %v3303, 4
      %v3306 = vor.u32 %v3305, %v3301
      %v3307 = vrot.slane %v3306, 4
      %v3309 = vshll.u32 %v3075, 16
      %v3311 = vrot.slane %v3309, 5
      %v3312 = vsel %vm910, %v3307, %v3311
      %v3314 = vshrl.u32 %v3076, 16
      %v3316 = vrot.slane %v3314, 4
      %v3317 = vshll.u32 %v3076, 16
      %v3319 = vrot.slane %v3317, 5
      %v3320 = vor.u32 %v3316, %v3319
      %v3321 = vrot.slane %v3320, 4
      %v3323 = vshll.u32 %v3077, 16
      %v3325 = vrot.slane %v3323, 5
      %v3326 = vsel %vm910, %v3321, %v3325
      %v3327 = vshrl.u32 %v3077, 16
      %v3329 = vrot.slane %v3327, 4
      %v3330 = vor.u32 %v3329, %v3325
      %v3331 = vrot.slane %v3330, 4
      %v3333 = vshll.u32 %v3078, 16
      %v3335 = vrot.slane %v3333, 5
      %v3336 = vsel %vm910, %v3331, %v3335
      %v3338 = vshrl.u32 %v3079, 16
      %v3340 = vrot.slane %v3338, 4
      %v3341 = vshll.u32 %v3079, 16
      %v3343 = vrot.slane %v3341, 5
      %v3344 = vor.u32 %v3340, %v3343
      %v3345 = vrot.slane %v3344, 4
      %v3347 = vshll.u32 %v3080, 16
      %v3349 = vrot.slane %v3347, 5
      %v3350 = vsel %vm910, %v3345, %v3349
      %v3351 = vshrl.u32 %v3080, 16
      %v3353 = vrot.slane %v3351, 4
      %v3354 = vor.u32 %v3353, %v3349
      %v3355 = vrot.slane %v3354, 4
      %v3357 = vshll.u32 %v3081, 16
      %v3359 = vrot.slane %v3357, 5
      %v3360 = vsel %vm910, %v3355, %v3359
      %v3362 = vshrl.u32 %v3082, 16
      %v3364 = vrot.slane %v3362, 4
      %v3365 = vshll.u32 %v3082, 16
      %v3367 = vrot.slane %v3365, 5
      %v3368 = vor.u32 %v3364, %v3367
      %v3369 = vrot.slane %v3368, 4
      %v3371 = vshll.u32 %v3083, 16
      %v3373 = vrot.slane %v3371, 5
      %v3374 = vsel %vm910, %v3369, %v3373
      %v3375 = vshrl.u32 %v3083, 16
      %v3377 = vrot.slane %v3375, 4
      %v3378 = vor.u32 %v3377, %v3373
      %v3379 = vrot.slane %v3378, 4
      %v3381 = vshll.u32 %v3084, 16
      %v3383 = vrot.slane %v3381, 5
      %v3384 = vsel %vm910, %v3379, %v3383
      %v3386 = vshrl.u32 %v3085, 16
      %v3388 = vrot.slane %v3386, 4
      %v3389 = vshll.u32 %v3085, 16
      %v3391 = vrot.slane %v3389, 5
      %v3392 = vor.u32 %v3388, %v3391
      %v3393 = vrot.slane %v3392, 4
      %v3395 = vshll.u32 %v3086, 16
      %v3397 = vrot.slane %v3395, 5
      %v3398 = vsel %vm910, %v3393, %v3397
      %v3399 = vshrl.u32 %v3086, 16
      %v3401 = vrot.slane %v3399, 4
      %v3402 = vor.u32 %v3401, %v3397
      %v3403 = vrot.slane %v3402, 4
      %v3405 = vshll.u32 %v3087, 16
      %v3407 = vrot.slane %v3405, 5
      %v3408 = vsel %vm910, %v3403, %v3407
      %v3410 = vshrl.u32 %v3088, 16
      %v3412 = vrot.slane %v3410, 4
      %v3413 = vshll.u32 %v3088, 16
      %v3415 = vrot.slane %v3413, 5
      %v3416 = vor.u32 %v3412, %v3415
      %v3417 = vrot.slane %v3416, 4
      %v3419 = vshll.u32 %v3089, 16
      %v3421 = vrot.slane %v3419, 5
      %v3422 = vsel %vm910, %v3417, %v3421
      %v3423 = vshrl.u32 %v3089, 16
      %v3425 = vrot.slane %v3423, 4
      %v3426 = vor.u32 %v3425, %v3421
      %v3427 = vrot.slane %v3426, 4
      %v3429 = vshll.u32 %v3090, 16
      %v3431 = vrot.slane %v3429, 5
      %v3432 = vsel %vm910, %v3427, %v3431
      %v3434 = vshrl.u32 %v3091, 16
      %v3436 = vrot.slane %v3434, 4
      %v3437 = vshll.u32 %v3091, 16
      %v3439 = vrot.slane %v3437, 5
      %v3440 = vor.u32 %v3436, %v3439
      %v3441 = vrot.slane %v3440, 4
      %v3443 = vshll.u32 %v3092, 16
      %v3445 = vrot.slane %v3443, 5
      %v3446 = vsel %vm910, %v3441, %v3445
      %v3447 = vshrl.u32 %v3092, 16
      %v3449 = vrot.slane %v3447, 4
      %v3450 = vor.u32 %v3449, %v3445
      %v3451 = vrot.slane %v3450, 4
      %v3453 = vshll.u32 %v3093, 16
      %v3455 = vrot.slane %v3453, 5
      %v3456 = vsel %vm910, %v3451, %v3455
      %v3458 = vshrl.u32 %v3094, 16
      %v3460 = vrot.slane %v3458, 4
      %v3461 = vshll.u32 %v3094, 16
      %v3463 = vrot.slane %v3461, 5
      %v3464 = vor.u32 %v3460, %v3463
      %v3465 = vrot.slane %v3464, 4
      %v3467 = vshll.u32 %v3095, 16
      %v3469 = vrot.slane %v3467, 5
      %v3470 = vsel %vm910, %v3465, %v3469
      %v3471 = vshrl.u32 %v3095, 16
      %v3473 = vrot.slane %v3471, 4
      %v3474 = vor.u32 %v3473, %v3469
      %v3475 = vrot.slane %v3474, 4
      %v3477 = vshll.u32 %v3096, 16
      %v3479 = vrot.slane %v3477, 5
      %v3480 = vsel %vm910, %v3475, %v3479
      %3481 = vrot.lane.b32.xlu0 %v3110, 28
      %v3482 = vpop.permute.xlu0 %3481
      %3483 = vrot.lane.b32.xlu0 %v3120, 28
      %v3484 = vpop.permute.xlu0 %3483
      %3485 = vrot.lane.b32.xlu0 %v3134, 28
      %v3486 = vpop.permute.xlu0 %3485
      %3487 = vrot.lane.b32.xlu0 %v3144, 28
      %v3488 = vpop.permute.xlu0 %3487
      %3489 = vrot.lane.b32.xlu0 %v3158, 28
      %v3490 = vpop.permute.xlu0 %3489
      %3491 = vrot.lane.b32.xlu0 %v3168, 28
      %v3492 = vpop.permute.xlu0 %3491
      %3493 = vrot.lane.b32.xlu0 %v3182, 28
      %v3494 = vpop.permute.xlu0 %3493
      %3495 = vrot.lane.b32.xlu0 %v3192, 28
      %v3496 = vpop.permute.xlu0 %3495
      %3497 = vrot.lane.b32.xlu0 %v3206, 28
      %v3498 = vpop.permute.xlu0 %3497
      %3499 = vrot.lane.b32.xlu0 %v3216, 28
      %v3500 = vpop.permute.xlu0 %3499
      %3501 = vrot.lane.b32.xlu0 %v3230, 28
      %v3502 = vpop.permute.xlu0 %3501
      %3503 = vrot.lane.b32.xlu0 %v3240, 28
      %v3504 = vpop.permute.xlu0 %3503
      %3505 = vrot.lane.b32.xlu0 %v3254, 28
      %v3506 = vpop.permute.xlu0 %3505
      %3507 = vrot.lane.b32.xlu0 %v3264, 28
      %v3508 = vpop.permute.xlu0 %3507
      %3509 = vrot.lane.b32.xlu0 %v3278, 28
      %v3510 = vpop.permute.xlu0 %3509
      %3511 = vrot.lane.b32.xlu0 %v3288, 28
      %v3512 = vpop.permute.xlu0 %3511
      %3513 = vrot.lane.b32.xlu0 %v3302, 28
      %v3514 = vpop.permute.xlu0 %3513
      %3515 = vrot.lane.b32.xlu0 %v3312, 28
      %v3516 = vpop.permute.xlu0 %3515
      %3517 = vrot.lane.b32.xlu0 %v3326, 28
      %v3518 = vpop.permute.xlu0 %3517
      %3519 = vrot.lane.b32.xlu0 %v3336, 28
      %v3520 = vpop.permute.xlu0 %3519
      %3521 = vrot.lane.b32.xlu0 %v3350, 28
      %v3522 = vpop.permute.xlu0 %3521
      %3523 = vrot.lane.b32.xlu0 %v3360, 28
      %v3524 = vpop.permute.xlu0 %3523
      %3525 = vrot.lane.b32.xlu0 %v3374, 28
      %v3526 = vpop.permute.xlu0 %3525
      %3527 = vrot.lane.b32.xlu0 %v3384, 28
      %v3528 = vpop.permute.xlu0 %3527
      %3529 = vrot.lane.b32.xlu0 %v3398, 28
      %v3530 = vpop.permute.xlu0 %3529
      %3531 = vrot.lane.b32.xlu0 %v3408, 28
      %v3532 = vpop.permute.xlu0 %3531
      %3533 = vrot.lane.b32.xlu0 %v3422, 28
      %v3534 = vpop.permute.xlu0 %3533
      %3535 = vrot.lane.b32.xlu0 %v3432, 28
      %v3536 = vpop.permute.xlu0 %3535
      %3537 = vrot.lane.b32.xlu0 %v3446, 28
      %v3538 = vpop.permute.xlu0 %3537
      %3539 = vrot.lane.b32.xlu0 %v3456, 28
      %v3540 = vpop.permute.xlu0 %3539
      %3541 = vrot.lane.b32.xlu0 %v3470, 28
      %v3542 = vpop.permute.xlu0 %3541
      %3543 = vrot.lane.b32.xlu0 %v3480, 28
      %v3544 = vpop.permute.xlu0 %3543
      %vm3577 = vcmask 257248
      %3578 = vst.msk [vmem:[#allocation3] sm:$0xf] %vm3577, %v3482
      %3579 = vst.msk [vmem:[#allocation3 + $0x4] sm:$0xf] %vm3577, %v3484
      %3580 = vst.msk [vmem:[#allocation3 + $0x8] sm:$0xf] %vm3577, %v3486
      %3581 = vst.msk [vmem:[#allocation3 + $0xc] sm:$0xf] %vm3577, %v3488
      %3582 = vst.msk [vmem:[#allocation3 + $0x10] sm:$0xf] %vm3577, %v3490
      %3583 = vst.msk [vmem:[#allocation3 + $0x14] sm:$0xf] %vm3577, %v3492
      %3584 = vst.msk [vmem:[#allocation3 + $0x18] sm:$0xf] %vm3577, %v3494
      %3585 = vst.msk [vmem:[#allocation3 + $0x1c] sm:$0xf] %vm3577, %v3496
      %3586 = vst.msk [vmem:[#allocation3 + $0x20] sm:$0xf] %vm3577, %v3498
      %3587 = vst.msk [vmem:[#allocation3 + $0x24] sm:$0xf] %vm3577, %v3500
      %3588 = vst.msk [vmem:[#allocation3 + $0x28] sm:$0xf] %vm3577, %v3502
      %3589 = vst.msk [vmem:[#allocation3 + $0x2c] sm:$0xf] %vm3577, %v3504
      %3590 = vst.msk [vmem:[#allocation3 + $0x30] sm:$0xf] %vm3577, %v3506
      %3591 = vst.msk [vmem:[#allocation3 + $0x34] sm:$0xf] %vm3577, %v3508
      %3592 = vst.msk [vmem:[#allocation3 + $0x38] sm:$0xf] %vm3577, %v3510
      %3593 = vst.msk [vmem:[#allocation3 + $0x3c] sm:$0xf] %vm3577, %v3512
      %3594 = vst.msk [vmem:[#allocation3 + $0x40] sm:$0xf] %vm3577, %v3514
      %3595 = vst.msk [vmem:[#allocation3 + $0x44] sm:$0xf] %vm3577, %v3516
      %3596 = vst.msk [vmem:[#allocation3 + $0x48] sm:$0xf] %vm3577, %v3518
      %3597 = vst.msk [vmem:[#allocation3 + $0x4c] sm:$0xf] %vm3577, %v3520
      %3598 = vst.msk [vmem:[#allocation3 + $0x50] sm:$0xf] %vm3577, %v3522
      %3599 = vst.msk [vmem:[#allocation3 + $0x54] sm:$0xf] %vm3577, %v3524
      %3600 = vst.msk [vmem:[#allocation3 + $0x58] sm:$0xf] %vm3577, %v3526
      %3601 = vst.msk [vmem:[#allocation3 + $0x5c] sm:$0xf] %vm3577, %v3528
      %3602 = vst.msk [vmem:[#allocation3 + $0x60] sm:$0xf] %vm3577, %v3530
      %3603 = vst.msk [vmem:[#allocation3 + $0x64] sm:$0xf] %vm3577, %v3532
      %3604 = vst.msk [vmem:[#allocation3 + $0x68] sm:$0xf] %vm3577, %v3534
      %3605 = vst.msk [vmem:[#allocation3 + $0x6c] sm:$0xf] %vm3577, %v3536
      %3606 = vst.msk [vmem:[#allocation3 + $0x70] sm:$0xf] %vm3577, %v3538
      %3607 = vst.msk [vmem:[#allocation3 + $0x74] sm:$0xf] %vm3577, %v3540
      %3608 = vst.msk [vmem:[#allocation3 + $0x78] sm:$0xf] %vm3577, %v3542
      %3609 = vst.msk [vmem:[#allocation3 + $0x7c] sm:$0xf] %vm3577, %v3544
      %v3610 = vld [vmem:[%s2855] sm:$0xe]
      %v3611 = vld [vmem:[%s2855 + $0x4] sm:$0xf]
      %v3612 = vld [vmem:[%s2855 + $0x8] sm:$0x1]
      %v3613 = vld [vmem:[%s2855 + $0xc] sm:$0xe]
      %v3614 = vld [vmem:[%s2855 + $0x10] sm:$0xf]
      %v3615 = vld [vmem:[%s2855 + $0x14] sm:$0x1]
      %v3616 = vld [vmem:[%s2855 + $0x18] sm:$0xe]
      %v3617 = vld [vmem:[%s2855 + $0x1c] sm:$0xf]
      %v3618 = vld [vmem:[%s2855 + $0x20] sm:$0x1]
      %v3619 = vld [vmem:[%s2855 + $0x24] sm:$0xe]
      %v3620 = vld [vmem:[%s2855 + $0x28] sm:$0xf]
      %v3621 = vld [vmem:[%s2855 + $0x2c] sm:$0x1]
      %v3622 = vld [vmem:[%s2855 + $0x30] sm:$0xe]
      %v3623 = vld [vmem:[%s2855 + $0x34] sm:$0xf]
      %v3624 = vld [vmem:[%s2855 + $0x38] sm:$0x1]
      %v3625 = vld [vmem:[%s2855 + $0x3c] sm:$0xe]
      %v3626 = vld [vmem:[%s2855 + $0x40] sm:$0xf]
      %v3627 = vld [vmem:[%s2855 + $0x44] sm:$0x1]
      %v3628 = vld [vmem:[%s2855 + $0x48] sm:$0xe]
      %v3629 = vld [vmem:[%s2855 + $0x4c] sm:$0xf]
      %v3630 = vld [vmem:[%s2855 + $0x50] sm:$0x1]
      %v3631 = vld [vmem:[%s2855 + $0x54] sm:$0xe]
      %v3632 = vld [vmem:[%s2855 + $0x58] sm:$0xf]
      %v3633 = vld [vmem:[%s2855 + $0x5c] sm:$0x1]
      %v3634 = vld [vmem:[%s2855 + $0x60] sm:$0xe]
      %v3635 = vld [vmem:[%s2855 + $0x64] sm:$0xf]
      %v3636 = vld [vmem:[%s2855 + $0x68] sm:$0x1]
      %v3637 = vld [vmem:[%s2855 + $0x6c] sm:$0xe]
      %v3638 = vld [vmem:[%s2855 + $0x70] sm:$0xf]
      %v3639 = vld [vmem:[%s2855 + $0x74] sm:$0x1]
      %v3640 = vld [vmem:[%s2855 + $0x78] sm:$0xe]
      %v3641 = vld [vmem:[%s2855 + $0x7c] sm:$0xf]
      %v3642 = vld [vmem:[%s2855 + $0x80] sm:$0x1]
      %v3643 = vld [vmem:[%s2855 + $0x84] sm:$0xe]
      %v3644 = vld [vmem:[%s2855 + $0x88] sm:$0xf]
      %v3645 = vld [vmem:[%s2855 + $0x8c] sm:$0x1]
      %v3646 = vld [vmem:[%s2855 + $0x90] sm:$0xe]
      %v3647 = vld [vmem:[%s2855 + $0x94] sm:$0xf]
      %v3648 = vld [vmem:[%s2855 + $0x98] sm:$0x1]
      %v3649 = vld [vmem:[%s2855 + $0x9c] sm:$0xe]
      %v3650 = vld [vmem:[%s2855 + $0xa0] sm:$0xf]
      %v3651 = vld [vmem:[%s2855 + $0xa4] sm:$0x1]
      %v3652 = vld [vmem:[%s2855 + $0xa8] sm:$0xe]
      %v3653 = vld [vmem:[%s2855 + $0xac] sm:$0xf]
      %v3654 = vld [vmem:[%s2855 + $0xb0] sm:$0x1]
      %v3655 = vld [vmem:[%s2855 + $0xb4] sm:$0xe]
      %v3656 = vld [vmem:[%s2855 + $0xb8] sm:$0xf]
      %v3657 = vld [vmem:[%s2855 + $0xbc] sm:$0x1]
      %v3706 = vrot.slane %v3610, 5
      %v3707 = vrot.slane %v3706, 4
      %v3708 = vrot.slane %v3611, 5
      %v3709 = vsel %vm1522, %v3707, %v3708
      %v3710 = vrot.slane %v3708, 4
      %v3711 = vrot.slane %v3612, 5
      %v3712 = vsel %vm1522, %v3710, %v3711
      %v3713 = vrot.slane %v3613, 5
      %v3714 = vrot.slane %v3713, 4
      %v3715 = vrot.slane %v3614, 5
      %v3716 = vsel %vm1522, %v3714, %v3715
      %v3717 = vrot.slane %v3715, 4
      %v3718 = vrot.slane %v3615, 5
      %v3719 = vsel %vm1522, %v3717, %v3718
      %v3720 = vrot.slane %v3616, 5
      %v3721 = vrot.slane %v3720, 4
      %v3722 = vrot.slane %v3617, 5
      %v3723 = vsel %vm1522, %v3721, %v3722
      %v3724 = vrot.slane %v3722, 4
      %v3725 = vrot.slane %v3618, 5
      %v3726 = vsel %vm1522, %v3724, %v3725
      %v3727 = vrot.slane %v3619, 5
      %v3728 = vrot.slane %v3727, 4
      %v3729 = vrot.slane %v3620, 5
      %v3730 = vsel %vm1522, %v3728, %v3729
      %v3731 = vrot.slane %v3729, 4
      %v3732 = vrot.slane %v3621, 5
      %v3733 = vsel %vm1522, %v3731, %v3732
      %v3734 = vrot.slane %v3622, 5
      %v3735 = vrot.slane %v3734, 4
      %v3736 = vrot.slane %v3623, 5
      %v3737 = vsel %vm1522, %v3735, %v3736
      %v3738 = vrot.slane %v3736, 4
      %v3739 = vrot.slane %v3624, 5
      %v3740 = vsel %vm1522, %v3738, %v3739
      %v3741 = vrot.slane %v3625, 5
      %v3742 = vrot.slane %v3741, 4
      %v3743 = vrot.slane %v3626, 5
      %v3744 = vsel %vm1522, %v3742, %v3743
      %v3745 = vrot.slane %v3743, 4
      %v3746 = vrot.slane %v3627, 5
      %v3747 = vsel %vm1522, %v3745, %v3746
      %v3748 = vrot.slane %v3628, 5
      %v3749 = vrot.slane %v3748, 4
      %v3750 = vrot.slane %v3629, 5
      %v3751 = vsel %vm1522, %v3749, %v3750
      %v3752 = vrot.slane %v3750, 4
      %v3753 = vrot.slane %v3630, 5
      %v3754 = vsel %vm1522, %v3752, %v3753
      %v3755 = vrot.slane %v3631, 5
      %v3756 = vrot.slane %v3755, 4
      %v3757 = vrot.slane %v3632, 5
      %v3758 = vsel %vm1522, %v3756, %v3757
      %v3759 = vrot.slane %v3757, 4
      %v3760 = vrot.slane %v3633, 5
      %v3761 = vsel %vm1522, %v3759, %v3760
      %v3762 = vrot.slane %v3634, 5
      %v3763 = vrot.slane %v3762, 4
      %v3764 = vrot.slane %v3635, 5
      %v3765 = vsel %vm1522, %v3763, %v3764
      %v3766 = vrot.slane %v3764, 4
      %v3767 = vrot.slane %v3636, 5
      %v3768 = vsel %vm1522, %v3766, %v3767
      %v3769 = vrot.slane %v3637, 5
      %v3770 = vrot.slane %v3769, 4
      %v3771 = vrot.slane %v3638, 5
      %v3772 = vsel %vm1522, %v3770, %v3771
      %v3773 = vrot.slane %v3771, 4
      %v3774 = vrot.slane %v3639, 5
      %v3775 = vsel %vm1522, %v3773, %v3774
      %v3776 = vrot.slane %v3640, 5
      %v3777 = vrot.slane %v3776, 4
      %v3778 = vrot.slane %v3641, 5
      %v3779 = vsel %vm1522, %v3777, %v3778
      %v3780 = vrot.slane %v3778, 4
      %v3781 = vrot.slane %v3642, 5
      %v3782 = vsel %vm1522, %v3780, %v3781
      %v3783 = vrot.slane %v3643, 5
      %v3784 = vrot.slane %v3783, 4
      %v3785 = vrot.slane %v3644, 5
      %v3786 = vsel %vm1522, %v3784, %v3785
      %v3787 = vrot.slane %v3785, 4
      %v3788 = vrot.slane %v3645, 5
      %v3789 = vsel %vm1522, %v3787, %v3788
      %v3790 = vrot.slane %v3646, 5
      %v3791 = vrot.slane %v3790, 4
      %v3792 = vrot.slane %v3647, 5
      %v3793 = vsel %vm1522, %v3791, %v3792
      %v3794 = vrot.slane %v3792, 4
      %v3795 = vrot.slane %v3648, 5
      %v3796 = vsel %vm1522, %v3794, %v3795
      %v3797 = vrot.slane %v3649, 5
      %v3798 = vrot.slane %v3797, 4
      %v3799 = vrot.slane %v3650, 5
      %v3800 = vsel %vm1522, %v3798, %v3799
      %v3801 = vrot.slane %v3799, 4
      %v3802 = vrot.slane %v3651, 5
      %v3803 = vsel %vm1522, %v3801, %v3802
      %v3804 = vrot.slane %v3652, 5
      %v3805 = vrot.slane %v3804, 4
      %v3806 = vrot.slane %v3653, 5
      %v3807 = vsel %vm1522, %v3805, %v3806
      %v3808 = vrot.slane %v3806, 4
      %v3809 = vrot.slane %v3654, 5
      %v3810 = vsel %vm1522, %v3808, %v3809
      %v3811 = vrot.slane %v3655, 5
      %v3812 = vrot.slane %v3811, 4
      %v3813 = vrot.slane %v3656, 5
      %v3814 = vsel %vm1522, %v3812, %v3813
      %v3815 = vrot.slane %v3813, 4
      %v3816 = vrot.slane %v3657, 5
      %v3817 = vsel %vm1522, %v3815, %v3816
      %3818 = vrot.lane.b32.xlu0 %v3709, 32
      %v3819 = vpop.permute.xlu0 %3818
      %3820 = vrot.lane.b32.xlu0 %v3712, 32
      %v3821 = vpop.permute.xlu0 %3820
      %3822 = vrot.lane.b32.xlu0 %v3716, 32
      %v3823 = vpop.permute.xlu0 %3822
      %3824 = vrot.lane.b32.xlu0 %v3719, 32
      %v3825 = vpop.permute.xlu0 %3824
      %3826 = vrot.lane.b32.xlu0 %v3723, 32
      %v3827 = vpop.permute.xlu0 %3826
      %3828 = vrot.lane.b32.xlu0 %v3726, 32
      %v3829 = vpop.permute.xlu0 %3828
      %3830 = vrot.lane.b32.xlu0 %v3730, 32
      %v3831 = vpop.permute.xlu0 %3830
      %3832 = vrot.lane.b32.xlu0 %v3733, 32
      %v3833 = vpop.permute.xlu0 %3832
      %3834 = vrot.lane.b32.xlu0 %v3737, 32
      %v3835 = vpop.permute.xlu0 %3834
      %3836 = vrot.lane.b32.xlu0 %v3740, 32
      %v3837 = vpop.permute.xlu0 %3836
      %3838 = vrot.lane.b32.xlu0 %v3744, 32
      %v3839 = vpop.permute.xlu0 %3838
      %3840 = vrot.lane.b32.xlu0 %v3747, 32
      %v3841 = vpop.permute.xlu0 %3840
      %3842 = vrot.lane.b32.xlu0 %v3751, 32
      %v3843 = vpop.permute.xlu0 %3842
      %3844 = vrot.lane.b32.xlu0 %v3754, 32
      %v3845 = vpop.permute.xlu0 %3844
      %3846 = vrot.lane.b32.xlu0 %v3758, 32
      %v3847 = vpop.permute.xlu0 %3846
      %3848 = vrot.lane.b32.xlu0 %v3761, 32
      %v3849 = vpop.permute.xlu0 %3848
      %3850 = vrot.lane.b32.xlu0 %v3765, 32
      %v3851 = vpop.permute.xlu0 %3850
      %3852 = vrot.lane.b32.xlu0 %v3768, 32
      %v3853 = vpop.permute.xlu0 %3852
      %3854 = vrot.lane.b32.xlu0 %v3772, 32
      %v3855 = vpop.permute.xlu0 %3854
      %3856 = vrot.lane.b32.xlu0 %v3775, 32
      %v3857 = vpop.permute.xlu0 %3856
      %3858 = vrot.lane.b32.xlu0 %v3779, 32
      %v3859 = vpop.permute.xlu0 %3858
      %3860 = vrot.lane.b32.xlu0 %v3782, 32
      %v3861 = vpop.permute.xlu0 %3860
      %3862 = vrot.lane.b32.xlu0 %v3786, 32
      %v3863 = vpop.permute.xlu0 %3862
      %3864 = vrot.lane.b32.xlu0 %v3789, 32
      %v3865 = vpop.permute.xlu0 %3864
      %3866 = vrot.lane.b32.xlu0 %v3793, 32
      %v3867 = vpop.permute.xlu0 %3866
      %3868 = vrot.lane.b32.xlu0 %v3796, 32
      %v3869 = vpop.permute.xlu0 %3868
      %3870 = vrot.lane.b32.xlu0 %v3800, 32
      %v3871 = vpop.permute.xlu0 %3870
      %3872 = vrot.lane.b32.xlu0 %v3803, 32
      %v3873 = vpop.permute.xlu0 %3872
      %3874 = vrot.lane.b32.xlu0 %v3807, 32
      %v3875 = vpop.permute.xlu0 %3874
      %3876 = vrot.lane.b32.xlu0 %v3810, 32
      %v3877 = vpop.permute.xlu0 %3876
      %3878 = vrot.lane.b32.xlu0 %v3814, 32
      %v3879 = vpop.permute.xlu0 %3878
      %3880 = vrot.lane.b32.xlu0 %v3817, 32
      %v3881 = vpop.permute.xlu0 %3880
      %vm3914 = vcmask 290048
      %3915 = vst.msk [vmem:[#allocation3] sm:$0xf] %vm3914, %v3819
      %3916 = vst.msk [vmem:[#allocation3 + $0x4] sm:$0xf] %vm3914, %v3821
      %3917 = vst.msk [vmem:[#allocation3 + $0x8] sm:$0xf] %vm3914, %v3823
      %3918 = vst.msk [vmem:[#allocation3 + $0xc] sm:$0xf] %vm3914, %v3825
      %3919 = vst.msk [vmem:[#allocation3 + $0x10] sm:$0xf] %vm3914, %v3827
      %3920 = vst.msk [vmem:[#allocation3 + $0x14] sm:$0xf] %vm3914, %v3829
      %3921 = vst.msk [vmem:[#allocation3 + $0x18] sm:$0xf] %vm3914, %v3831
      %3922 = vst.msk [vmem:[#allocation3 + $0x1c] sm:$0xf] %vm3914, %v3833
      %3923 = vst.msk [vmem:[#allocation3 + $0x20] sm:$0xf] %vm3914, %v3835
      %3924 = vst.msk [vmem:[#allocation3 + $0x24] sm:$0xf] %vm3914, %v3837
      %3925 = vst.msk [vmem:[#allocation3 + $0x28] sm:$0xf] %vm3914, %v3839
      %3926 = vst.msk [vmem:[#allocation3 + $0x2c] sm:$0xf] %vm3914, %v3841
      %3927 = vst.msk [vmem:[#allocation3 + $0x30] sm:$0xf] %vm3914, %v3843
      %3928 = vst.msk [vmem:[#allocation3 + $0x34] sm:$0xf] %vm3914, %v3845
      %3929 = vst.msk [vmem:[#allocation3 + $0x38] sm:$0xf] %vm3914, %v3847
      %3930 = vst.msk [vmem:[#allocation3 + $0x3c] sm:$0xf] %vm3914, %v3849
      %3931 = vst.msk [vmem:[#allocation3 + $0x40] sm:$0xf] %vm3914, %v3851
      %3932 = vst.msk [vmem:[#allocation3 + $0x44] sm:$0xf] %vm3914, %v3853
      %3933 = vst.msk [vmem:[#allocation3 + $0x48] sm:$0xf] %vm3914, %v3855
      %3934 = vst.msk [vmem:[#allocation3 + $0x4c] sm:$0xf] %vm3914, %v3857
      %3935 = vst.msk [vmem:[#allocation3 + $0x50] sm:$0xf] %vm3914, %v3859
      %3936 = vst.msk [vmem:[#allocation3 + $0x54] sm:$0xf] %vm3914, %v3861
      %3937 = vst.msk [vmem:[#allocation3 + $0x58] sm:$0xf] %vm3914, %v3863
      %3938 = vst.msk [vmem:[#allocation3 + $0x5c] sm:$0xf] %vm3914, %v3865
      %3939 = vst.msk [vmem:[#allocation3 + $0x60] sm:$0xf] %vm3914, %v3867
      %3940 = vst.msk [vmem:[#allocation3 + $0x64] sm:$0xf] %vm3914, %v3869
      %3941 = vst.msk [vmem:[#allocation3 + $0x68] sm:$0xf] %vm3914, %v3871
      %3942 = vst.msk [vmem:[#allocation3 + $0x6c] sm:$0xf] %vm3914, %v3873
      %3943 = vst.msk [vmem:[#allocation3 + $0x70] sm:$0xf] %vm3914, %v3875
      %3944 = vst.msk [vmem:[#allocation3 + $0x74] sm:$0xf] %vm3914, %v3877
      %3945 = vst.msk [vmem:[#allocation3 + $0x78] sm:$0xf] %vm3914, %v3879
      %3946 = vst.msk [vmem:[#allocation3 + $0x7c] sm:$0xf] %vm3914, %v3881
      %v3947 = vld [vmem:[#allocation3] sm:$0xf]
      %v3948 = vld [vmem:[#allocation3 + $0x4] sm:$0xf]
      %v3949 = vld [vmem:[#allocation3 + $0x8] sm:$0xf]
      %v3950 = vld [vmem:[#allocation3 + $0xc] sm:$0xf]
      %v3951 = vld [vmem:[#allocation3 + $0x10] sm:$0xf]
      %v3952 = vld [vmem:[#allocation3 + $0x14] sm:$0xf]
      %v3953 = vld [vmem:[#allocation3 + $0x18] sm:$0xf]
      %v3954 = vld [vmem:[#allocation3 + $0x1c] sm:$0xf]
      %v3955 = vld [vmem:[#allocation3 + $0x20] sm:$0xf]
      %v3956 = vld [vmem:[#allocation3 + $0x24] sm:$0xf]
      %v3957 = vld [vmem:[#allocation3 + $0x28] sm:$0xf]
      %v3958 = vld [vmem:[#allocation3 + $0x2c] sm:$0xf]
      %v3959 = vld [vmem:[#allocation3 + $0x30] sm:$0xf]
      %v3960 = vld [vmem:[#allocation3 + $0x34] sm:$0xf]
      %v3961 = vld [vmem:[#allocation3 + $0x38] sm:$0xf]
      %v3962 = vld [vmem:[#allocation3 + $0x3c] sm:$0xf]
      %v3963 = vld [vmem:[#allocation3 + $0x40] sm:$0xf]
      %v3964 = vld [vmem:[#allocation3 + $0x44] sm:$0xf]
      %v3965 = vld [vmem:[#allocation3 + $0x48] sm:$0xf]
      %v3966 = vld [vmem:[#allocation3 + $0x4c] sm:$0xf]
      %v3967 = vld [vmem:[#allocation3 + $0x50] sm:$0xf]
      %v3968 = vld [vmem:[#allocation3 + $0x54] sm:$0xf]
      %v3969 = vld [vmem:[#allocation3 + $0x58] sm:$0xf]
      %v3970 = vld [vmem:[#allocation3 + $0x5c] sm:$0xf]
      %v3971 = vld [vmem:[#allocation3 + $0x60] sm:$0xf]
      %v3972 = vld [vmem:[#allocation3 + $0x64] sm:$0xf]
      %v3973 = vld [vmem:[#allocation3 + $0x68] sm:$0xf]
      %v3974 = vld [vmem:[#allocation3 + $0x6c] sm:$0xf]
      %v3975 = vld [vmem:[#allocation3 + $0x70] sm:$0xf]
      %v3976 = vld [vmem:[#allocation3 + $0x74] sm:$0xf]
      %v3977 = vld [vmem:[#allocation3 + $0x78] sm:$0xf]
      %v3978 = vld [vmem:[#allocation3 + $0x7c] sm:$0xf]
      %v3979 = vld [vmem:[%s1] sm:$0xf]
      %v3980 = vld [vmem:[%s1 + $0x4] sm:$0xf]
      %v3981 = vld [vmem:[%s1 + $0x8] sm:$0xf]
      %v3982 = vld [vmem:[%s1 + $0xc] sm:$0xf]
      %v3983 = vld [vmem:[%s1 + $0x10] sm:$0xf]
      %v3984 = vld [vmem:[%s1 + $0x14] sm:$0xf]
      %v3985 = vld [vmem:[%s1 + $0x18] sm:$0xf]
      %v3986 = vld [vmem:[%s1 + $0x1c] sm:$0xf]
      %v3987 = vld [vmem:[%s1 + $0x20] sm:$0xf]
      %v3988 = vld [vmem:[%s1 + $0x24] sm:$0xf]
      %v3989 = vld [vmem:[%s1 + $0x28] sm:$0xf]
      %v3990 = vld [vmem:[%s1 + $0x2c] sm:$0xf]
      %v3991 = vld [vmem:[%s1 + $0x30] sm:$0xf]
      %v3992 = vld [vmem:[%s1 + $0x34] sm:$0xf]
      %v3993 = vld [vmem:[%s1 + $0x38] sm:$0xf]
      %v3994 = vld [vmem:[%s1 + $0x3c] sm:$0xf]
      %v4027 = vunpack.c.l.b16 %v3947
      %v4028 = vunpack.c.l.b16 %v3948
      %v4029 = vunpack.c.l.b16 %v3949
      %v4030 = vunpack.c.l.b16 %v3950
      %v4031 = vunpack.c.l.b16 %v3951
      %v4032 = vunpack.c.l.b16 %v3952
      %v4033 = vunpack.c.l.b16 %v3953
      %v4034 = vunpack.c.l.b16 %v3954
      %v4035 = vunpack.c.l.b16 %v3955
      %v4036 = vunpack.c.l.b16 %v3956
      %v4037 = vunpack.c.l.b16 %v3957
      %v4038 = vunpack.c.l.b16 %v3958
      %v4039 = vunpack.c.l.b16 %v3959
      %v4040 = vunpack.c.l.b16 %v3960
      %v4041 = vunpack.c.l.b16 %v3961
      %v4042 = vunpack.c.l.b16 %v3962
      %v4043 = vunpack.c.l.b16 %v3963
      %v4044 = vunpack.c.l.b16 %v3964
      %v4045 = vunpack.c.l.b16 %v3965
      %v4046 = vunpack.c.l.b16 %v3966
      %v4047 = vunpack.c.l.b16 %v3967
      %v4048 = vunpack.c.l.b16 %v3968
      %v4049 = vunpack.c.l.b16 %v3969
      %v4050 = vunpack.c.l.b16 %v3970
      %v4051 = vunpack.c.l.b16 %v3971
      %v4052 = vunpack.c.l.b16 %v3972
      %v4053 = vunpack.c.l.b16 %v3973
      %v4054 = vunpack.c.l.b16 %v3974
      %v4055 = vunpack.c.l.b16 %v3975
      %v4056 = vunpack.c.l.b16 %v3976
      %v4057 = vunpack.c.l.b16 %v3977
      %v4058 = vunpack.c.l.b16 %v3978
      %v4059 = vpack.c.b16 %v4028, %v4027
      %v4060 = vpack.c.b16 %v4030, %v4029
      %v4061 = vpack.c.b16 %v4032, %v4031
      %v4062 = vpack.c.b16 %v4034, %v4033
      %v4063 = vpack.c.b16 %v4036, %v4035
      %v4064 = vpack.c.b16 %v4038, %v4037
      %v4065 = vpack.c.b16 %v4040, %v4039
      %v4066 = vpack.c.b16 %v4042, %v4041
      %v4067 = vpack.c.b16 %v4044, %v4043
      %v4068 = vpack.c.b16 %v4046, %v4045
      %v4069 = vpack.c.b16 %v4048, %v4047
      %v4070 = vpack.c.b16 %v4050, %v4049
      %v4071 = vpack.c.b16 %v4052, %v4051
      %v4072 = vpack.c.b16 %v4054, %v4053
      %v4073 = vpack.c.b16 %v4056, %v4055
      %v4074 = vpack.c.b16 %v4058, %v4057
      %v4107 = vunpack.c.l.b16 %v3979
      %v4108 = vunpack.c.l.b16 %v3980
      %v4109 = vunpack.c.l.b16 %v3981
      %v4110 = vunpack.c.l.b16 %v3982
      %v4111 = vunpack.c.l.b16 %v3983
      %v4112 = vunpack.c.l.b16 %v3984
      %v4113 = vunpack.c.l.b16 %v3985
      %v4114 = vunpack.c.l.b16 %v3986
      %v4115 = vunpack.c.l.b16 %v3987
      %v4116 = vunpack.c.l.b16 %v3988
      %v4117 = vunpack.c.l.b16 %v3989
      %v4118 = vunpack.c.l.b16 %v3990
      %v4119 = vunpack.c.l.b16 %v3991
      %v4120 = vunpack.c.l.b16 %v3992
      %v4121 = vunpack.c.l.b16 %v3993
      %v4122 = vunpack.c.l.b16 %v3994
      %v4123 = vpack.c.b16 %v4108, %v4107
      %v4124 = vpack.c.b16 %v4110, %v4109
      %v4125 = vpack.c.b16 %v4112, %v4111
      %v4126 = vpack.c.b16 %v4114, %v4113
      %v4127 = vpack.c.b16 %v4116, %v4115
      %v4128 = vpack.c.b16 %v4118, %v4117
      %v4129 = vpack.c.b16 %v4120, %v4119
      %v4130 = vpack.c.b16 %v4122, %v4121
      %4139 = vmatprep.subr.bf16.mxu0 0
      %4140 = vmatpush1.bf16.msra.mxu0 %v4130
      %4141 = vmatprep.subr.bf16.mxu0 0
      %4142 = vmatpush1.bf16.msra.mxu0 %v4129
      %4143 = vmatprep.subr.bf16.mxu0 0
      %4144 = vmatpush1.bf16.msra.mxu0 %v4128
      %4145 = vmatprep.subr.bf16.mxu0 0
      %4146 = vmatpush1.bf16.msra.mxu0 %v4127
      %4147 = vmatprep.subr.bf16.mxu0 0
      %4148 = vmatpush1.bf16.msra.mxu0 %v4126
      %4149 = vmatprep.subr.bf16.mxu0 0
      %4150 = vmatpush1.bf16.msra.mxu0 %v4125
      %4151 = vmatprep.subr.bf16.mxu0 0
      %4152 = vmatpush1.bf16.msra.mxu0 %v4124
      %4153 = vmatprep.subr.bf16.mxu0 0
      %4154 = vmatpush1.bf16.msra.mxu0 %v4123
      %4155 = vmatprep.subr.bf16.mxu0 0
      %4156 = vmatpush2.bf16.msra.mxu0 0
      %4157 = vmatprep.subr.bf16.mxu0 0
      %4158 = vmatpush2.bf16.msra.mxu0 0
      %4159 = vmatprep.subr.bf16.mxu0 0
      %4160 = vmatpush2.bf16.msra.mxu0 0
      %4161 = vmatprep.subr.bf16.mxu0 0
      %4162 = vmatpush2.bf16.msra.mxu0 0
      %4163 = vmatprep.subr.bf16.mxu0 0
      %4164 = vmatpush2.bf16.msra.mxu0 0
      %4165 = vmatprep.subr.bf16.mxu0 0
      %4166 = vmatpush2.bf16.msra.mxu0 0
      %4167 = vmatprep.subr.bf16.mxu0 0
      %4168 = vmatpush2.bf16.msra.mxu0 0
      %4169 = vmatprep.subr.bf16.mxu0 0
      %4170 = vmatpush2.bf16.msra.mxu0 0
      %4171 = vmatprep.mubr.bf16.mxu0 0
      %4172 = vmatmul.mubr.bf16.gmra.mxu0 %v4059
      %v4173 = vpop.f32.mrf.mxu0
      %v4174 = vadd.f32 0.0, %v4173
      %v4175 = vpop.f32.mrf.mxu0
      %v4176 = vpop.f32.mrf.mxu0
      %v4177 = vadd.f32 0.0, %v4176
      %v4178 = vpop.f32.mrf.mxu0
      %4179 = vmatprep.mubr.bf16.mxu0 0
      %4180 = vmatmul.mubr.bf16.gmra.mxu0 %v4060
      %v4181 = vpop.f32.mrf.mxu0
      %v4182 = vadd.f32 0.0, %v4181
      %v4183 = vpop.f32.mrf.mxu0
      %v4184 = vpop.f32.mrf.mxu0
      %v4185 = vadd.f32 0.0, %v4184
      %v4186 = vpop.f32.mrf.mxu0
      %4187 = vmatprep.mubr.bf16.mxu0 0
      %4188 = vmatmul.mubr.bf16.gmra.mxu0 %v4061
      %v4189 = vpop.f32.mrf.mxu0
      %v4190 = vadd.f32 0.0, %v4189
      %v4191 = vpop.f32.mrf.mxu0
      %v4192 = vpop.f32.mrf.mxu0
      %v4193 = vadd.f32 0.0, %v4192
      %v4194 = vpop.f32.mrf.mxu0
      %4195 = vmatprep.mubr.bf16.mxu0 0
      %4196 = vmatmul.mubr.bf16.gmra.mxu0 %v4062
      %v4197 = vpop.f32.mrf.mxu0
      %v4198 = vadd.f32 0.0, %v4197
      %v4199 = vpop.f32.mrf.mxu0
      %v4200 = vpop.f32.mrf.mxu0
      %v4201 = vadd.f32 0.0, %v4200
      %v4202 = vpop.f32.mrf.mxu0
      %4203 = vmatprep.mubr.bf16.mxu0 0
      %4204 = vmatmul.mubr.bf16.gmra.mxu0 %v4063
      %v4205 = vpop.f32.mrf.mxu0
      %v4206 = vadd.f32 0.0, %v4205
      %v4207 = vpop.f32.mrf.mxu0
      %v4208 = vpop.f32.mrf.mxu0
      %v4209 = vadd.f32 0.0, %v4208
      %v4210 = vpop.f32.mrf.mxu0
      %4211 = vmatprep.mubr.bf16.mxu0 0
      %4212 = vmatmul.mubr.bf16.gmra.mxu0 %v4064
      %v4213 = vpop.f32.mrf.mxu0
      %v4214 = vadd.f32 0.0, %v4213
      %v4215 = vpop.f32.mrf.mxu0
      %v4216 = vpop.f32.mrf.mxu0
      %v4217 = vadd.f32 0.0, %v4216
      %v4218 = vpop.f32.mrf.mxu0
      %4219 = vmatprep.mubr.bf16.mxu0 0
      %4220 = vmatmul.mubr.bf16.gmra.mxu0 %v4065
      %v4221 = vpop.f32.mrf.mxu0
      %v4222 = vadd.f32 0.0, %v4221
      %v4223 = vpop.f32.mrf.mxu0
      %v4224 = vpop.f32.mrf.mxu0
      %v4225 = vadd.f32 0.0, %v4224
      %v4226 = vpop.f32.mrf.mxu0
      %4227 = vmatprep.mubr.bf16.mxu0 0
      %4228 = vmatmul.mubr.bf16.gmra.mxu0 %v4066
      %v4229 = vpop.f32.mrf.mxu0
      %v4230 = vadd.f32 0.0, %v4229
      %v4231 = vpop.f32.mrf.mxu0
      %v4232 = vpop.f32.mrf.mxu0
      %v4233 = vadd.f32 0.0, %v4232
      %v4234 = vpop.f32.mrf.mxu0
      %4235 = vmatprep.mubr.bf16.mxu0 0
      %4236 = vmatmul.mubr.bf16.gmra.mxu0 %v4067
      %v4237 = vpop.f32.mrf.mxu0
      %v4238 = vadd.f32 0.0, %v4237
      %v4239 = vpop.f32.mrf.mxu0
      %v4240 = vpop.f32.mrf.mxu0
      %v4241 = vadd.f32 0.0, %v4240
      %v4242 = vpop.f32.mrf.mxu0
      %4243 = vmatprep.mubr.bf16.mxu0 0
      %4244 = vmatmul.mubr.bf16.gmra.mxu0 %v4068
      %v4245 = vpop.f32.mrf.mxu0
      %v4246 = vadd.f32 0.0, %v4245
      %v4247 = vpop.f32.mrf.mxu0
      %v4248 = vpop.f32.mrf.mxu0
      %v4249 = vadd.f32 0.0, %v4248
      %v4250 = vpop.f32.mrf.mxu0
      %4251 = vmatprep.mubr.bf16.mxu0 0
      %4252 = vmatmul.mubr.bf16.gmra.mxu0 %v4069
      %v4253 = vpop.f32.mrf.mxu0
      %v4254 = vadd.f32 0.0, %v4253
      %v4255 = vpop.f32.mrf.mxu0
      %v4256 = vpop.f32.mrf.mxu0
      %v4257 = vadd.f32 0.0, %v4256
      %v4258 = vpop.f32.mrf.mxu0
      %4259 = vmatprep.mubr.bf16.mxu0 0
      %4260 = vmatmul.mubr.bf16.gmra.mxu0 %v4070
      %v4261 = vpop.f32.mrf.mxu0
      %v4262 = vadd.f32 0.0, %v4261
      %v4263 = vpop.f32.mrf.mxu0
      %v4264 = vpop.f32.mrf.mxu0
      %v4265 = vadd.f32 0.0, %v4264
      %v4266 = vpop.f32.mrf.mxu0
      %4267 = vmatprep.mubr.bf16.mxu0 0
      %4268 = vmatmul.mubr.bf16.gmra.mxu0 %v4071
      %v4269 = vpop.f32.mrf.mxu0
      %v4270 = vadd.f32 0.0, %v4269
      %v4271 = vpop.f32.mrf.mxu0
      %v4272 = vpop.f32.mrf.mxu0
      %v4273 = vadd.f32 0.0, %v4272
      %v4274 = vpop.f32.mrf.mxu0
      %4275 = vmatprep.mubr.bf16.mxu0 0
      %4276 = vmatmul.mubr.bf16.gmra.mxu0 %v4072
      %v4277 = vpop.f32.mrf.mxu0
      %v4278 = vadd.f32 0.0, %v4277
      %v4279 = vpop.f32.mrf.mxu0
      %v4280 = vpop.f32.mrf.mxu0
      %v4281 = vadd.f32 0.0, %v4280
      %v4282 = vpop.f32.mrf.mxu0
      %4283 = vmatprep.mubr.bf16.mxu0 0
      %4284 = vmatmul.mubr.bf16.gmra.mxu0 %v4073
      %v4285 = vpop.f32.mrf.mxu0
      %v4286 = vadd.f32 0.0, %v4285
      %v4287 = vpop.f32.mrf.mxu0
      %v4288 = vpop.f32.mrf.mxu0
      %v4289 = vadd.f32 0.0, %v4288
      %v4290 = vpop.f32.mrf.mxu0
      %4291 = vmatprep.mubr.bf16.mxu0 0
      %4292 = vmatmul.mubr.bf16.gmra.mxu0 %v4074
      %v4293 = vpop.f32.mrf.mxu0
      %v4294 = vadd.f32 0.0, %v4293
      %v4295 = vpop.f32.mrf.mxu0
      %v4296 = vpop.f32.mrf.mxu0
      %v4297 = vadd.f32 0.0, %v4296
      %v4298 = vpop.f32.mrf.mxu0
      %4299 = vdwg.mxu0
      %v4300 = vld [vmem:[%s2] sm:$0x1]
      %v4302 = vlaneseq
      %v4303 = vshrl.u32 %v4302, 7
      %v4304 = vsub.s32 0, %v4303
      %v4305 = vrot.slane %v4300, %v4304
      %v4307 = vadd.f32 %v4174, %v4305
      %v4308 = vadd.f32 %v4177, %v4305
      %v4309 = vadd.f32 %v4182, %v4305
      %v4310 = vadd.f32 %v4185, %v4305
      %v4311 = vadd.f32 %v4190, %v4305
      %v4312 = vadd.f32 %v4193, %v4305
      %v4313 = vadd.f32 %v4198, %v4305
      %v4314 = vadd.f32 %v4201, %v4305
      %v4315 = vadd.f32 %v4206, %v4305
      %v4316 = vadd.f32 %v4209, %v4305
      %v4317 = vadd.f32 %v4214, %v4305
      %v4318 = vadd.f32 %v4217, %v4305
      %v4319 = vadd.f32 %v4222, %v4305
      %v4320 = vadd.f32 %v4225, %v4305
      %v4321 = vadd.f32 %v4230, %v4305
      %v4322 = vadd.f32 %v4233, %v4305
      %v4323 = vadd.f32 %v4238, %v4305
      %v4324 = vadd.f32 %v4241, %v4305
      %v4325 = vadd.f32 %v4246, %v4305
      %v4326 = vadd.f32 %v4249, %v4305
      %v4327 = vadd.f32 %v4254, %v4305
      %v4328 = vadd.f32 %v4257, %v4305
      %v4329 = vadd.f32 %v4262, %v4305
      %v4330 = vadd.f32 %v4265, %v4305
      %v4331 = vadd.f32 %v4270, %v4305
      %v4332 = vadd.f32 %v4273, %v4305
      %v4333 = vadd.f32 %v4278, %v4305
      %v4334 = vadd.f32 %v4281, %v4305
      %v4335 = vadd.f32 %v4286, %v4305
      %v4336 = vadd.f32 %v4289, %v4305
      %v4337 = vadd.f32 %v4294, %v4305
      %v4338 = vadd.f32 %v4297, %v4305
      %v4339 = vmax.f32 %v4307, 0.0
      %v4340 = vmax.f32 %v4308, 0.0
      %v4341 = vmax.f32 %v4309, 0.0
      %v4342 = vmax.f32 %v4310, 0.0
      %v4343 = vmax.f32 %v4311, 0.0
      %v4344 = vmax.f32 %v4312, 0.0
      %v4345 = vmax.f32 %v4313, 0.0
      %v4346 = vmax.f32 %v4314, 0.0
      %v4347 = vmax.f32 %v4315, 0.0
      %v4348 = vmax.f32 %v4316, 0.0
      %v4349 = vmax.f32 %v4317, 0.0
      %v4350 = vmax.f32 %v4318, 0.0
      %v4351 = vmax.f32 %v4319, 0.0
      %v4352 = vmax.f32 %v4320, 0.0
      %v4353 = vmax.f32 %v4321, 0.0
      %v4354 = vmax.f32 %v4322, 0.0
      %v4355 = vmax.f32 %v4323, 0.0
      %v4356 = vmax.f32 %v4324, 0.0
      %v4357 = vmax.f32 %v4325, 0.0
      %v4358 = vmax.f32 %v4326, 0.0
      %v4359 = vmax.f32 %v4327, 0.0
      %v4360 = vmax.f32 %v4328, 0.0
      %v4361 = vmax.f32 %v4329, 0.0
      %v4362 = vmax.f32 %v4330, 0.0
      %v4363 = vmax.f32 %v4331, 0.0
      %v4364 = vmax.f32 %v4332, 0.0
      %v4365 = vmax.f32 %v4333, 0.0
      %v4366 = vmax.f32 %v4334, 0.0
      %v4367 = vmax.f32 %v4335, 0.0
      %v4368 = vmax.f32 %v4336, 0.0
      %v4369 = vmax.f32 %v4337, 0.0
      %v4370 = vmax.f32 %v4338, 0.0
      %vm4371 = vcmask 64512
      %4372 = vst.msk [vmem:[%s170] sm:$0xff] %vm4371, %v4339
      %4373 = vst.msk [vmem:[%s170 + $0x8] sm:$0xff] %vm4371, %v4340
      %4374 = vst.msk [vmem:[%s170 + $0x10] sm:$0xff] %vm4371, %v4341
      %4375 = vst.msk [vmem:[%s170 + $0x18] sm:$0xff] %vm4371, %v4342
      %4376 = vst.msk [vmem:[%s170 + $0x20] sm:$0xff] %vm4371, %v4343
      %4377 = vst.msk [vmem:[%s170 + $0x28] sm:$0xff] %vm4371, %v4344
      %4378 = vst.msk [vmem:[%s170 + $0x30] sm:$0xff] %vm4371, %v4345
      %4379 = vst.msk [vmem:[%s170 + $0x38] sm:$0xff] %vm4371, %v4346
      %4380 = vst.msk [vmem:[%s170 + $0x40] sm:$0xff] %vm4371, %v4347
      %4381 = vst.msk [vmem:[%s170 + $0x48] sm:$0xff] %vm4371, %v4348
      %4382 = vst.msk [vmem:[%s170 + $0x50] sm:$0xff] %vm4371, %v4349
      %4383 = vst.msk [vmem:[%s170 + $0x58] sm:$0xff] %vm4371, %v4350
      %4384 = vst.msk [vmem:[%s170 + $0x60] sm:$0xff] %vm4371, %v4351
      %4385 = vst.msk [vmem:[%s170 + $0x68] sm:$0xff] %vm4371, %v4352
      %4386 = vst.msk [vmem:[%s170 + $0x70] sm:$0xff] %vm4371, %v4353
      %4387 = vst.msk [vmem:[%s170 + $0x78] sm:$0xff] %vm4371, %v4354
      %4388 = vst.msk [vmem:[%s170 + $0x80] sm:$0xff] %vm4371, %v4355
      %4389 = vst.msk [vmem:[%s170 + $0x88] sm:$0xff] %vm4371, %v4356
      %4390 = vst.msk [vmem:[%s170 + $0x90] sm:$0xff] %vm4371, %v4357
      %4391 = vst.msk [vmem:[%s170 + $0x98] sm:$0xff] %vm4371, %v4358
      %4392 = vst.msk [vmem:[%s170 + $0xa0] sm:$0xff] %vm4371, %v4359
      %4393 = vst.msk [vmem:[%s170 + $0xa8] sm:$0xff] %vm4371, %v4360
      %4394 = vst.msk [vmem:[%s170 + $0xb0] sm:$0xff] %vm4371, %v4361
      %4395 = vst.msk [vmem:[%s170 + $0xb8] sm:$0xff] %vm4371, %v4362
      %4396 = vst.msk [vmem:[%s170 + $0xc0] sm:$0xff] %vm4371, %v4363
      %4397 = vst.msk [vmem:[%s170 + $0xc8] sm:$0xff] %vm4371, %v4364
      %4398 = vst.msk [vmem:[%s170 + $0xd0] sm:$0xff] %vm4371, %v4365
      %4399 = vst.msk [vmem:[%s170 + $0xd8] sm:$0xff] %vm4371, %v4366
      %4400 = vst.msk [vmem:[%s170 + $0xe0] sm:$0xff] %vm4371, %v4367
      %4401 = vst.msk [vmem:[%s170 + $0xe8] sm:$0xff] %vm4371, %v4368
      %4402 = vst.msk [vmem:[%s170 + $0xf0] sm:$0xff] %vm4371, %v4369
      %4403 = vst.msk [vmem:[%s170 + $0xf8] sm:$0xff] %vm4371, %v4370
      %p4404 = scmp.lt.s32.totalorder %s14, 1
      %s4405 = scalar_select %p4404, %s14, 1
      %s4406 = smul.addr %s4405, 32
      %s4407 = smul.addr %s4406, 8
      %s4408 = scalar_lea.vmem %s3, %s4407
      // Predicated region
      $region33: #{tpu_custom_call.1} parent=31 // pred_check
        %p4409 = pneg %p100
      $region34: #{tpu_custom_call.1} parent=31 // pred_check_branch
        %4411 = sbr.rel (%p4409) target = $region36
      $region35: #{tpu_custom_call.1} parent=31 // pred_region
        _
      $region36: #{tpu_custom_call.1} parent=31 // pred_fallthru
        _
    $region32: #{tpu_custom_call.1} parent=5 // pred_fallthru
      _
    %p4412 = scmp.le.s32.totalorder 2, %s9
    // Predicated region
    $region37: #{tpu_custom_call.1} parent=5 // pred_check
      %p4413 = pneg %p4412
    $region38: #{tpu_custom_call.1} parent=5 // pred_check_branch
      %4415 = sbr.rel (%p4413) target = $region40
    $region39: #{tpu_custom_call.1} parent=5 // pred_region
      %s4416 = ssub.s32 %s9, 2
      // Predicated region
      $region41: #{tpu_custom_call.1} parent=39 // pred_check
        %p4417 = pneg %p106
      $region42: #{tpu_custom_call.1} parent=39 // pred_check_branch
        %4419 = sbr.rel (%p4417) target = $region44
      $region43: #{tpu_custom_call.1} parent=39 // pred_region
        %p4420 = scmp.lt.s32.totalorder %s15, 1
        %s4421 = scalar_select %p4420, %s15, 1
        %s4422 = smul.addr %s4421, 32
        %s4423 = smul.addr %s4422, 8
        %s4424 = scalar_lea.vmem %s3, %s4423
      $region44: #{tpu_custom_call.1} parent=39 // pred_fallthru
        _
    $region40: #{tpu_custom_call.1} parent=5 // pred_fallthru
      _
  $region6: #{tpu_custom_call.1} parent=0 // loop_footer
    %s13 = sadd.s32 1, %s9
  $region7: #{tpu_custom_call.1} parent=0 // loop_footer_branch
    %8 = sbr.rel target = $region3
  $region8: #{tpu_custom_call.1} parent=0 // loop_exit
    _

</llo_original>
